<compile_context>
chip_gen: v5e
topology: v5e:2x2
jax: 0.10.0
libtpu: 0.0.40
codegen_flags: <defaults>
</compile_context>

<pallas_src>
import functools

import jax
import jax.numpy as jnp
from jax.experimental import pallas as pl
from jax.experimental.pallas import tpu as pltpu


# ----------------------------------------------------------------------------
# Pallas kernels
# ----------------------------------------------------------------------------
def _embed_pos_ln_kernel(x_ref, we_ref, pos_ref, g_ref, b_ref, o_ref, *,
                         scale, eps):
    # One batch row-group per program:  out = LN(x @ We * scale + pos)
    e = jnp.dot(x_ref[...], we_ref[...], preferred_element_type=jnp.float32)
    if scale != 1.0:
        e = e * scale
    y = e + pos_ref[...]
    mean = jnp.mean(y, axis=-1, keepdims=True)
    c = y - mean
    var = jnp.mean(c * c, axis=-1, keepdims=True)
    o_ref[...] = (c * jax.lax.rsqrt(var + eps) * g_ref[...]
                  + b_ref[...]).astype(o_ref.dtype)


def embed_pos_layernorm(x, w_emb_t, pos, gamma, beta, *, scale, eps):
    """x: (BN, SL, Din); w_emb_t: (Din, D); pos: (SL, D) -> (BN, SL, D)."""
    BN, SL, Din = x.shape
    D = w_emb_t.shape[1]
    return pl.pallas_call(
        functools.partial(_embed_pos_ln_kernel, scale=scale, eps=eps),
        out_shape=jax.ShapeDtypeStruct((BN, SL, D), x.dtype),
        grid=(BN,),
        in_specs=[
            pl.BlockSpec((None, SL, Din), lambda b: (b, 0, 0)),
            pl.BlockSpec((Din, D), lambda b: (0, 0)),
            pl.BlockSpec((SL, D), lambda b: (0, 0)),   # broadcast via index_map
            pl.BlockSpec((1, D), lambda b: (0, 0)),
            pl.BlockSpec((1, D), lambda b: (0, 0)),
        ],
        out_specs=pl.BlockSpec((None, SL, D), lambda b: (b, 0, 0)),
        compiler_params=pltpu.CompilerParams(
            dimension_semantics=("parallel",)),
    )(x, w_emb_t, pos, gamma, beta)


def _mha_fused_kernel(x_ref, wqkv_ref, bqkv_ref, wo_ref, bo_ref, g_ref, b_ref,
                      o_ref, *, n_heads, eps):
    # One batch element per program.  All 2-D: lane axis = feature axis.
    L, D = x_ref.shape
    H = n_heads
    Dh = D // H
    scale = 1.0 / float(Dh) ** 0.5
    x = x_ref[...]                                              # (L, D)

    # Folded + concatenated double Q/K/V projection: one (L,D)@(D,3D) matmul.
    qkv = jnp.dot(x, wqkv_ref[...], preferred_element_type=jnp.float32)
    qkv = qkv + bqkv_ref[...]
    wo = wo_ref[...]                                            # (D, D)

    # Per-head attention; head-concat + output projection folded into a
    # per-head accumulation against the matching rows of W_o.
    proj = jnp.zeros((L, D), jnp.float32)
    for h in range(H):
        qh = qkv[:, h * Dh:(h + 1) * Dh]
        kh = qkv[:, D + h * Dh:D + (h + 1) * Dh]
        vh = qkv[:, 2 * D + h * Dh:2 * D + (h + 1) * Dh]
        s = jax.lax.dot_general(
            qh, kh, (((1,), (1,)), ((), ())),
            preferred_element_type=jnp.float32) * scale
        s = s - jnp.max(s, axis=-1, keepdims=True)
        p = jnp.exp(s)
        p = p * pl.reciprocal(jnp.sum(p, axis=-1, keepdims=True), approx=True)
        oh = jnp.dot(p, vh, preferred_element_type=jnp.float32)  # (L, Dh)
        proj = proj + jnp.dot(oh, wo[h * Dh:(h + 1) * Dh, :],
                              preferred_element_type=jnp.float32)

    y = proj + bo_ref[...] + x          # fc bias + residual (dropout=identity)
    mean = jnp.mean(y, axis=-1, keepdims=True)
    c = y - mean
    var = jnp.mean(c * c, axis=-1, keepdims=True)
    o_ref[...] = (c * jax.lax.rsqrt(var + eps) * g_ref[...]
                  + b_ref[...]).astype(o_ref.dtype)


def mha_layer(x, p, n_heads):
    """Fused MHAlayer.forward (mask=None).  x: (B, L, D) -> (B, L, D)."""
    B, L, D = x.shape
    row = lambda b: (b, 0, 0)
    mat = lambda b: (0, 0)
    return pl.pallas_call(
        functools.partial(_mha_fused_kernel, n_heads=n_heads, eps=1e-5),
        out_shape=jax.ShapeDtypeStruct((B, L, D), x.dtype),
        grid=(B,),
        in_specs=[
            pl.BlockSpec((None, L, D), row),
            pl.BlockSpec((D, 3 * D), mat),
            pl.BlockSpec((1, 3 * D), mat),
            pl.BlockSpec((D, D), mat),
            pl.BlockSpec((1, D), mat),
            pl.BlockSpec((1, D), mat),
            pl.BlockSpec((1, D), mat),
        ],
        out_specs=pl.BlockSpec((None, L, D), row),
        compiler_params=pltpu.CompilerParams(
            dimension_semantics=("parallel",)),
    )(x, p["w_qkv"], p["b_qkv"], p["w_o"], p["b_o"], p["ln_g"], p["ln_b"])


def _ffn_fused_kernel(x_ref, w1_ref, b1_ref, w2_ref, b2_ref, g_ref, b_ref,
                      o_ref, *, eps):
    x = x_ref[...]                                              # (RB, D)
    h = jnp.dot(x, w1_ref[...], preferred_element_type=jnp.float32)
    h = jnp.maximum(h + b1_ref[...], 0.0)
    y = jnp.dot(h, w2_ref[...], preferred_element_type=jnp.float32)
    y = y + b2_ref[...] + x                                     # residual
    mean = jnp.mean(y, axis=-1, keepdims=True)
    c = y - mean
    var = jnp.mean(c * c, axis=-1, keepdims=True)
    o_ref[...] = (c * jax.lax.rsqrt(var + eps) * g_ref[...]
                  + b_ref[...]).astype(o_ref.dtype)


def _row_block(m, target=512):
    """Largest multiple-of-8 divisor of m that is <= target (exact tiling)."""
    if m <= target:
        return m
    for rb in range(target, 7, -1):
        if m % rb == 0 and rb % 8 == 0:
            return rb
    return m


def ff_layer(x, p):
    """Fused FFlayer.forward.  x: (B, L, D) -> (B, L, D)."""
    B, L, D = x.shape
    M = B * L
    x2 = x.reshape(M, D)
    RB = _row_block(M)
    Dff = p["w1"].shape[1]
    out = pl.pallas_call(
        functools.partial(_ffn_fused_kernel, eps=1e-6),
        out_shape=jax.ShapeDtypeStruct((M, D), x.dtype),
        grid=(M // RB,),
        in_specs=[
            pl.BlockSpec((RB, D), lambda i: (i, 0)),
            pl.BlockSpec((D, Dff), lambda i: (0, 0)),
            pl.BlockSpec((1, Dff), lambda i: (0, 0)),
            pl.BlockSpec((Dff, D), lambda i: (0, 0)),
            pl.BlockSpec((1, D), lambda i: (0, 0)),
            pl.BlockSpec((1, D), lambda i: (0, 0)),
            pl.BlockSpec((1, D), lambda i: (0, 0)),
        ],
        out_specs=pl.BlockSpec((RB, D), lambda i: (i, 0)),
        compiler_params=pltpu.CompilerParams(
            dimension_semantics=("parallel",)),
    )(x2, p["w1"], p["b1"], p["w2"], p["b2"], p["ln_g"], p["ln_b"])
    return out.reshape(B, L, D)


# ----------------------------------------------------------------------------
# Model glue (tiny reshapes / transposes between kernels stay in plain JAX)
# ----------------------------------------------------------------------------
def stmha_layer(x, p, batch_size, n_heads):
    """STMHAlayer.forward (masks=None).  x: (bs*no, sl, D)."""
    BN, SL, D = x.shape
    bs = batch_size
    no = BN // bs
    out = mha_layer(x, p["time"], n_heads)            # attention over time (sl)
    # '(bs no) sl hs -> (bs sl) no hs'
    out = out.reshape(bs, no, SL, D).transpose(0, 2, 1, 3).reshape(bs * SL, no, D)
    out = mha_layer(out, p["soc"], n_heads)           # attention over objects
    # '(bs sl) no hs -> (bs no) sl hs'
    out = out.reshape(bs, SL, no, D).transpose(0, 2, 1, 3).reshape(bs * no, SL, D)
    out = ff_layer(out, p["ffn"])
    return out


def stmha_block(x, params, batch_size, n_heads, scale_emb=False):
    """STMHAblock.forward (return_attn_scores=False, masks=None).

    x: (bs*no, sl, in_size); params: output of prepare_params()."""
    BN, SL, Din = x.shape
    D = params["embed_wt"].shape[1]
    scale = float(D) ** 0.5 if scale_emb else 1.0
    pos = params["pos_emb"][:SL]                      # (SL, D)
    out = embed_pos_layernorm(x, params["embed_wt"], pos,
                              params["ln_g"], params["ln_b"],
                              scale=scale, eps=1e-6)
    for lp in params["layers"]:
        out = stmha_layer(out, lp, batch_size, n_heads)
    return out


# ----------------------------------------------------------------------------
# One-time parameter preparation: fold the double projection, concat QKV,
# pre-transpose every weight to (Din, Dout), reshape biases/LN params to 2-D.
# ----------------------------------------------------------------------------
def _fold_mha(p):
    hi = jax.lax.Precision.HIGHEST

    def fold(w, b):
        wt = w.T                                         # (D, D)
        # reference applies the projection twice:
        #   (x W^T + b) W^T + b  ==  x (W^T W^T) + (b W^T + b)
        return jnp.dot(wt, wt, precision=hi), jnp.dot(b, wt, precision=hi) + b

    wq, bq = fold(p["wq"], p["bq"])
    wk, bk = fold(p["wk"], p["bk"])
    wv, bv = fold(p["wv"], p["bv"])
    D = wq.shape[0]
    return {
        "w_qkv": jnp.concatenate([wq, wk, wv], axis=1),  # (D, 3D)
        "b_qkv": jnp.concatenate([bq, bk, bv]).reshape(1, 3 * D),
        "w_o": p["wo"].T,                                # (D, D)
        "b_o": p["bo"].reshape(1, D),
        "ln_g": p["ln_g"].reshape(1, D),
        "ln_b": p["ln_b"].reshape(1, D),
    }


def prepare_params(params):
    D = params["embed_w"].shape[0]
    prepared = {
        "embed_wt": params["embed_w"].T,                 # (in_size, D)
        "pos_emb": params["pos_emb"],                    # (n_posembeds, D)
        "ln_g": params["ln_g"].reshape(1, D),
        "ln_b": params["ln_b"].reshape(1, D),
        "layers": [],
    }
    for lp in params["layers"]:
        f = lp["ffn"]
        Dff = f["w1"].shape[0]
        prepared["layers"].append({
            "time": _fold_mha(lp["time"]),
            "soc": _fold_mha(lp["soc"]),
            "ffn": {
                "w1": f["w1"].T,                         # (D, Dff)
                "b1": f["b1"].reshape(1, Dff),
                "w2": f["w2"].T,                         # (Dff, D)
                "b2": f["b2"].reshape(1, D),
                "ln_g": f["ln_g"].reshape(1, D),
                "ln_b": f["ln_b"].reshape(1, D),
            },
        })
    return prepared


# ----------------------------------------------------------------------------
# Deterministic parameter initialization (torch-style shapes, per __init__)
# ----------------------------------------------------------------------------
def init_params(key, in_size, d_model, d_ffn, n_heads, n_layers, n_posembeds=200):
    d_h = d_model / n_heads

    def nrm(k, shape, std):
        return (std * jax.random.normal(k, shape)).astype(jnp.float32)

    keys = jax.random.split(key, 2 + n_layers)
    params = {
        "embed_w": nrm(keys[0], (d_model, in_size), 0.1),
        "pos_emb": nrm(keys[1], (n_posembeds, d_model), 0.1),
        "ln_g": jnp.ones((d_model,), jnp.float32),
        "ln_b": jnp.zeros((d_model,), jnp.float32),
        "layers": [],
    }
    qkv_std = (2.0 / (d_model + d_h)) ** 0.5
    fc_std = (2.0 / (2 * d_model)) ** 0.5  # xavier normal

    def mha_params(k):
        ks = jax.random.split(k, 8)
        return {
            "wq": nrm(ks[0], (d_model, d_model), qkv_std),
            "bq": nrm(ks[1], (d_model,), 0.02),
            "wk": nrm(ks[2], (d_model, d_model), qkv_std),
            "bk": nrm(ks[3], (d_model,), 0.02),
            "wv": nrm(ks[4], (d_model, d_model), qkv_std),
            "bv": nrm(ks[5], (d_model,), 0.02),
            "wo": nrm(ks[6], (d_model, d_model), fc_std),
            "bo": nrm(ks[7], (d_model,), 0.02),
            "ln_g": jnp.ones((d_model,), jnp.float32),
            "ln_b": jnp.zeros((d_model,), jnp.float32),
        }

    for li in range(n_layers):
        lk = jax.random.split(keys[2 + li], 3)
        fk = jax.random.split(lk[2], 4)
        params["layers"].append(
            {
                "time": mha_params(lk[0]),
                "soc": mha_params(lk[1]),
                "ffn": {
                    "w1": nrm(fk[0], (d_ffn, d_model), (1.0 / d_model) ** 0.5),
                    "b1": nrm(fk[1], (d_ffn,), 0.02),
                    "w2": nrm(fk[2], (d_model, d_ffn), (1.0 / d_ffn) ** 0.5),
                    "b2": nrm(fk[3], (d_model,), 0.02),
                    "ln_g": jnp.ones((d_model,), jnp.float32),
                    "ln_b": jnp.zeros((d_model,), jnp.float32),
                },
            }
        )
    return params


# ----------------------------------------------------------------------------
# Example run
# ----------------------------------------------------------------------------
if __name__ == "__main__":
    bs, no, sl = 2, 3, 8          # batch, objects, sequence length
    in_size, d_model, d_ffn = 6, 32, 64
    n_heads, n_layers = 4, 2

    key = jax.random.PRNGKey(0)
    kx, kp = jax.random.split(key)
    # input layout: (bs*no, sl, in_size)  -- same as the PyTorch module
    x = jax.random.normal(kx, (bs * no, sl, in_size), jnp.float32)
    raw_params = init_params(kp, in_size, d_model, d_ffn, n_heads, n_layers)
    params = prepare_params(raw_params)      # one-time fold / transpose / concat

    forward = jax.jit(
        functools.partial(stmha_block, batch_size=bs, n_heads=n_heads))
    out = jax.block_until_ready(forward(x, params))

    assert out.shape == (bs * no, sl, d_model)
    assert bool(jnp.all(jnp.isfinite(out)))
    print("KERNEL_OK")
</pallas_src>

<mosaic_0001>
module attributes {stable_mosaic.version = 11 : i64} {
  func.func @_embed_pos_ln_kernel(%arg0: i32, %arg1: memref<1x8x6xf32, #tpu.memory_space<vmem>>, %arg2: memref<6x32xf32, #tpu.memory_space<vmem>>, %arg3: memref<8x32xf32, #tpu.memory_space<vmem>>, %arg4: memref<1x32xf32, #tpu.memory_space<vmem>>, %arg5: memref<1x32xf32, #tpu.memory_space<vmem>>, %arg6: memref<1x8x32xf32, #tpu.memory_space<vmem>>) attributes {dimension_semantics = [#tpu.dimension_semantics<parallel>], iteration_bounds = array<i64: 6>, scalar_prefetch = 0 : i64, scratch_operands = 0 : i64, tpu.core_type = #tpu.core_type<tc>, window_params = [{transform_indices = @transform_0, window_bounds = array<i64: 1, 8, 6>}, {pipeline_mode = #tpu.pipeline_mode<synchronous>, transform_indices = @transform_1, window_bounds = array<i64: 6, 32>}, {pipeline_mode = #tpu.pipeline_mode<synchronous>, transform_indices = @transform_2, window_bounds = array<i64: 8, 32>}, {pipeline_mode = #tpu.pipeline_mode<synchronous>, transform_indices = @transform_3, window_bounds = array<i64: 1, 32>}, {pipeline_mode = #tpu.pipeline_mode<synchronous>, transform_indices = @transform_4, window_bounds = array<i64: 1, 32>}, {transform_indices = @transform_5, window_bounds = array<i64: 1, 8, 32>}]} {
    %c0 = arith.constant 0 : index
    %c0_0 = arith.constant 0 : index
    %c0_1 = arith.constant 0 : index
    %0 = vector.load %arg1[%c0, %c0_0, %c0_1] : memref<1x8x6xf32, #tpu.memory_space<vmem>>, vector<1x8x6xf32>
    %1 = vector.shape_cast %0 : vector<1x8x6xf32> to vector<8x6xf32>
    %c0_2 = arith.constant 0 : index
    %c0_3 = arith.constant 0 : index
    %2 = vector.load %arg2[%c0_2, %c0_3] : memref<6x32xf32, #tpu.memory_space<vmem>>, vector<6x32xf32>
    %cst = arith.constant dense<0.000000e+00> : vector<8x32xf32>
    %3 = tpu.matmul %1, %2, %cst {dimension_numbers = #tpu.dot_dimension_numbers<[1], [0], [0], [1], [0, 0, 1, 1], [], []>} : vector<8x6xf32>, vector<6x32xf32>, vector<8x32xf32> -> vector<8x32xf32>
    %c0_4 = arith.constant 0 : index
    %c0_5 = arith.constant 0 : index
    %4 = vector.load %arg3[%c0_4, %c0_5] : memref<8x32xf32, #tpu.memory_space<vmem>>, vector<8x32xf32>
    %5 = arith.addf %3, %4 : vector<8x32xf32>
    %cst_6 = arith.constant dense<0.000000e+00> : vector<8xf32>
    %6 = vector.multi_reduction <add>, %5, %cst_6 [1] : vector<8x32xf32> to vector<8xf32>
    %7 = vector.shape_cast %6 : vector<8xf32> to vector<8x1xf32>
    %cst_7 = arith.constant 3.200000e+01 : f32
    %8 = vector.broadcast %cst_7 : f32 to vector<8x1xf32>
    %9 = arith.divf %7, %8 : vector<8x1xf32>
    %10 = vector.broadcast %9 : vector<8x1xf32> to vector<8x32xf32>
    %11 = arith.subf %5, %10 : vector<8x32xf32>
    %12 = arith.mulf %11, %11 : vector<8x32xf32>
    %cst_8 = arith.constant dense<0.000000e+00> : vector<8xf32>
    %13 = vector.multi_reduction <add>, %12, %cst_8 [1] : vector<8x32xf32> to vector<8xf32>
    %14 = vector.shape_cast %13 : vector<8xf32> to vector<8x1xf32>
    %cst_9 = arith.constant 3.200000e+01 : f32
    %15 = vector.broadcast %cst_9 : f32 to vector<8x1xf32>
    %16 = arith.divf %14, %15 : vector<8x1xf32>
    %cst_10 = arith.constant 9.99999997E-7 : f32
    %17 = vector.broadcast %cst_10 : f32 to vector<8x1xf32>
    %18 = arith.addf %16, %17 : vector<8x1xf32>
    %19 = math.rsqrt %18 : vector<8x1xf32>
    %20 = vector.broadcast %19 : vector<8x1xf32> to vector<8x32xf32>
    %21 = arith.mulf %11, %20 : vector<8x32xf32>
    %c0_11 = arith.constant 0 : index
    %c0_12 = arith.constant 0 : index
    %22 = vector.load %arg4[%c0_11, %c0_12] : memref<1x32xf32, #tpu.memory_space<vmem>>, vector<1x32xf32>
    %23 = vector.broadcast %22 : vector<1x32xf32> to vector<8x32xf32>
    %24 = arith.mulf %21, %23 : vector<8x32xf32>
    %c0_13 = arith.constant 0 : index
    %c0_14 = arith.constant 0 : index
    %25 = vector.load %arg5[%c0_13, %c0_14] : memref<1x32xf32, #tpu.memory_space<vmem>>, vector<1x32xf32>
    %26 = vector.broadcast %25 : vector<1x32xf32> to vector<8x32xf32>
    %27 = arith.addf %24, %26 : vector<8x32xf32>
    %c0_15 = arith.constant 0 : index
    %c0_16 = arith.constant 0 : index
    %c0_17 = arith.constant 0 : index
    %28 = vector.load %arg6[%c0_15, %c0_16, %c0_17] : memref<1x8x32xf32, #tpu.memory_space<vmem>>, vector<1x8x32xf32>
    %29 = vector.shape_cast %28 : vector<1x8x32xf32> to vector<8x32xf32>
    %30 = vector.shape_cast %27 : vector<8x32xf32> to vector<1x8x32xf32>
    tpu.vector_store %arg6[%c0_15, %c0_16, %c0_17], %30 {strides = array<i32>} : memref<1x8x32xf32, #tpu.memory_space<vmem>>, vector<1x8x32xf32>,
    return
  }
  func.func @transform_0(%arg0: i32) -> (i32, i32, i32) {
    %c0_i32 = arith.constant 0 : i32
    %c0_i32_0 = arith.constant 0 : i32
    %c0_i32_1 = arith.constant 0 : i32
    return %arg0, %c0_i32, %c0_i32_0 : i32, i32, i32
  }
  func.func @transform_1(%arg0: i32) -> (i32, i32) {
    %c0_i32 = arith.constant 0 : i32
    %c0_i32_0 = arith.constant 0 : i32
    %c0_i32_1 = arith.constant 0 : i32
    return %c0_i32, %c0_i32_0 : i32, i32
  }
  func.func @transform_2(%arg0: i32) -> (i32, i32) {
    %c0_i32 = arith.constant 0 : i32
    %c0_i32_0 = arith.constant 0 : i32
    %c0_i32_1 = arith.constant 0 : i32
    return %c0_i32, %c0_i32_0 : i32, i32
  }
  func.func @transform_3(%arg0: i32) -> (i32, i32) {
    %c0_i32 = arith.constant 0 : i32
    %c0_i32_0 = arith.constant 0 : i32
    %c0_i32_1 = arith.constant 0 : i32
    return %c0_i32, %c0_i32_0 : i32, i32
  }
  func.func @transform_4(%arg0: i32) -> (i32, i32) {
    %c0_i32 = arith.constant 0 : i32
    %c0_i32_0 = arith.constant 0 : i32
    %c0_i32_1 = arith.constant 0 : i32
    return %c0_i32, %c0_i32_0 : i32, i32
  }
  func.func @transform_5(%arg0: i32) -> (i32, i32, i32) {
    %c0_i32 = arith.constant 0 : i32
    %c0_i32_0 = arith.constant 0 : i32
    %c0_i32_1 = arith.constant 0 : i32
    return %arg0, %c0_i32, %c0_i32_0 : i32, i32, i32
  }
}

module attributes {stable_mosaic.version = 11 : i64} {
  func.func @_mha_fused_kernel(%arg0: i32, %arg1: memref<1x8x32xf32, #tpu.memory_space<vmem>>, %arg2: memref<32x96xf32, #tpu.memory_space<vmem>>, %arg3: memref<1x96xf32, #tpu.memory_space<vmem>>, %arg4: memref<32x32xf32, #tpu.memory_space<vmem>>, %arg5: memref<1x32xf32, #tpu.memory_space<vmem>>, %arg6: memref<1x32xf32, #tpu.memory_space<vmem>>, %arg7: memref<1x32xf32, #tpu.memory_space<vmem>>, %arg8: memref<1x8x32xf32, #tpu.memory_space<vmem>>) attributes {dimension_semantics = [#tpu.dimension_semantics<parallel>], iteration_bounds = array<i64: 6>, scalar_prefetch = 0 : i64, scratch_operands = 0 : i64, tpu.core_type = #tpu.core_type<tc>, window_params = [{transform_indices = @transform_0, window_bounds = array<i64: 1, 8, 32>}, {pipeline_mode = #tpu.pipeline_mode<synchronous>, transform_indices = @transform_1, window_bounds = array<i64: 32, 96>}, {pipeline_mode = #tpu.pipeline_mode<synchronous>, transform_indices = @transform_2, window_bounds = array<i64: 1, 96>}, {pipeline_mode = #tpu.pipeline_mode<synchronous>, transform_indices = @transform_3, window_bounds = array<i64: 32, 32>}, {pipeline_mode = #tpu.pipeline_mode<synchronous>, transform_indices = @transform_4, window_bounds = array<i64: 1, 32>}, {pipeline_mode = #tpu.pipeline_mode<synchronous>, transform_indices = @transform_5, window_bounds = array<i64: 1, 32>}, {pipeline_mode = #tpu.pipeline_mode<synchronous>, transform_indices = @transform_6, window_bounds = array<i64: 1, 32>}, {transform_indices = @transform_7, window_bounds = array<i64: 1, 8, 32>}]} {
    %c0 = arith.constant 0 : index
    %c0_0 = arith.constant 0 : index
    %c0_1 = arith.constant 0 : index
    %0 = vector.load %arg1[%c0, %c0_0, %c0_1] : memref<1x8x32xf32, #tpu.memory_space<vmem>>, vector<1x8x32xf32>
    %1 = vector.shape_cast %0 : vector<1x8x32xf32> to vector<8x32xf32>
    %c0_2 = arith.constant 0 : index
    %c0_3 = arith.constant 0 : index
    %2 = vector.load %arg2[%c0_2, %c0_3] : memref<32x96xf32, #tpu.memory_space<vmem>>, vector<32x96xf32>
    %cst = arith.constant dense<0.000000e+00> : vector<8x96xf32>
    %3 = tpu.matmul %1, %2, %cst {dimension_numbers = #tpu.dot_dimension_numbers<[1], [0], [0], [1], [0, 0, 1, 1], [], []>} : vector<8x32xf32>, vector<32x96xf32>, vector<8x96xf32> -> vector<8x96xf32>
    %c0_4 = arith.constant 0 : index
    %c0_5 = arith.constant 0 : index
    %4 = vector.load %arg3[%c0_4, %c0_5] : memref<1x96xf32, #tpu.memory_space<vmem>>, vector<1x96xf32>
    %5 = vector.broadcast %4 : vector<1x96xf32> to vector<8x96xf32>
    %6 = arith.addf %3, %5 : vector<8x96xf32>
    %c0_6 = arith.constant 0 : index
    %c0_7 = arith.constant 0 : index
    %7 = vector.load %arg4[%c0_6, %c0_7] : memref<32x32xf32, #tpu.memory_space<vmem>>, vector<32x32xf32>
    %cst_8 = arith.constant 0.000000e+00 : f32
    %8 = vector.broadcast %cst_8 : f32 to vector<8x32xf32>
    %9 = vector.extract_strided_slice %6 {offsets = [0, 0], sizes = [8, 8], strides = [1, 1]} : vector<8x96xf32> to vector<8x8xf32>
    %10 = vector.extract_strided_slice %6 {offsets = [0, 32], sizes = [8, 8], strides = [1, 1]} : vector<8x96xf32> to vector<8x8xf32>
    %11 = vector.extract_strided_slice %6 {offsets = [0, 64], sizes = [8, 8], strides = [1, 1]} : vector<8x96xf32> to vector<8x8xf32>
    %cst_9 = arith.constant dense<0.000000e+00> : vector<8x8xf32>
    %12 = tpu.matmul %9, %10, %cst_9 {dimension_numbers = #tpu.dot_dimension_numbers<[1], [1], [0], [0], [0, 0, 1, 0], [], []>} : vector<8x8xf32>, vector<8x8xf32>, vector<8x8xf32> -> vector<8x8xf32>
    %cst_10 = arith.constant 0.353553385 : f32
    %13 = vector.broadcast %cst_10 : f32 to vector<8x8xf32>
    %14 = arith.mulf %12, %13 : vector<8x8xf32>
    %cst_11 = arith.constant dense<0xFF800000> : vector<8xf32>
    %15 = vector.multi_reduction <maximumf>, %14, %cst_11 [1] : vector<8x8xf32> to vector<8xf32>
    %16 = vector.shape_cast %15 : vector<8xf32> to vector<8x1xf32>
    %17 = vector.broadcast %16 : vector<8x1xf32> to vector<8x8xf32>
    %18 = arith.subf %14, %17 : vector<8x8xf32>
    %19 = math.exp %18 : vector<8x8xf32>
    %cst_12 = arith.constant dense<0.000000e+00> : vector<8xf32>
    %20 = vector.multi_reduction <add>, %19, %cst_12 [1] : vector<8x8xf32> to vector<8xf32>
    %21 = vector.shape_cast %20 : vector<8xf32> to vector<8x1xf32>
    %22 = tpu.reciprocal %21 {approx = true} : vector<8x1xf32> -> vector<8x1xf32>
    %23 = vector.broadcast %22 : vector<8x1xf32> to vector<8x8xf32>
    %24 = arith.mulf %19, %23 : vector<8x8xf32>
    %cst_13 = arith.constant dense<0.000000e+00> : vector<8x8xf32>
    %25 = tpu.matmul %24, %11, %cst_13 {dimension_numbers = #tpu.dot_dimension_numbers<[1], [0], [0], [1], [0, 0, 1, 1], [], []>} : vector<8x8xf32>, vector<8x8xf32>, vector<8x8xf32> -> vector<8x8xf32>
    %26 = vector.extract_strided_slice %7 {offsets = [0, 0], sizes = [8, 32], strides = [1, 1]} : vector<32x32xf32> to vector<8x32xf32>
    %cst_14 = arith.constant dense<0.000000e+00> : vector<8x32xf32>
    %27 = tpu.matmul %25, %26, %cst_14 {dimension_numbers = #tpu.dot_dimension_numbers<[1], [0], [0], [1], [0, 0, 1, 1], [], []>} : vector<8x8xf32>, vector<8x32xf32>, vector<8x32xf32> -> vector<8x32xf32>
    %28 = arith.addf %8, %27 : vector<8x32xf32>
    %29 = vector.extract_strided_slice %6 {offsets = [0, 8], sizes = [8, 8], strides = [1, 1]} : vector<8x96xf32> to vector<8x8xf32>
    %30 = vector.extract_strided_slice %6 {offsets = [0, 40], sizes = [8, 8], strides = [1, 1]} : vector<8x96xf32> to vector<8x8xf32>
    %31 = vector.extract_strided_slice %6 {offsets = [0, 72], sizes = [8, 8], strides = [1, 1]} : vector<8x96xf32> to vector<8x8xf32>
    %cst_15 = arith.constant dense<0.000000e+00> : vector<8x8xf32>
    %32 = tpu.matmul %29, %30, %cst_15 {dimension_numbers = #tpu.dot_dimension_numbers<[1], [1], [0], [0], [0, 0, 1, 0], [], []>} : vector<8x8xf32>, vector<8x8xf32>, vector<8x8xf32> -> vector<8x8xf32>
    %cst_16 = arith.constant 0.353553385 : f32
    %33 = vector.broadcast %cst_16 : f32 to vector<8x8xf32>
    %34 = arith.mulf %32, %33 : vector<8x8xf32>
    %cst_17 = arith.constant dense<0xFF800000> : vector<8xf32>
    %35 = vector.multi_reduction <maximumf>, %34, %cst_17 [1] : vector<8x8xf32> to vector<8xf32>
    %36 = vector.shape_cast %35 : vector<8xf32> to vector<8x1xf32>
    %37 = vector.broadcast %36 : vector<8x1xf32> to vector<8x8xf32>
    %38 = arith.subf %34, %37 : vector<8x8xf32>
    %39 = math.exp %38 : vector<8x8xf32>
    %cst_18 = arith.constant dense<0.000000e+00> : vector<8xf32>
    %40 = vector.multi_reduction <add>, %39, %cst_18 [1] : vector<8x8xf32> to vector<8xf32>
    %41 = vector.shape_cast %40 : vector<8xf32> to vector<8x1xf32>
    %42 = tpu.reciprocal %41 {approx = true} : vector<8x1xf32> -> vector<8x1xf32>
    %43 = vector.broadcast %42 : vector<8x1xf32> to vector<8x8xf32>
    %44 = arith.mulf %39, %43 : vector<8x8xf32>
    %cst_19 = arith.constant dense<0.000000e+00> : vector<8x8xf32>
    %45 = tpu.matmul %44, %31, %cst_19 {dimension_numbers = #tpu.dot_dimension_numbers<[1], [0], [0], [1], [0, 0, 1, 1], [], []>} : vector<8x8xf32>, vector<8x8xf32>, vector<8x8xf32> -> vector<8x8xf32>
    %46 = vector.extract_strided_slice %7 {offsets = [8, 0], sizes = [8, 32], strides = [1, 1]} : vector<32x32xf32> to vector<8x32xf32>
    %cst_20 = arith.constant dense<0.000000e+00> : vector<8x32xf32>
    %47 = tpu.matmul %45, %46, %cst_20 {dimension_numbers = #tpu.dot_dimension_numbers<[1], [0], [0], [1], [0, 0, 1, 1], [], []>} : vector<8x8xf32>, vector<8x32xf32>, vector<8x32xf32> -> vector<8x32xf32>
    %48 = arith.addf %28, %47 : vector<8x32xf32>
    %49 = vector.extract_strided_slice %6 {offsets = [0, 16], sizes = [8, 8], strides = [1, 1]} : vector<8x96xf32> to vector<8x8xf32>
    %50 = vector.extract_strided_slice %6 {offsets = [0, 48], sizes = [8, 8], strides = [1, 1]} : vector<8x96xf32> to vector<8x8xf32>
    %51 = vector.extract_strided_slice %6 {offsets = [0, 80], sizes = [8, 8], strides = [1, 1]} : vector<8x96xf32> to vector<8x8xf32>
    %cst_21 = arith.constant dense<0.000000e+00> : vector<8x8xf32>
    %52 = tpu.matmul %49, %50, %cst_21 {dimension_numbers = #tpu.dot_dimension_numbers<[1], [1], [0], [0], [0, 0, 1, 0], [], []>} : vector<8x8xf32>, vector<8x8xf32>, vector<8x8xf32> -> vector<8x8xf32>
    %cst_22 = arith.constant 0.353553385 : f32
    %53 = vector.broadcast %cst_22 : f32 to vector<8x8xf32>
    %54 = arith.mulf %52, %53 : vector<8x8xf32>
    %cst_23 = arith.constant dense<0xFF800000> : vector<8xf32>
    %55 = vector.multi_reduction <maximumf>, %54, %cst_23 [1] : vector<8x8xf32> to vector<8xf32>
    %56 = vector.shape_cast %55 : vector<8xf32> to vector<8x1xf32>
    %57 = vector.broadcast %56 : vector<8x1xf32> to vector<8x8xf32>
    %58 = arith.subf %54, %57 : vector<8x8xf32>
    %59 = math.exp %58 : vector<8x8xf32>
    %cst_24 = arith.constant dense<0.000000e+00> : vector<8xf32>
    %60 = vector.multi_reduction <add>, %59, %cst_24 [1] : vector<8x8xf32> to vector<8xf32>
    %61 = vector.shape_cast %60 : vector<8xf32> to vector<8x1xf32>
    %62 = tpu.reciprocal %61 {approx = true} : vector<8x1xf32> -> vector<8x1xf32>
    %63 = vector.broadcast %62 : vector<8x1xf32> to vector<8x8xf32>
    %64 = arith.mulf %59, %63 : vector<8x8xf32>
    %cst_25 = arith.constant dense<0.000000e+00> : vector<8x8xf32>
    %65 = tpu.matmul %64, %51, %cst_25 {dimension_numbers = #tpu.dot_dimension_numbers<[1], [0], [0], [1], [0, 0, 1, 1], [], []>} : vector<8x8xf32>, vector<8x8xf32>, vector<8x8xf32> -> vector<8x8xf32>
    %66 = vector.extract_strided_slice %7 {offsets = [16, 0], sizes = [8, 32], strides = [1, 1]} : vector<32x32xf32> to vector<8x32xf32>
    %cst_26 = arith.constant dense<0.000000e+00> : vector<8x32xf32>
    %67 = tpu.matmul %65, %66, %cst_26 {dimension_numbers = #tpu.dot_dimension_numbers<[1], [0], [0], [1], [0, 0, 1, 1], [], []>} : vector<8x8xf32>, vector<8x32xf32>, vector<8x32xf32> -> vector<8x32xf32>
    %68 = arith.addf %48, %67 : vector<8x32xf32>
    %69 = vector.extract_strided_slice %6 {offsets = [0, 24], sizes = [8, 8], strides = [1, 1]} : vector<8x96xf32> to vector<8x8xf32>
    %70 = vector.extract_strided_slice %6 {offsets = [0, 56], sizes = [8, 8], strides = [1, 1]} : vector<8x96xf32> to vector<8x8xf32>
    %71 = vector.extract_strided_slice %6 {offsets = [0, 88], sizes = [8, 8], strides = [1, 1]} : vector<8x96xf32> to vector<8x8xf32>
    %cst_27 = arith.constant dense<0.000000e+00> : vector<8x8xf32>
    %72 = tpu.matmul %69, %70, %cst_27 {dimension_numbers = #tpu.dot_dimension_numbers<[1], [1], [0], [0], [0, 0, 1, 0], [], []>} : vector<8x8xf32>, vector<8x8xf32>, vector<8x8xf32> -> vector<8x8xf32>
    %cst_28 = arith.constant 0.353553385 : f32
    %73 = vector.broadcast %cst_28 : f32 to vector<8x8xf32>
    %74 = arith.mulf %72, %73 : vector<8x8xf32>
    %cst_29 = arith.constant dense<0xFF800000> : vector<8xf32>
    %75 = vector.multi_reduction <maximumf>, %74, %cst_29 [1] : vector<8x8xf32> to vector<8xf32>
    %76 = vector.shape_cast %75 : vector<8xf32> to vector<8x1xf32>
    %77 = vector.broadcast %76 : vector<8x1xf32> to vector<8x8xf32>
    %78 = arith.subf %74, %77 : vector<8x8xf32>
    %79 = math.exp %78 : vector<8x8xf32>
    %cst_30 = arith.constant dense<0.000000e+00> : vector<8xf32>
    %80 = vector.multi_reduction <add>, %79, %cst_30 [1] : vector<8x8xf32> to vector<8xf32>
    %81 = vector.shape_cast %80 : vector<8xf32> to vector<8x1xf32>
    %82 = tpu.reciprocal %81 {approx = true} : vector<8x1xf32> -> vector<8x1xf32>
    %83 = vector.broadcast %82 : vector<8x1xf32> to vector<8x8xf32>
    %84 = arith.mulf %79, %83 : vector<8x8xf32>
    %cst_31 = arith.constant dense<0.000000e+00> : vector<8x8xf32>
    %85 = tpu.matmul %84, %71, %cst_31 {dimension_numbers = #tpu.dot_dimension_numbers<[1], [0], [0], [1], [0, 0, 1, 1], [], []>} : vector<8x8xf32>, vector<8x8xf32>, vector<8x8xf32> -> vector<8x8xf32>
    %86 = vector.extract_strided_slice %7 {offsets = [24, 0], sizes = [8, 32], strides = [1, 1]} : vector<32x32xf32> to vector<8x32xf32>
    %cst_32 = arith.constant dense<0.000000e+00> : vector<8x32xf32>
    %87 = tpu.matmul %85, %86, %cst_32 {dimension_numbers = #tpu.dot_dimension_numbers<[1], [0], [0], [1], [0, 0, 1, 1], [], []>} : vector<8x8xf32>, vector<8x32xf32>, vector<8x32xf32> -> vector<8x32xf32>
    %88 = arith.addf %68, %87 : vector<8x32xf32>
    %c0_33 = arith.constant 0 : index
    %c0_34 = arith.constant 0 : index
    %89 = vector.load %arg5[%c0_33, %c0_34] : memref<1x32xf32, #tpu.memory_space<vmem>>, vector<1x32xf32>
    %90 = vector.broadcast %89 : vector<1x32xf32> to vector<8x32xf32>
    %91 = arith.addf %88, %90 : vector<8x32xf32>
    %92 = arith.addf %91, %1 : vector<8x32xf32>
    %cst_35 = arith.constant dense<0.000000e+00> : vector<8xf32>
    %93 = vector.multi_reduction <add>, %92, %cst_35 [1] : vector<8x32xf32> to vector<8xf32>
    %94 = vector.shape_cast %93 : vector<8xf32> to vector<8x1xf32>
    %cst_36 = arith.constant 3.200000e+01 : f32
    %95 = vector.broadcast %cst_36 : f32 to vector<8x1xf32>
    %96 = arith.divf %94, %95 : vector<8x1xf32>
    %97 = vector.broadcast %96 : vector<8x1xf32> to vector<8x32xf32>
    %98 = arith.subf %92, %97 : vector<8x32xf32>
    %99 = arith.mulf %98, %98 : vector<8x32xf32>
    %cst_37 = arith.constant dense<0.000000e+00> : vector<8xf32>
    %100 = vector.multi_reduction <add>, %99, %cst_37 [1] : vector<8x32xf32> to vector<8xf32>
    %101 = vector.shape_cast %100 : vector<8xf32> to vector<8x1xf32>
    %cst_38 = arith.constant 3.200000e+01 : f32
    %102 = vector.broadcast %cst_38 : f32 to vector<8x1xf32>
    %103 = arith.divf %101, %102 : vector<8x1xf32>
    %cst_39 = arith.constant 9.99999974E-6 : f32
    %104 = vector.broadcast %cst_39 : f32 to vector<8x1xf32>
    %105 = arith.addf %103, %104 : vector<8x1xf32>
    %106 = math.rsqrt %105 : vector<8x1xf32>
    %107 = vector.broadcast %106 : vector<8x1xf32> to vector<8x32xf32>
    %108 = arith.mulf %98, %107 : vector<8x32xf32>
    %c0_40 = arith.constant 0 : index
    %c0_41 = arith.constant 0 : index
    %109 = vector.load %arg6[%c0_40, %c0_41] : memref<1x32xf32, #tpu.memory_space<vmem>>, vector<1x32xf32>
    %110 = vector.broadcast %109 : vector<1x32xf32> to vector<8x32xf32>
    %111 = arith.mulf %108, %110 : vector<8x32xf32>
    %c0_42 = arith.constant 0 : index
    %c0_43 = arith.constant 0 : index
    %112 = vector.load %arg7[%c0_42, %c0_43] : memref<1x32xf32, #tpu.memory_space<vmem>>, vector<1x32xf32>
    %113 = vector.broadcast %112 : vector<1x32xf32> to vector<8x32xf32>
    %114 = arith.addf %111, %113 : vector<8x32xf32>
    %c0_44 = arith.constant 0 : index
    %c0_45 = arith.constant 0 : index
    %c0_46 = arith.constant 0 : index
    %115 = vector.load %arg8[%c0_44, %c0_45, %c0_46] : memref<1x8x32xf32, #tpu.memory_space<vmem>>, vector<1x8x32xf32>
    %116 = vector.shape_cast %115 : vector<1x8x32xf32> to vector<8x32xf32>
    %117 = vector.shape_cast %114 : vector<8x32xf32> to vector<1x8x32xf32>
    tpu.vector_store %arg8[%c0_44, %c0_45, %c0_46], %117 {strides = array<i32>} : memref<1x8x32xf32, #tpu.memory_space<vmem>>, vector<1x8x32xf32>,
    return
  }
  func.func @transform_0(%arg0: i32) -> (i32, i32, i32) {
    %c0_i32 = arith.constant 0 : i32
    %c0_i32_0 = arith.constant 0 : i32
    %c0_i32_1 = arith.constant 0 : i32
    return %arg0, %c0_i32, %c0_i32_0 : i32, i32, i32
  }
  func.func @transform_1(%arg0: i32) -> (i32, i32) {
    %c0_i32 = arith.constant 0 : i32
    %c0_i32_0 = arith.constant 0 : i32
    %c0_i32_1 = arith.constant 0 : i32
    return %c0_i32, %c0_i32_0 : i32, i32
  }
  func.func @transform_2(%arg0: i32) -> (i32, i32) {
    %c0_i32 = arith.constant 0 : i32
    %c0_i32_0 = arith.constant 0 : i32
    %c0_i32_1 = arith.constant 0 : i32
    return %c0_i32, %c0_i32_0 : i32, i32
  }
  func.func @transform_3(%arg0: i32) -> (i32, i32) {
    %c0_i32 = arith.constant 0 : i32
    %c0_i32_0 = arith.constant 0 : i32
    %c0_i32_1 = arith.constant 0 : i32
    return %c0_i32, %c0_i32_0 : i32, i32
  }
  func.func @transform_4(%arg0: i32) -> (i32, i32) {
    %c0_i32 = arith.constant 0 : i32
    %c0_i32_0 = arith.constant 0 : i32
    %c0_i32_1 = arith.constant 0 : i32
    return %c0_i32, %c0_i32_0 : i32, i32
  }
  func.func @transform_5(%arg0: i32) -> (i32, i32) {
    %c0_i32 = arith.constant 0 : i32
    %c0_i32_0 = arith.constant 0 : i32
    %c0_i32_1 = arith.constant 0 : i32
    return %c0_i32, %c0_i32_0 : i32, i32
  }
  func.func @transform_6(%arg0: i32) -> (i32, i32) {
    %c0_i32 = arith.constant 0 : i32
    %c0_i32_0 = arith.constant 0 : i32
    %c0_i32_1 = arith.constant 0 : i32
    return %c0_i32, %c0_i32_0 : i32, i32
  }
  func.func @transform_7(%arg0: i32) -> (i32, i32, i32) {
    %c0_i32 = arith.constant 0 : i32
    %c0_i32_0 = arith.constant 0 : i32
    %c0_i32_1 = arith.constant 0 : i32
    return %arg0, %c0_i32, %c0_i32_0 : i32, i32, i32
  }
}

module attributes {stable_mosaic.version = 11 : i64} {
  func.func @_mha_fused_kernel(%arg0: i32, %arg1: memref<1x3x32xf32, #tpu.memory_space<vmem>>, %arg2: memref<32x96xf32, #tpu.memory_space<vmem>>, %arg3: memref<1x96xf32, #tpu.memory_space<vmem>>, %arg4: memref<32x32xf32, #tpu.memory_space<vmem>>, %arg5: memref<1x32xf32, #tpu.memory_space<vmem>>, %arg6: memref<1x32xf32, #tpu.memory_space<vmem>>, %arg7: memref<1x32xf32, #tpu.memory_space<vmem>>, %arg8: memref<1x3x32xf32, #tpu.memory_space<vmem>>) attributes {dimension_semantics = [#tpu.dimension_semantics<parallel>], iteration_bounds = array<i64: 16>, scalar_prefetch = 0 : i64, scratch_operands = 0 : i64, tpu.core_type = #tpu.core_type<tc>, window_params = [{transform_indices = @transform_0, window_bounds = array<i64: 1, 3, 32>}, {pipeline_mode = #tpu.pipeline_mode<synchronous>, transform_indices = @transform_1, window_bounds = array<i64: 32, 96>}, {pipeline_mode = #tpu.pipeline_mode<synchronous>, transform_indices = @transform_2, window_bounds = array<i64: 1, 96>}, {pipeline_mode = #tpu.pipeline_mode<synchronous>, transform_indices = @transform_3, window_bounds = array<i64: 32, 32>}, {pipeline_mode = #tpu.pipeline_mode<synchronous>, transform_indices = @transform_4, window_bounds = array<i64: 1, 32>}, {pipeline_mode = #tpu.pipeline_mode<synchronous>, transform_indices = @transform_5, window_bounds = array<i64: 1, 32>}, {pipeline_mode = #tpu.pipeline_mode<synchronous>, transform_indices = @transform_6, window_bounds = array<i64: 1, 32>}, {transform_indices = @transform_7, window_bounds = array<i64: 1, 3, 32>}]} {
    %c0 = arith.constant 0 : index
    %c0_0 = arith.constant 0 : index
    %c0_1 = arith.constant 0 : index
    %0 = vector.load %arg1[%c0, %c0_0, %c0_1] : memref<1x3x32xf32, #tpu.memory_space<vmem>>, vector<1x3x32xf32>
    %1 = vector.shape_cast %0 : vector<1x3x32xf32> to vector<3x32xf32>
    %c0_2 = arith.constant 0 : index
    %c0_3 = arith.constant 0 : index
    %2 = vector.load %arg2[%c0_2, %c0_3] : memref<32x96xf32, #tpu.memory_space<vmem>>, vector<32x96xf32>
    %cst = arith.constant dense<0.000000e+00> : vector<3x96xf32>
    %3 = tpu.matmul %1, %2, %cst {dimension_numbers = #tpu.dot_dimension_numbers<[1], [0], [0], [1], [0, 0, 1, 1], [], []>} : vector<3x32xf32>, vector<32x96xf32>, vector<3x96xf32> -> vector<3x96xf32>
    %c0_4 = arith.constant 0 : index
    %c0_5 = arith.constant 0 : index
    %4 = vector.load %arg3[%c0_4, %c0_5] : memref<1x96xf32, #tpu.memory_space<vmem>>, vector<1x96xf32>
    %5 = vector.broadcast %4 : vector<1x96xf32> to vector<3x96xf32>
    %6 = arith.addf %3, %5 : vector<3x96xf32>
    %c0_6 = arith.constant 0 : index
    %c0_7 = arith.constant 0 : index
    %7 = vector.load %arg4[%c0_6, %c0_7] : memref<32x32xf32, #tpu.memory_space<vmem>>, vector<32x32xf32>
    %cst_8 = arith.constant 0.000000e+00 : f32
    %8 = vector.broadcast %cst_8 : f32 to vector<3x32xf32>
    %9 = vector.extract_strided_slice %6 {offsets = [0, 0], sizes = [3, 8], strides = [1, 1]} : vector<3x96xf32> to vector<3x8xf32>
    %10 = vector.extract_strided_slice %6 {offsets = [0, 32], sizes = [3, 8], strides = [1, 1]} : vector<3x96xf32> to vector<3x8xf32>
    %11 = vector.extract_strided_slice %6 {offsets = [0, 64], sizes = [3, 8], strides = [1, 1]} : vector<3x96xf32> to vector<3x8xf32>
    %cst_9 = arith.constant dense<0.000000e+00> : vector<3x3xf32>
    %12 = tpu.matmul %9, %10, %cst_9 {dimension_numbers = #tpu.dot_dimension_numbers<[1], [1], [0], [0], [0, 0, 1, 0], [], []>} : vector<3x8xf32>, vector<3x8xf32>, vector<3x3xf32> -> vector<3x3xf32>
    %cst_10 = arith.constant 0.353553385 : f32
    %13 = vector.broadcast %cst_10 : f32 to vector<3x3xf32>
    %14 = arith.mulf %12, %13 : vector<3x3xf32>
    %cst_11 = arith.constant dense<0xFF800000> : vector<3xf32>
    %15 = vector.multi_reduction <maximumf>, %14, %cst_11 [1] : vector<3x3xf32> to vector<3xf32>
    %16 = vector.shape_cast %15 : vector<3xf32> to vector<3x1xf32>
    %17 = vector.broadcast %16 : vector<3x1xf32> to vector<3x3xf32>
    %18 = arith.subf %14, %17 : vector<3x3xf32>
    %19 = math.exp %18 : vector<3x3xf32>
    %cst_12 = arith.constant dense<0.000000e+00> : vector<3xf32>
    %20 = vector.multi_reduction <add>, %19, %cst_12 [1] : vector<3x3xf32> to vector<3xf32>
    %21 = vector.shape_cast %20 : vector<3xf32> to vector<3x1xf32>
    %22 = tpu.reciprocal %21 {approx = true} : vector<3x1xf32> -> vector<3x1xf32>
    %23 = vector.broadcast %22 : vector<3x1xf32> to vector<3x3xf32>
    %24 = arith.mulf %19, %23 : vector<3x3xf32>
    %cst_13 = arith.constant dense<0.000000e+00> : vector<3x8xf32>
    %25 = tpu.matmul %24, %11, %cst_13 {dimension_numbers = #tpu.dot_dimension_numbers<[1], [0], [0], [1], [0, 0, 1, 1], [], []>} : vector<3x3xf32>, vector<3x8xf32>, vector<3x8xf32> -> vector<3x8xf32>
    %26 = vector.extract_strided_slice %7 {offsets = [0, 0], sizes = [8, 32], strides = [1, 1]} : vector<32x32xf32> to vector<8x32xf32>
    %cst_14 = arith.constant dense<0.000000e+00> : vector<3x32xf32>
    %27 = tpu.matmul %25, %26, %cst_14 {dimension_numbers = #tpu.dot_dimension_numbers<[1], [0], [0], [1], [0, 0, 1, 1], [], []>} : vector<3x8xf32>, vector<8x32xf32>, vector<3x32xf32> -> vector<3x32xf32>
    %28 = arith.addf %8, %27 : vector<3x32xf32>
    %29 = vector.extract_strided_slice %6 {offsets = [0, 8], sizes = [3, 8], strides = [1, 1]} : vector<3x96xf32> to vector<3x8xf32>
    %30 = vector.extract_strided_slice %6 {offsets = [0, 40], sizes = [3, 8], strides = [1, 1]} : vector<3x96xf32> to vector<3x8xf32>
    %31 = vector.extract_strided_slice %6 {offsets = [0, 72], sizes = [3, 8], strides = [1, 1]} : vector<3x96xf32> to vector<3x8xf32>
    %cst_15 = arith.constant dense<0.000000e+00> : vector<3x3xf32>
    %32 = tpu.matmul %29, %30, %cst_15 {dimension_numbers = #tpu.dot_dimension_numbers<[1], [1], [0], [0], [0, 0, 1, 0], [], []>} : vector<3x8xf32>, vector<3x8xf32>, vector<3x3xf32> -> vector<3x3xf32>
    %cst_16 = arith.constant 0.353553385 : f32
    %33 = vector.broadcast %cst_16 : f32 to vector<3x3xf32>
    %34 = arith.mulf %32, %33 : vector<3x3xf32>
    %cst_17 = arith.constant dense<0xFF800000> : vector<3xf32>
    %35 = vector.multi_reduction <maximumf>, %34, %cst_17 [1] : vector<3x3xf32> to vector<3xf32>
    %36 = vector.shape_cast %35 : vector<3xf32> to vector<3x1xf32>
    %37 = vector.broadcast %36 : vector<3x1xf32> to vector<3x3xf32>
    %38 = arith.subf %34, %37 : vector<3x3xf32>
    %39 = math.exp %38 : vector<3x3xf32>
    %cst_18 = arith.constant dense<0.000000e+00> : vector<3xf32>
    %40 = vector.multi_reduction <add>, %39, %cst_18 [1] : vector<3x3xf32> to vector<3xf32>
    %41 = vector.shape_cast %40 : vector<3xf32> to vector<3x1xf32>
    %42 = tpu.reciprocal %41 {approx = true} : vector<3x1xf32> -> vector<3x1xf32>
    %43 = vector.broadcast %42 : vector<3x1xf32> to vector<3x3xf32>
    %44 = arith.mulf %39, %43 : vector<3x3xf32>
    %cst_19 = arith.constant dense<0.000000e+00> : vector<3x8xf32>
    %45 = tpu.matmul %44, %31, %cst_19 {dimension_numbers = #tpu.dot_dimension_numbers<[1], [0], [0], [1], [0, 0, 1, 1], [], []>} : vector<3x3xf32>, vector<3x8xf32>, vector<3x8xf32> -> vector<3x8xf32>
    %46 = vector.extract_strided_slice %7 {offsets = [8, 0], sizes = [8, 32], strides = [1, 1]} : vector<32x32xf32> to vector<8x32xf32>
    %cst_20 = arith.constant dense<0.000000e+00> : vector<3x32xf32>
    %47 = tpu.matmul %45, %46, %cst_20 {dimension_numbers = #tpu.dot_dimension_numbers<[1], [0], [0], [1], [0, 0, 1, 1], [], []>} : vector<3x8xf32>, vector<8x32xf32>, vector<3x32xf32> -> vector<3x32xf32>
    %48 = arith.addf %28, %47 : vector<3x32xf32>
    %49 = vector.extract_strided_slice %6 {offsets = [0, 16], sizes = [3, 8], strides = [1, 1]} : vector<3x96xf32> to vector<3x8xf32>
    %50 = vector.extract_strided_slice %6 {offsets = [0, 48], sizes = [3, 8], strides = [1, 1]} : vector<3x96xf32> to vector<3x8xf32>
    %51 = vector.extract_strided_slice %6 {offsets = [0, 80], sizes = [3, 8], strides = [1, 1]} : vector<3x96xf32> to vector<3x8xf32>
    %cst_21 = arith.constant dense<0.000000e+00> : vector<3x3xf32>
    %52 = tpu.matmul %49, %50, %cst_21 {dimension_numbers = #tpu.dot_dimension_numbers<[1], [1], [0], [0], [0, 0, 1, 0], [], []>} : vector<3x8xf32>, vector<3x8xf32>, vector<3x3xf32> -> vector<3x3xf32>
    %cst_22 = arith.constant 0.353553385 : f32
    %53 = vector.broadcast %cst_22 : f32 to vector<3x3xf32>
    %54 = arith.mulf %52, %53 : vector<3x3xf32>
    %cst_23 = arith.constant dense<0xFF800000> : vector<3xf32>
    %55 = vector.multi_reduction <maximumf>, %54, %cst_23 [1] : vector<3x3xf32> to vector<3xf32>
    %56 = vector.shape_cast %55 : vector<3xf32> to vector<3x1xf32>
    %57 = vector.broadcast %56 : vector<3x1xf32> to vector<3x3xf32>
    %58 = arith.subf %54, %57 : vector<3x3xf32>
    %59 = math.exp %58 : vector<3x3xf32>
    %cst_24 = arith.constant dense<0.000000e+00> : vector<3xf32>
    %60 = vector.multi_reduction <add>, %59, %cst_24 [1] : vector<3x3xf32> to vector<3xf32>
    %61 = vector.shape_cast %60 : vector<3xf32> to vector<3x1xf32>
    %62 = tpu.reciprocal %61 {approx = true} : vector<3x1xf32> -> vector<3x1xf32>
    %63 = vector.broadcast %62 : vector<3x1xf32> to vector<3x3xf32>
    %64 = arith.mulf %59, %63 : vector<3x3xf32>
    %cst_25 = arith.constant dense<0.000000e+00> : vector<3x8xf32>
    %65 = tpu.matmul %64, %51, %cst_25 {dimension_numbers = #tpu.dot_dimension_numbers<[1], [0], [0], [1], [0, 0, 1, 1], [], []>} : vector<3x3xf32>, vector<3x8xf32>, vector<3x8xf32> -> vector<3x8xf32>
    %66 = vector.extract_strided_slice %7 {offsets = [16, 0], sizes = [8, 32], strides = [1, 1]} : vector<32x32xf32> to vector<8x32xf32>
    %cst_26 = arith.constant dense<0.000000e+00> : vector<3x32xf32>
    %67 = tpu.matmul %65, %66, %cst_26 {dimension_numbers = #tpu.dot_dimension_numbers<[1], [0], [0], [1], [0, 0, 1, 1], [], []>} : vector<3x8xf32>, vector<8x32xf32>, vector<3x32xf32> -> vector<3x32xf32>
    %68 = arith.addf %48, %67 : vector<3x32xf32>
    %69 = vector.extract_strided_slice %6 {offsets = [0, 24], sizes = [3, 8], strides = [1, 1]} : vector<3x96xf32> to vector<3x8xf32>
    %70 = vector.extract_strided_slice %6 {offsets = [0, 56], sizes = [3, 8], strides = [1, 1]} : vector<3x96xf32> to vector<3x8xf32>
    %71 = vector.extract_strided_slice %6 {offsets = [0, 88], sizes = [3, 8], strides = [1, 1]} : vector<3x96xf32> to vector<3x8xf32>
    %cst_27 = arith.constant dense<0.000000e+00> : vector<3x3xf32>
    %72 = tpu.matmul %69, %70, %cst_27 {dimension_numbers = #tpu.dot_dimension_numbers<[1], [1], [0], [0], [0, 0, 1, 0], [], []>} : vector<3x8xf32>, vector<3x8xf32>, vector<3x3xf32> -> vector<3x3xf32>
    %cst_28 = arith.constant 0.353553385 : f32
    %73 = vector.broadcast %cst_28 : f32 to vector<3x3xf32>
    %74 = arith.mulf %72, %73 : vector<3x3xf32>
    %cst_29 = arith.constant dense<0xFF800000> : vector<3xf32>
    %75 = vector.multi_reduction <maximumf>, %74, %cst_29 [1] : vector<3x3xf32> to vector<3xf32>
    %76 = vector.shape_cast %75 : vector<3xf32> to vector<3x1xf32>
    %77 = vector.broadcast %76 : vector<3x1xf32> to vector<3x3xf32>
    %78 = arith.subf %74, %77 : vector<3x3xf32>
    %79 = math.exp %78 : vector<3x3xf32>
    %cst_30 = arith.constant dense<0.000000e+00> : vector<3xf32>
    %80 = vector.multi_reduction <add>, %79, %cst_30 [1] : vector<3x3xf32> to vector<3xf32>
    %81 = vector.shape_cast %80 : vector<3xf32> to vector<3x1xf32>
    %82 = tpu.reciprocal %81 {approx = true} : vector<3x1xf32> -> vector<3x1xf32>
    %83 = vector.broadcast %82 : vector<3x1xf32> to vector<3x3xf32>
    %84 = arith.mulf %79, %83 : vector<3x3xf32>
    %cst_31 = arith.constant dense<0.000000e+00> : vector<3x8xf32>
    %85 = tpu.matmul %84, %71, %cst_31 {dimension_numbers = #tpu.dot_dimension_numbers<[1], [0], [0], [1], [0, 0, 1, 1], [], []>} : vector<3x3xf32>, vector<3x8xf32>, vector<3x8xf32> -> vector<3x8xf32>
    %86 = vector.extract_strided_slice %7 {offsets = [24, 0], sizes = [8, 32], strides = [1, 1]} : vector<32x32xf32> to vector<8x32xf32>
    %cst_32 = arith.constant dense<0.000000e+00> : vector<3x32xf32>
    %87 = tpu.matmul %85, %86, %cst_32 {dimension_numbers = #tpu.dot_dimension_numbers<[1], [0], [0], [1], [0, 0, 1, 1], [], []>} : vector<3x8xf32>, vector<8x32xf32>, vector<3x32xf32> -> vector<3x32xf32>
    %88 = arith.addf %68, %87 : vector<3x32xf32>
    %c0_33 = arith.constant 0 : index
    %c0_34 = arith.constant 0 : index
    %89 = vector.load %arg5[%c0_33, %c0_34] : memref<1x32xf32, #tpu.memory_space<vmem>>, vector<1x32xf32>
    %90 = vector.broadcast %89 : vector<1x32xf32> to vector<3x32xf32>
    %91 = arith.addf %88, %90 : vector<3x32xf32>
    %92 = arith.addf %91, %1 : vector<3x32xf32>
    %cst_35 = arith.constant dense<0.000000e+00> : vector<3xf32>
    %93 = vector.multi_reduction <add>, %92, %cst_35 [1] : vector<3x32xf32> to vector<3xf32>
    %94 = vector.shape_cast %93 : vector<3xf32> to vector<3x1xf32>
    %cst_36 = arith.constant 3.200000e+01 : f32
    %95 = vector.broadcast %cst_36 : f32 to vector<3x1xf32>
    %96 = arith.divf %94, %95 : vector<3x1xf32>
    %97 = vector.broadcast %96 : vector<3x1xf32> to vector<3x32xf32>
    %98 = arith.subf %92, %97 : vector<3x32xf32>
    %99 = arith.mulf %98, %98 : vector<3x32xf32>
    %cst_37 = arith.constant dense<0.000000e+00> : vector<3xf32>
    %100 = vector.multi_reduction <add>, %99, %cst_37 [1] : vector<3x32xf32> to vector<3xf32>
    %101 = vector.shape_cast %100 : vector<3xf32> to vector<3x1xf32>
    %cst_38 = arith.constant 3.200000e+01 : f32
    %102 = vector.broadcast %cst_38 : f32 to vector<3x1xf32>
    %103 = arith.divf %101, %102 : vector<3x1xf32>
    %cst_39 = arith.constant 9.99999974E-6 : f32
    %104 = vector.broadcast %cst_39 : f32 to vector<3x1xf32>
    %105 = arith.addf %103, %104 : vector<3x1xf32>
    %106 = math.rsqrt %105 : vector<3x1xf32>
    %107 = vector.broadcast %106 : vector<3x1xf32> to vector<3x32xf32>
    %108 = arith.mulf %98, %107 : vector<3x32xf32>
    %c0_40 = arith.constant 0 : index
    %c0_41 = arith.constant 0 : index
    %109 = vector.load %arg6[%c0_40, %c0_41] : memref<1x32xf32, #tpu.memory_space<vmem>>, vector<1x32xf32>
    %110 = vector.broadcast %109 : vector<1x32xf32> to vector<3x32xf32>
    %111 = arith.mulf %108, %110 : vector<3x32xf32>
    %c0_42 = arith.constant 0 : index
    %c0_43 = arith.constant 0 : index
    %112 = vector.load %arg7[%c0_42, %c0_43] : memref<1x32xf32, #tpu.memory_space<vmem>>, vector<1x32xf32>
    %113 = vector.broadcast %112 : vector<1x32xf32> to vector<3x32xf32>
    %114 = arith.addf %111, %113 : vector<3x32xf32>
    %c0_44 = arith.constant 0 : index
    %c0_45 = arith.constant 0 : index
    %c0_46 = arith.constant 0 : index
    %115 = vector.load %arg8[%c0_44, %c0_45, %c0_46] : memref<1x3x32xf32, #tpu.memory_space<vmem>>, vector<1x3x32xf32>
    %116 = vector.shape_cast %115 : vector<1x3x32xf32> to vector<3x32xf32>
    %117 = vector.shape_cast %114 : vector<3x32xf32> to vector<1x3x32xf32>
    tpu.vector_store %arg8[%c0_44, %c0_45, %c0_46], %117 {strides = array<i32>} : memref<1x3x32xf32, #tpu.memory_space<vmem>>, vector<1x3x32xf32>,
    return
  }
  func.func @transform_0(%arg0: i32) -> (i32, i32, i32) {
    %c0_i32 = arith.constant 0 : i32
    %c0_i32_0 = arith.constant 0 : i32
    %c0_i32_1 = arith.constant 0 : i32
    return %arg0, %c0_i32, %c0_i32_0 : i32, i32, i32
  }
  func.func @transform_1(%arg0: i32) -> (i32, i32) {
    %c0_i32 = arith.constant 0 : i32
    %c0_i32_0 = arith.constant 0 : i32
    %c0_i32_1 = arith.constant 0 : i32
    return %c0_i32, %c0_i32_0 : i32, i32
  }
  func.func @transform_2(%arg0: i32) -> (i32, i32) {
    %c0_i32 = arith.constant 0 : i32
    %c0_i32_0 = arith.constant 0 : i32
    %c0_i32_1 = arith.constant 0 : i32
    return %c0_i32, %c0_i32_0 : i32, i32
  }
  func.func @transform_3(%arg0: i32) -> (i32, i32) {
    %c0_i32 = arith.constant 0 : i32
    %c0_i32_0 = arith.constant 0 : i32
    %c0_i32_1 = arith.constant 0 : i32
    return %c0_i32, %c0_i32_0 : i32, i32
  }
  func.func @transform_4(%arg0: i32) -> (i32, i32) {
    %c0_i32 = arith.constant 0 : i32
    %c0_i32_0 = arith.constant 0 : i32
    %c0_i32_1 = arith.constant 0 : i32
    return %c0_i32, %c0_i32_0 : i32, i32
  }
  func.func @transform_5(%arg0: i32) -> (i32, i32) {
    %c0_i32 = arith.constant 0 : i32
    %c0_i32_0 = arith.constant 0 : i32
    %c0_i32_1 = arith.constant 0 : i32
    return %c0_i32, %c0_i32_0 : i32, i32
  }
  func.func @transform_6(%arg0: i32) -> (i32, i32) {
    %c0_i32 = arith.constant 0 : i32
    %c0_i32_0 = arith.constant 0 : i32
    %c0_i32_1 = arith.constant 0 : i32
    return %c0_i32, %c0_i32_0 : i32, i32
  }
  func.func @transform_7(%arg0: i32) -> (i32, i32, i32) {
    %c0_i32 = arith.constant 0 : i32
    %c0_i32_0 = arith.constant 0 : i32
    %c0_i32_1 = arith.constant 0 : i32
    return %arg0, %c0_i32, %c0_i32_0 : i32, i32, i32
  }
}

module attributes {stable_mosaic.version = 11 : i64} {
  func.func @_ffn_fused_kernel(%arg0: i32, %arg1: memref<48x32xf32, #tpu.memory_space<vmem>>, %arg2: memref<32x64xf32, #tpu.memory_space<vmem>>, %arg3: memref<1x64xf32, #tpu.memory_space<vmem>>, %arg4: memref<64x32xf32, #tpu.memory_space<vmem>>, %arg5: memref<1x32xf32, #tpu.memory_space<vmem>>, %arg6: memref<1x32xf32, #tpu.memory_space<vmem>>, %arg7: memref<1x32xf32, #tpu.memory_space<vmem>>, %arg8: memref<48x32xf32, #tpu.memory_space<vmem>>) attributes {dimension_semantics = [#tpu.dimension_semantics<parallel>], iteration_bounds = array<i64: 1>, scalar_prefetch = 0 : i64, scratch_operands = 0 : i64, tpu.core_type = #tpu.core_type<tc>, window_params = [{transform_indices = @transform_0, window_bounds = array<i64: 48, 32>}, {pipeline_mode = #tpu.pipeline_mode<synchronous>, transform_indices = @transform_1, window_bounds = array<i64: 32, 64>}, {pipeline_mode = #tpu.pipeline_mode<synchronous>, transform_indices = @transform_2, window_bounds = array<i64: 1, 64>}, {pipeline_mode = #tpu.pipeline_mode<synchronous>, transform_indices = @transform_3, window_bounds = array<i64: 64, 32>}, {pipeline_mode = #tpu.pipeline_mode<synchronous>, transform_indices = @transform_4, window_bounds = array<i64: 1, 32>}, {pipeline_mode = #tpu.pipeline_mode<synchronous>, transform_indices = @transform_5, window_bounds = array<i64: 1, 32>}, {pipeline_mode = #tpu.pipeline_mode<synchronous>, transform_indices = @transform_6, window_bounds = array<i64: 1, 32>}, {transform_indices = @transform_7, window_bounds = array<i64: 48, 32>}]} {
    %c0 = arith.constant 0 : index
    %c0_0 = arith.constant 0 : index
    %0 = vector.load %arg1[%c0, %c0_0] : memref<48x32xf32, #tpu.memory_space<vmem>>, vector<48x32xf32>
    %c0_1 = arith.constant 0 : index
    %c0_2 = arith.constant 0 : index
    %1 = vector.load %arg2[%c0_1, %c0_2] : memref<32x64xf32, #tpu.memory_space<vmem>>, vector<32x64xf32>
    %cst = arith.constant dense<0.000000e+00> : vector<48x64xf32>
    %2 = tpu.matmul %0, %1, %cst {dimension_numbers = #tpu.dot_dimension_numbers<[1], [0], [0], [1], [0, 0, 1, 1], [], []>} : vector<48x32xf32>, vector<32x64xf32>, vector<48x64xf32> -> vector<48x64xf32>
    %c0_3 = arith.constant 0 : index
    %c0_4 = arith.constant 0 : index
    %3 = vector.load %arg3[%c0_3, %c0_4] : memref<1x64xf32, #tpu.memory_space<vmem>>, vector<1x64xf32>
    %4 = vector.broadcast %3 : vector<1x64xf32> to vector<48x64xf32>
    %5 = arith.addf %2, %4 : vector<48x64xf32>
    %cst_5 = arith.constant 0.000000e+00 : f32
    %6 = vector.broadcast %cst_5 : f32 to vector<48x64xf32>
    %7 = arith.maximumf %5, %6 : vector<48x64xf32>
    %c0_6 = arith.constant 0 : index
    %c0_7 = arith.constant 0 : index
    %8 = vector.load %arg4[%c0_6, %c0_7] : memref<64x32xf32, #tpu.memory_space<vmem>>, vector<64x32xf32>
    %cst_8 = arith.constant dense<0.000000e+00> : vector<48x32xf32>
    %9 = tpu.matmul %7, %8, %cst_8 {dimension_numbers = #tpu.dot_dimension_numbers<[1], [0], [0], [1], [0, 0, 1, 1], [], []>} : vector<48x64xf32>, vector<64x32xf32>, vector<48x32xf32> -> vector<48x32xf32>
    %c0_9 = arith.constant 0 : index
    %c0_10 = arith.constant 0 : index
    %10 = vector.load %arg5[%c0_9, %c0_10] : memref<1x32xf32, #tpu.memory_space<vmem>>, vector<1x32xf32>
    %11 = vector.broadcast %10 : vector<1x32xf32> to vector<48x32xf32>
    %12 = arith.addf %9, %11 : vector<48x32xf32>
    %13 = arith.addf %12, %0 : vector<48x32xf32>
    %cst_11 = arith.constant dense<0.000000e+00> : vector<48xf32>
    %14 = vector.multi_reduction <add>, %13, %cst_11 [1] : vector<48x32xf32> to vector<48xf32>
    %15 = vector.shape_cast %14 : vector<48xf32> to vector<48x1xf32>
    %cst_12 = arith.constant 3.200000e+01 : f32
    %16 = vector.broadcast %cst_12 : f32 to vector<48x1xf32>
    %17 = arith.divf %15, %16 : vector<48x1xf32>
    %18 = vector.broadcast %17 : vector<48x1xf32> to vector<48x32xf32>
    %19 = arith.subf %13, %18 : vector<48x32xf32>
    %20 = arith.mulf %19, %19 : vector<48x32xf32>
    %cst_13 = arith.constant dense<0.000000e+00> : vector<48xf32>
    %21 = vector.multi_reduction <add>, %20, %cst_13 [1] : vector<48x32xf32> to vector<48xf32>
    %22 = vector.shape_cast %21 : vector<48xf32> to vector<48x1xf32>
    %cst_14 = arith.constant 3.200000e+01 : f32
    %23 = vector.broadcast %cst_14 : f32 to vector<48x1xf32>
    %24 = arith.divf %22, %23 : vector<48x1xf32>
    %cst_15 = arith.constant 9.99999997E-7 : f32
    %25 = vector.broadcast %cst_15 : f32 to vector<48x1xf32>
    %26 = arith.addf %24, %25 : vector<48x1xf32>
    %27 = math.rsqrt %26 : vector<48x1xf32>
    %28 = vector.broadcast %27 : vector<48x1xf32> to vector<48x32xf32>
    %29 = arith.mulf %19, %28 : vector<48x32xf32>
    %c0_16 = arith.constant 0 : index
    %c0_17 = arith.constant 0 : index
    %30 = vector.load %arg6[%c0_16, %c0_17] : memref<1x32xf32, #tpu.memory_space<vmem>>, vector<1x32xf32>
    %31 = vector.broadcast %30 : vector<1x32xf32> to vector<48x32xf32>
    %32 = arith.mulf %29, %31 : vector<48x32xf32>
    %c0_18 = arith.constant 0 : index
    %c0_19 = arith.constant 0 : index
    %33 = vector.load %arg7[%c0_18, %c0_19] : memref<1x32xf32, #tpu.memory_space<vmem>>, vector<1x32xf32>
    %34 = vector.broadcast %33 : vector<1x32xf32> to vector<48x32xf32>
    %35 = arith.addf %32, %34 : vector<48x32xf32>
    %c0_20 = arith.constant 0 : index
    %c0_21 = arith.constant 0 : index
    %36 = vector.load %arg8[%c0_20, %c0_21] : memref<48x32xf32, #tpu.memory_space<vmem>>, vector<48x32xf32>
    tpu.vector_store %arg8[%c0_20, %c0_21], %35 {strides = array<i32>} : memref<48x32xf32, #tpu.memory_space<vmem>>, vector<48x32xf32>,
    return
  }
  func.func @transform_0(%arg0: i32) -> (i32, i32) {
    %c0_i32 = arith.constant 0 : i32
    %c0_i32_0 = arith.constant 0 : i32
    return %arg0, %c0_i32 : i32, i32
  }
  func.func @transform_1(%arg0: i32) -> (i32, i32) {
    %c0_i32 = arith.constant 0 : i32
    %c0_i32_0 = arith.constant 0 : i32
    %c0_i32_1 = arith.constant 0 : i32
    return %c0_i32, %c0_i32_0 : i32, i32
  }
  func.func @transform_2(%arg0: i32) -> (i32, i32) {
    %c0_i32 = arith.constant 0 : i32
    %c0_i32_0 = arith.constant 0 : i32
    %c0_i32_1 = arith.constant 0 : i32
    return %c0_i32, %c0_i32_0 : i32, i32
  }
  func.func @transform_3(%arg0: i32) -> (i32, i32) {
    %c0_i32 = arith.constant 0 : i32
    %c0_i32_0 = arith.constant 0 : i32
    %c0_i32_1 = arith.constant 0 : i32
    return %c0_i32, %c0_i32_0 : i32, i32
  }
  func.func @transform_4(%arg0: i32) -> (i32, i32) {
    %c0_i32 = arith.constant 0 : i32
    %c0_i32_0 = arith.constant 0 : i32
    %c0_i32_1 = arith.constant 0 : i32
    return %c0_i32, %c0_i32_0 : i32, i32
  }
  func.func @transform_5(%arg0: i32) -> (i32, i32) {
    %c0_i32 = arith.constant 0 : i32
    %c0_i32_0 = arith.constant 0 : i32
    %c0_i32_1 = arith.constant 0 : i32
    return %c0_i32, %c0_i32_0 : i32, i32
  }
  func.func @transform_6(%arg0: i32) -> (i32, i32) {
    %c0_i32 = arith.constant 0 : i32
    %c0_i32_0 = arith.constant 0 : i32
    %c0_i32_1 = arith.constant 0 : i32
    return %c0_i32, %c0_i32_0 : i32, i32
  }
  func.func @transform_7(%arg0: i32) -> (i32, i32) {
    %c0_i32 = arith.constant 0 : i32
    %c0_i32_0 = arith.constant 0 : i32
    return %arg0, %c0_i32 : i32, i32
  }
}

module attributes {stable_mosaic.version = 11 : i64} {
  func.func @_mha_fused_kernel(%arg0: i32, %arg1: memref<1x8x32xf32, #tpu.memory_space<vmem>>, %arg2: memref<32x96xf32, #tpu.memory_space<vmem>>, %arg3: memref<1x96xf32, #tpu.memory_space<vmem>>, %arg4: memref<32x32xf32, #tpu.memory_space<vmem>>, %arg5: memref<1x32xf32, #tpu.memory_space<vmem>>, %arg6: memref<1x32xf32, #tpu.memory_space<vmem>>, %arg7: memref<1x32xf32, #tpu.memory_space<vmem>>, %arg8: memref<1x8x32xf32, #tpu.memory_space<vmem>>) attributes {dimension_semantics = [#tpu.dimension_semantics<parallel>], iteration_bounds = array<i64: 6>, scalar_prefetch = 0 : i64, scratch_operands = 0 : i64, tpu.core_type = #tpu.core_type<tc>, window_params = [{transform_indices = @transform_0, window_bounds = array<i64: 1, 8, 32>}, {pipeline_mode = #tpu.pipeline_mode<synchronous>, transform_indices = @transform_1, window_bounds = array<i64: 32, 96>}, {pipeline_mode = #tpu.pipeline_mode<synchronous>, transform_indices = @transform_2, window_bounds = array<i64: 1, 96>}, {pipeline_mode = #tpu.pipeline_mode<synchronous>, transform_indices = @transform_3, window_bounds = array<i64: 32, 32>}, {pipeline_mode = #tpu.pipeline_mode<synchronous>, transform_indices = @transform_4, window_bounds = array<i64: 1, 32>}, {pipeline_mode = #tpu.pipeline_mode<synchronous>, transform_indices = @transform_5, window_bounds = array<i64: 1, 32>}, {pipeline_mode = #tpu.pipeline_mode<synchronous>, transform_indices = @transform_6, window_bounds = array<i64: 1, 32>}, {transform_indices = @transform_7, window_bounds = array<i64: 1, 8, 32>}]} {
    %c0 = arith.constant 0 : index
    %c0_0 = arith.constant 0 : index
    %c0_1 = arith.constant 0 : index
    %0 = vector.load %arg1[%c0, %c0_0, %c0_1] : memref<1x8x32xf32, #tpu.memory_space<vmem>>, vector<1x8x32xf32>
    %1 = vector.shape_cast %0 : vector<1x8x32xf32> to vector<8x32xf32>
    %c0_2 = arith.constant 0 : index
    %c0_3 = arith.constant 0 : index
    %2 = vector.load %arg2[%c0_2, %c0_3] : memref<32x96xf32, #tpu.memory_space<vmem>>, vector<32x96xf32>
    %cst = arith.constant dense<0.000000e+00> : vector<8x96xf32>
    %3 = tpu.matmul %1, %2, %cst {dimension_numbers = #tpu.dot_dimension_numbers<[1], [0], [0], [1], [0, 0, 1, 1], [], []>} : vector<8x32xf32>, vector<32x96xf32>, vector<8x96xf32> -> vector<8x96xf32>
    %c0_4 = arith.constant 0 : index
    %c0_5 = arith.constant 0 : index
    %4 = vector.load %arg3[%c0_4, %c0_5] : memref<1x96xf32, #tpu.memory_space<vmem>>, vector<1x96xf32>
    %5 = vector.broadcast %4 : vector<1x96xf32> to vector<8x96xf32>
    %6 = arith.addf %3, %5 : vector<8x96xf32>
    %c0_6 = arith.constant 0 : index
    %c0_7 = arith.constant 0 : index
    %7 = vector.load %arg4[%c0_6, %c0_7] : memref<32x32xf32, #tpu.memory_space<vmem>>, vector<32x32xf32>
    %cst_8 = arith.constant 0.000000e+00 : f32
    %8 = vector.broadcast %cst_8 : f32 to vector<8x32xf32>
    %9 = vector.extract_strided_slice %6 {offsets = [0, 0], sizes = [8, 8], strides = [1, 1]} : vector<8x96xf32> to vector<8x8xf32>
    %10 = vector.extract_strided_slice %6 {offsets = [0, 32], sizes = [8, 8], strides = [1, 1]} : vector<8x96xf32> to vector<8x8xf32>
    %11 = vector.extract_strided_slice %6 {offsets = [0, 64], sizes = [8, 8], strides = [1, 1]} : vector<8x96xf32> to vector<8x8xf32>
    %cst_9 = arith.constant dense<0.000000e+00> : vector<8x8xf32>
    %12 = tpu.matmul %9, %10, %cst_9 {dimension_numbers = #tpu.dot_dimension_numbers<[1], [1], [0], [0], [0, 0, 1, 0], [], []>} : vector<8x8xf32>, vector<8x8xf32>, vector<8x8xf32> -> vector<8x8xf32>
    %cst_10 = arith.constant 0.353553385 : f32
    %13 = vector.broadcast %cst_10 : f32 to vector<8x8xf32>
    %14 = arith.mulf %12, %13 : vector<8x8xf32>
    %cst_11 = arith.constant dense<0xFF800000> : vector<8xf32>
    %15 = vector.multi_reduction <maximumf>, %14, %cst_11 [1] : vector<8x8xf32> to vector<8xf32>
    %16 = vector.shape_cast %15 : vector<8xf32> to vector<8x1xf32>
    %17 = vector.broadcast %16 : vector<8x1xf32> to vector<8x8xf32>
    %18 = arith.subf %14, %17 : vector<8x8xf32>
    %19 = math.exp %18 : vector<8x8xf32>
    %cst_12 = arith.constant dense<0.000000e+00> : vector<8xf32>
    %20 = vector.multi_reduction <add>, %19, %cst_12 [1] : vector<8x8xf32> to vector<8xf32>
    %21 = vector.shape_cast %20 : vector<8xf32> to vector<8x1xf32>
    %22 = tpu.reciprocal %21 {approx = true} : vector<8x1xf32> -> vector<8x1xf32>
    %23 = vector.broadcast %22 : vector<8x1xf32> to vector<8x8xf32>
    %24 = arith.mulf %19, %23 : vector<8x8xf32>
    %cst_13 = arith.constant dense<0.000000e+00> : vector<8x8xf32>
    %25 = tpu.matmul %24, %11, %cst_13 {dimension_numbers = #tpu.dot_dimension_numbers<[1], [0], [0], [1], [0, 0, 1, 1], [], []>} : vector<8x8xf32>, vector<8x8xf32>, vector<8x8xf32> -> vector<8x8xf32>
    %26 = vector.extract_strided_slice %7 {offsets = [0, 0], sizes = [8, 32], strides = [1, 1]} : vector<32x32xf32> to vector<8x32xf32>
    %cst_14 = arith.constant dense<0.000000e+00> : vector<8x32xf32>
    %27 = tpu.matmul %25, %26, %cst_14 {dimension_numbers = #tpu.dot_dimension_numbers<[1], [0], [0], [1], [0, 0, 1, 1], [], []>} : vector<8x8xf32>, vector<8x32xf32>, vector<8x32xf32> -> vector<8x32xf32>
    %28 = arith.addf %8, %27 : vector<8x32xf32>
    %29 = vector.extract_strided_slice %6 {offsets = [0, 8], sizes = [8, 8], strides = [1, 1]} : vector<8x96xf32> to vector<8x8xf32>
    %30 = vector.extract_strided_slice %6 {offsets = [0, 40], sizes = [8, 8], strides = [1, 1]} : vector<8x96xf32> to vector<8x8xf32>
    %31 = vector.extract_strided_slice %6 {offsets = [0, 72], sizes = [8, 8], strides = [1, 1]} : vector<8x96xf32> to vector<8x8xf32>
    %cst_15 = arith.constant dense<0.000000e+00> : vector<8x8xf32>
    %32 = tpu.matmul %29, %30, %cst_15 {dimension_numbers = #tpu.dot_dimension_numbers<[1], [1], [0], [0], [0, 0, 1, 0], [], []>} : vector<8x8xf32>, vector<8x8xf32>, vector<8x8xf32> -> vector<8x8xf32>
    %cst_16 = arith.constant 0.353553385 : f32
    %33 = vector.broadcast %cst_16 : f32 to vector<8x8xf32>
    %34 = arith.mulf %32, %33 : vector<8x8xf32>
    %cst_17 = arith.constant dense<0xFF800000> : vector<8xf32>
    %35 = vector.multi_reduction <maximumf>, %34, %cst_17 [1] : vector<8x8xf32> to vector<8xf32>
    %36 = vector.shape_cast %35 : vector<8xf32> to vector<8x1xf32>
    %37 = vector.broadcast %36 : vector<8x1xf32> to vector<8x8xf32>
    %38 = arith.subf %34, %37 : vector<8x8xf32>
    %39 = math.exp %38 : vector<8x8xf32>
    %cst_18 = arith.constant dense<0.000000e+00> : vector<8xf32>
    %40 = vector.multi_reduction <add>, %39, %cst_18 [1] : vector<8x8xf32> to vector<8xf32>
    %41 = vector.shape_cast %40 : vector<8xf32> to vector<8x1xf32>
    %42 = tpu.reciprocal %41 {approx = true} : vector<8x1xf32> -> vector<8x1xf32>
    %43 = vector.broadcast %42 : vector<8x1xf32> to vector<8x8xf32>
    %44 = arith.mulf %39, %43 : vector<8x8xf32>
    %cst_19 = arith.constant dense<0.000000e+00> : vector<8x8xf32>
    %45 = tpu.matmul %44, %31, %cst_19 {dimension_numbers = #tpu.dot_dimension_numbers<[1], [0], [0], [1], [0, 0, 1, 1], [], []>} : vector<8x8xf32>, vector<8x8xf32>, vector<8x8xf32> -> vector<8x8xf32>
    %46 = vector.extract_strided_slice %7 {offsets = [8, 0], sizes = [8, 32], strides = [1, 1]} : vector<32x32xf32> to vector<8x32xf32>
    %cst_20 = arith.constant dense<0.000000e+00> : vector<8x32xf32>
    %47 = tpu.matmul %45, %46, %cst_20 {dimension_numbers = #tpu.dot_dimension_numbers<[1], [0], [0], [1], [0, 0, 1, 1], [], []>} : vector<8x8xf32>, vector<8x32xf32>, vector<8x32xf32> -> vector<8x32xf32>
    %48 = arith.addf %28, %47 : vector<8x32xf32>
    %49 = vector.extract_strided_slice %6 {offsets = [0, 16], sizes = [8, 8], strides = [1, 1]} : vector<8x96xf32> to vector<8x8xf32>
    %50 = vector.extract_strided_slice %6 {offsets = [0, 48], sizes = [8, 8], strides = [1, 1]} : vector<8x96xf32> to vector<8x8xf32>
    %51 = vector.extract_strided_slice %6 {offsets = [0, 80], sizes = [8, 8], strides = [1, 1]} : vector<8x96xf32> to vector<8x8xf32>
    %cst_21 = arith.constant dense<0.000000e+00> : vector<8x8xf32>
    %52 = tpu.matmul %49, %50, %cst_21 {dimension_numbers = #tpu.dot_dimension_numbers<[1], [1], [0], [0], [0, 0, 1, 0], [], []>} : vector<8x8xf32>, vector<8x8xf32>, vector<8x8xf32> -> vector<8x8xf32>
    %cst_22 = arith.constant 0.353553385 : f32
    %53 = vector.broadcast %cst_22 : f32 to vector<8x8xf32>
    %54 = arith.mulf %52, %53 : vector<8x8xf32>
    %cst_23 = arith.constant dense<0xFF800000> : vector<8xf32>
    %55 = vector.multi_reduction <maximumf>, %54, %cst_23 [1] : vector<8x8xf32> to vector<8xf32>
    %56 = vector.shape_cast %55 : vector<8xf32> to vector<8x1xf32>
    %57 = vector.broadcast %56 : vector<8x1xf32> to vector<8x8xf32>
    %58 = arith.subf %54, %57 : vector<8x8xf32>
    %59 = math.exp %58 : vector<8x8xf32>
    %cst_24 = arith.constant dense<0.000000e+00> : vector<8xf32>
    %60 = vector.multi_reduction <add>, %59, %cst_24 [1] : vector<8x8xf32> to vector<8xf32>
    %61 = vector.shape_cast %60 : vector<8xf32> to vector<8x1xf32>
    %62 = tpu.reciprocal %61 {approx = true} : vector<8x1xf32> -> vector<8x1xf32>
    %63 = vector.broadcast %62 : vector<8x1xf32> to vector<8x8xf32>
    %64 = arith.mulf %59, %63 : vector<8x8xf32>
    %cst_25 = arith.constant dense<0.000000e+00> : vector<8x8xf32>
    %65 = tpu.matmul %64, %51, %cst_25 {dimension_numbers = #tpu.dot_dimension_numbers<[1], [0], [0], [1], [0, 0, 1, 1], [], []>} : vector<8x8xf32>, vector<8x8xf32>, vector<8x8xf32> -> vector<8x8xf32>
    %66 = vector.extract_strided_slice %7 {offsets = [16, 0], sizes = [8, 32], strides = [1, 1]} : vector<32x32xf32> to vector<8x32xf32>
    %cst_26 = arith.constant dense<0.000000e+00> : vector<8x32xf32>
    %67 = tpu.matmul %65, %66, %cst_26 {dimension_numbers = #tpu.dot_dimension_numbers<[1], [0], [0], [1], [0, 0, 1, 1], [], []>} : vector<8x8xf32>, vector<8x32xf32>, vector<8x32xf32> -> vector<8x32xf32>
    %68 = arith.addf %48, %67 : vector<8x32xf32>
    %69 = vector.extract_strided_slice %6 {offsets = [0, 24], sizes = [8, 8], strides = [1, 1]} : vector<8x96xf32> to vector<8x8xf32>
    %70 = vector.extract_strided_slice %6 {offsets = [0, 56], sizes = [8, 8], strides = [1, 1]} : vector<8x96xf32> to vector<8x8xf32>
    %71 = vector.extract_strided_slice %6 {offsets = [0, 88], sizes = [8, 8], strides = [1, 1]} : vector<8x96xf32> to vector<8x8xf32>
    %cst_27 = arith.constant dense<0.000000e+00> : vector<8x8xf32>
    %72 = tpu.matmul %69, %70, %cst_27 {dimension_numbers = #tpu.dot_dimension_numbers<[1], [1], [0], [0], [0, 0, 1, 0], [], []>} : vector<8x8xf32>, vector<8x8xf32>, vector<8x8xf32> -> vector<8x8xf32>
    %cst_28 = arith.constant 0.353553385 : f32
    %73 = vector.broadcast %cst_28 : f32 to vector<8x8xf32>
    %74 = arith.mulf %72, %73 : vector<8x8xf32>
    %cst_29 = arith.constant dense<0xFF800000> : vector<8xf32>
    %75 = vector.multi_reduction <maximumf>, %74, %cst_29 [1] : vector<8x8xf32> to vector<8xf32>
    %76 = vector.shape_cast %75 : vector<8xf32> to vector<8x1xf32>
    %77 = vector.broadcast %76 : vector<8x1xf32> to vector<8x8xf32>
    %78 = arith.subf %74, %77 : vector<8x8xf32>
    %79 = math.exp %78 : vector<8x8xf32>
    %cst_30 = arith.constant dense<0.000000e+00> : vector<8xf32>
    %80 = vector.multi_reduction <add>, %79, %cst_30 [1] : vector<8x8xf32> to vector<8xf32>
    %81 = vector.shape_cast %80 : vector<8xf32> to vector<8x1xf32>
    %82 = tpu.reciprocal %81 {approx = true} : vector<8x1xf32> -> vector<8x1xf32>
    %83 = vector.broadcast %82 : vector<8x1xf32> to vector<8x8xf32>
    %84 = arith.mulf %79, %83 : vector<8x8xf32>
    %cst_31 = arith.constant dense<0.000000e+00> : vector<8x8xf32>
    %85 = tpu.matmul %84, %71, %cst_31 {dimension_numbers = #tpu.dot_dimension_numbers<[1], [0], [0], [1], [0, 0, 1, 1], [], []>} : vector<8x8xf32>, vector<8x8xf32>, vector<8x8xf32> -> vector<8x8xf32>
    %86 = vector.extract_strided_slice %7 {offsets = [24, 0], sizes = [8, 32], strides = [1, 1]} : vector<32x32xf32> to vector<8x32xf32>
    %cst_32 = arith.constant dense<0.000000e+00> : vector<8x32xf32>
    %87 = tpu.matmul %85, %86, %cst_32 {dimension_numbers = #tpu.dot_dimension_numbers<[1], [0], [0], [1], [0, 0, 1, 1], [], []>} : vector<8x8xf32>, vector<8x32xf32>, vector<8x32xf32> -> vector<8x32xf32>
    %88 = arith.addf %68, %87 : vector<8x32xf32>
    %c0_33 = arith.constant 0 : index
    %c0_34 = arith.constant 0 : index
    %89 = vector.load %arg5[%c0_33, %c0_34] : memref<1x32xf32, #tpu.memory_space<vmem>>, vector<1x32xf32>
    %90 = vector.broadcast %89 : vector<1x32xf32> to vector<8x32xf32>
    %91 = arith.addf %88, %90 : vector<8x32xf32>
    %92 = arith.addf %91, %1 : vector<8x32xf32>
    %cst_35 = arith.constant dense<0.000000e+00> : vector<8xf32>
    %93 = vector.multi_reduction <add>, %92, %cst_35 [1] : vector<8x32xf32> to vector<8xf32>
    %94 = vector.shape_cast %93 : vector<8xf32> to vector<8x1xf32>
    %cst_36 = arith.constant 3.200000e+01 : f32
    %95 = vector.broadcast %cst_36 : f32 to vector<8x1xf32>
    %96 = arith.divf %94, %95 : vector<8x1xf32>
    %97 = vector.broadcast %96 : vector<8x1xf32> to vector<8x32xf32>
    %98 = arith.subf %92, %97 : vector<8x32xf32>
    %99 = arith.mulf %98, %98 : vector<8x32xf32>
    %cst_37 = arith.constant dense<0.000000e+00> : vector<8xf32>
    %100 = vector.multi_reduction <add>, %99, %cst_37 [1] : vector<8x32xf32> to vector<8xf32>
    %101 = vector.shape_cast %100 : vector<8xf32> to vector<8x1xf32>
    %cst_38 = arith.constant 3.200000e+01 : f32
    %102 = vector.broadcast %cst_38 : f32 to vector<8x1xf32>
    %103 = arith.divf %101, %102 : vector<8x1xf32>
    %cst_39 = arith.constant 9.99999974E-6 : f32
    %104 = vector.broadcast %cst_39 : f32 to vector<8x1xf32>
    %105 = arith.addf %103, %104 : vector<8x1xf32>
    %106 = math.rsqrt %105 : vector<8x1xf32>
    %107 = vector.broadcast %106 : vector<8x1xf32> to vector<8x32xf32>
    %108 = arith.mulf %98, %107 : vector<8x32xf32>
    %c0_40 = arith.constant 0 : index
    %c0_41 = arith.constant 0 : index
    %109 = vector.load %arg6[%c0_40, %c0_41] : memref<1x32xf32, #tpu.memory_space<vmem>>, vector<1x32xf32>
    %110 = vector.broadcast %109 : vector<1x32xf32> to vector<8x32xf32>
    %111 = arith.mulf %108, %110 : vector<8x32xf32>
    %c0_42 = arith.constant 0 : index
    %c0_43 = arith.constant 0 : index
    %112 = vector.load %arg7[%c0_42, %c0_43] : memref<1x32xf32, #tpu.memory_space<vmem>>, vector<1x32xf32>
    %113 = vector.broadcast %112 : vector<1x32xf32> to vector<8x32xf32>
    %114 = arith.addf %111, %113 : vector<8x32xf32>
    %c0_44 = arith.constant 0 : index
    %c0_45 = arith.constant 0 : index
    %c0_46 = arith.constant 0 : index
    %115 = vector.load %arg8[%c0_44, %c0_45, %c0_46] : memref<1x8x32xf32, #tpu.memory_space<vmem>>, vector<1x8x32xf32>
    %116 = vector.shape_cast %115 : vector<1x8x32xf32> to vector<8x32xf32>
    %117 = vector.shape_cast %114 : vector<8x32xf32> to vector<1x8x32xf32>
    tpu.vector_store %arg8[%c0_44, %c0_45, %c0_46], %117 {strides = array<i32>} : memref<1x8x32xf32, #tpu.memory_space<vmem>>, vector<1x8x32xf32>,
    return
  }
  func.func @transform_0(%arg0: i32) -> (i32, i32, i32) {
    %c0_i32 = arith.constant 0 : i32
    %c0_i32_0 = arith.constant 0 : i32
    %c0_i32_1 = arith.constant 0 : i32
    return %arg0, %c0_i32, %c0_i32_0 : i32, i32, i32
  }
  func.func @transform_1(%arg0: i32) -> (i32, i32) {
    %c0_i32 = arith.constant 0 : i32
    %c0_i32_0 = arith.constant 0 : i32
    %c0_i32_1 = arith.constant 0 : i32
    return %c0_i32, %c0_i32_0 : i32, i32
  }
  func.func @transform_2(%arg0: i32) -> (i32, i32) {
    %c0_i32 = arith.constant 0 : i32
    %c0_i32_0 = arith.constant 0 : i32
    %c0_i32_1 = arith.constant 0 : i32
    return %c0_i32, %c0_i32_0 : i32, i32
  }
  func.func @transform_3(%arg0: i32) -> (i32, i32) {
    %c0_i32 = arith.constant 0 : i32
    %c0_i32_0 = arith.constant 0 : i32
    %c0_i32_1 = arith.constant 0 : i32
    return %c0_i32, %c0_i32_0 : i32, i32
  }
  func.func @transform_4(%arg0: i32) -> (i32, i32) {
    %c0_i32 = arith.constant 0 : i32
    %c0_i32_0 = arith.constant 0 : i32
    %c0_i32_1 = arith.constant 0 : i32
    return %c0_i32, %c0_i32_0 : i32, i32
  }
  func.func @transform_5(%arg0: i32) -> (i32, i32) {
    %c0_i32 = arith.constant 0 : i32
    %c0_i32_0 = arith.constant 0 : i32
    %c0_i32_1 = arith.constant 0 : i32
    return %c0_i32, %c0_i32_0 : i32, i32
  }
  func.func @transform_6(%arg0: i32) -> (i32, i32) {
    %c0_i32 = arith.constant 0 : i32
    %c0_i32_0 = arith.constant 0 : i32
    %c0_i32_1 = arith.constant 0 : i32
    return %c0_i32, %c0_i32_0 : i32, i32
  }
  func.func @transform_7(%arg0: i32) -> (i32, i32, i32) {
    %c0_i32 = arith.constant 0 : i32
    %c0_i32_0 = arith.constant 0 : i32
    %c0_i32_1 = arith.constant 0 : i32
    return %arg0, %c0_i32, %c0_i32_0 : i32, i32, i32
  }
}

module attributes {stable_mosaic.version = 11 : i64} {
  func.func @_ffn_fused_kernel(%arg0: i32, %arg1: memref<48x32xf32, #tpu.memory_space<vmem>>, %arg2: memref<32x64xf32, #tpu.memory_space<vmem>>, %arg3: memref<1x64xf32, #tpu.memory_space<vmem>>, %arg4: memref<64x32xf32, #tpu.memory_space<vmem>>, %arg5: memref<1x32xf32, #tpu.memory_space<vmem>>, %arg6: memref<1x32xf32, #tpu.memory_space<vmem>>, %arg7: memref<1x32xf32, #tpu.memory_space<vmem>>, %arg8: memref<48x32xf32, #tpu.memory_space<vmem>>) attributes {dimension_semantics = [#tpu.dimension_semantics<parallel>], iteration_bounds = array<i64: 1>, scalar_prefetch = 0 : i64, scratch_operands = 0 : i64, tpu.core_type = #tpu.core_type<tc>, window_params = [{transform_indices = @transform_0, window_bounds = array<i64: 48, 32>}, {pipeline_mode = #tpu.pipeline_mode<synchronous>, transform_indices = @transform_1, window_bounds = array<i64: 32, 64>}, {pipeline_mode = #tpu.pipeline_mode<synchronous>, transform_indices = @transform_2, window_bounds = array<i64: 1, 64>}, {pipeline_mode = #tpu.pipeline_mode<synchronous>, transform_indices = @transform_3, window_bounds = array<i64: 64, 32>}, {pipeline_mode = #tpu.pipeline_mode<synchronous>, transform_indices = @transform_4, window_bounds = array<i64: 1, 32>}, {pipeline_mode = #tpu.pipeline_mode<synchronous>, transform_indices = @transform_5, window_bounds = array<i64: 1, 32>}, {pipeline_mode = #tpu.pipeline_mode<synchronous>, transform_indices = @transform_6, window_bounds = array<i64: 1, 32>}, {transform_indices = @transform_7, window_bounds = array<i64: 48, 32>}]} {
    %c0 = arith.constant 0 : index
    %c0_0 = arith.constant 0 : index
    %0 = vector.load %arg1[%c0, %c0_0] : memref<48x32xf32, #tpu.memory_space<vmem>>, vector<48x32xf32>
    %c0_1 = arith.constant 0 : index
    %c0_2 = arith.constant 0 : index
    %1 = vector.load %arg2[%c0_1, %c0_2] : memref<32x64xf32, #tpu.memory_space<vmem>>, vector<32x64xf32>
    %cst = arith.constant dense<0.000000e+00> : vector<48x64xf32>
    %2 = tpu.matmul %0, %1, %cst {dimension_numbers = #tpu.dot_dimension_numbers<[1], [0], [0], [1], [0, 0, 1, 1], [], []>} : vector<48x32xf32>, vector<32x64xf32>, vector<48x64xf32> -> vector<48x64xf32>
    %c0_3 = arith.constant 0 : index
    %c0_4 = arith.constant 0 : index
    %3 = vector.load %arg3[%c0_3, %c0_4] : memref<1x64xf32, #tpu.memory_space<vmem>>, vector<1x64xf32>
    %4 = vector.broadcast %3 : vector<1x64xf32> to vector<48x64xf32>
    %5 = arith.addf %2, %4 : vector<48x64xf32>
    %cst_5 = arith.constant 0.000000e+00 : f32
    %6 = vector.broadcast %cst_5 : f32 to vector<48x64xf32>
    %7 = arith.maximumf %5, %6 : vector<48x64xf32>
    %c0_6 = arith.constant 0 : index
    %c0_7 = arith.constant 0 : index
    %8 = vector.load %arg4[%c0_6, %c0_7] : memref<64x32xf32, #tpu.memory_space<vmem>>, vector<64x32xf32>
    %cst_8 = arith.constant dense<0.000000e+00> : vector<48x32xf32>
    %9 = tpu.matmul %7, %8, %cst_8 {dimension_numbers = #tpu.dot_dimension_numbers<[1], [0], [0], [1], [0, 0, 1, 1], [], []>} : vector<48x64xf32>, vector<64x32xf32>, vector<48x32xf32> -> vector<48x32xf32>
    %c0_9 = arith.constant 0 : index
    %c0_10 = arith.constant 0 : index
    %10 = vector.load %arg5[%c0_9, %c0_10] : memref<1x32xf32, #tpu.memory_space<vmem>>, vector<1x32xf32>
    %11 = vector.broadcast %10 : vector<1x32xf32> to vector<48x32xf32>
    %12 = arith.addf %9, %11 : vector<48x32xf32>
    %13 = arith.addf %12, %0 : vector<48x32xf32>
    %cst_11 = arith.constant dense<0.000000e+00> : vector<48xf32>
    %14 = vector.multi_reduction <add>, %13, %cst_11 [1] : vector<48x32xf32> to vector<48xf32>
    %15 = vector.shape_cast %14 : vector<48xf32> to vector<48x1xf32>
    %cst_12 = arith.constant 3.200000e+01 : f32
    %16 = vector.broadcast %cst_12 : f32 to vector<48x1xf32>
    %17 = arith.divf %15, %16 : vector<48x1xf32>
    %18 = vector.broadcast %17 : vector<48x1xf32> to vector<48x32xf32>
    %19 = arith.subf %13, %18 : vector<48x32xf32>
    %20 = arith.mulf %19, %19 : vector<48x32xf32>
    %cst_13 = arith.constant dense<0.000000e+00> : vector<48xf32>
    %21 = vector.multi_reduction <add>, %20, %cst_13 [1] : vector<48x32xf32> to vector<48xf32>
    %22 = vector.shape_cast %21 : vector<48xf32> to vector<48x1xf32>
    %cst_14 = arith.constant 3.200000e+01 : f32
    %23 = vector.broadcast %cst_14 : f32 to vector<48x1xf32>
    %24 = arith.divf %22, %23 : vector<48x1xf32>
    %cst_15 = arith.constant 9.99999997E-7 : f32
    %25 = vector.broadcast %cst_15 : f32 to vector<48x1xf32>
    %26 = arith.addf %24, %25 : vector<48x1xf32>
    %27 = math.rsqrt %26 : vector<48x1xf32>
    %28 = vector.broadcast %27 : vector<48x1xf32> to vector<48x32xf32>
    %29 = arith.mulf %19, %28 : vector<48x32xf32>
    %c0_16 = arith.constant 0 : index
    %c0_17 = arith.constant 0 : index
    %30 = vector.load %arg6[%c0_16, %c0_17] : memref<1x32xf32, #tpu.memory_space<vmem>>, vector<1x32xf32>
    %31 = vector.broadcast %30 : vector<1x32xf32> to vector<48x32xf32>
    %32 = arith.mulf %29, %31 : vector<48x32xf32>
    %c0_18 = arith.constant 0 : index
    %c0_19 = arith.constant 0 : index
    %33 = vector.load %arg7[%c0_18, %c0_19] : memref<1x32xf32, #tpu.memory_space<vmem>>, vector<1x32xf32>
    %34 = vector.broadcast %33 : vector<1x32xf32> to vector<48x32xf32>
    %35 = arith.addf %32, %34 : vector<48x32xf32>
    %c0_20 = arith.constant 0 : index
    %c0_21 = arith.constant 0 : index
    %36 = vector.load %arg8[%c0_20, %c0_21] : memref<48x32xf32, #tpu.memory_space<vmem>>, vector<48x32xf32>
    tpu.vector_store %arg8[%c0_20, %c0_21], %35 {strides = array<i32>} : memref<48x32xf32, #tpu.memory_space<vmem>>, vector<48x32xf32>,
    return
  }
  func.func @transform_0(%arg0: i32) -> (i32, i32) {
    %c0_i32 = arith.constant 0 : i32
    %c0_i32_0 = arith.constant 0 : i32
    return %arg0, %c0_i32 : i32, i32
  }
  func.func @transform_1(%arg0: i32) -> (i32, i32) {
    %c0_i32 = arith.constant 0 : i32
    %c0_i32_0 = arith.constant 0 : i32
    %c0_i32_1 = arith.constant 0 : i32
    return %c0_i32, %c0_i32_0 : i32, i32
  }
  func.func @transform_2(%arg0: i32) -> (i32, i32) {
    %c0_i32 = arith.constant 0 : i32
    %c0_i32_0 = arith.constant 0 : i32
    %c0_i32_1 = arith.constant 0 : i32
    return %c0_i32, %c0_i32_0 : i32, i32
  }
  func.func @transform_3(%arg0: i32) -> (i32, i32) {
    %c0_i32 = arith.constant 0 : i32
    %c0_i32_0 = arith.constant 0 : i32
    %c0_i32_1 = arith.constant 0 : i32
    return %c0_i32, %c0_i32_0 : i32, i32
  }
  func.func @transform_4(%arg0: i32) -> (i32, i32) {
    %c0_i32 = arith.constant 0 : i32
    %c0_i32_0 = arith.constant 0 : i32
    %c0_i32_1 = arith.constant 0 : i32
    return %c0_i32, %c0_i32_0 : i32, i32
  }
  func.func @transform_5(%arg0: i32) -> (i32, i32) {
    %c0_i32 = arith.constant 0 : i32
    %c0_i32_0 = arith.constant 0 : i32
    %c0_i32_1 = arith.constant 0 : i32
    return %c0_i32, %c0_i32_0 : i32, i32
  }
  func.func @transform_6(%arg0: i32) -> (i32, i32) {
    %c0_i32 = arith.constant 0 : i32
    %c0_i32_0 = arith.constant 0 : i32
    %c0_i32_1 = arith.constant 0 : i32
    return %c0_i32, %c0_i32_0 : i32, i32
  }
  func.func @transform_7(%arg0: i32) -> (i32, i32) {
    %c0_i32 = arith.constant 0 : i32
    %c0_i32_0 = arith.constant 0 : i32
    return %arg0, %c0_i32 : i32, i32
  }
}

</mosaic_0001>

<llo_original>
// kernel: stmha_block.7
$region0: #{stmha_block.7}
  #allocation0 [shape = 'u32[]', space=smem, size = 0x4, offset = 0x4, fixed_abs, tag = 'smem constant byte address 0x4 - core index']
  #allocation1 [shape = 'u32[72,128]{1,0:T(1,128)}', space=vmem, size = 0x9000, scoped, tag = 'internal scratch']
  %s0 = inlined_call_operand.vmem [shape: f32[6,8,6], index: 0, kind: input, shape index: {}]
  %s1 = inlined_call_operand.hbm [shape: f32[6,32], index: 1, kind: input, shape index: {}]
  %s2 = inlined_call_operand.vmem [shape: f32[8,32], index: 2, kind: input, shape index: {}]
  %s3 = inlined_call_operand.vmem [shape: f32[1,32], index: 3, kind: input, shape index: {}]
  %s4 = inlined_call_operand.vmem [shape: f32[1,32], index: 4, kind: input, shape index: {}]
  %s5 = inlined_call_operand.vmem [shape: f32[6,8,32], index: 5, kind: output, shape index: {}]
  %s6 = sld [smem:[#allocation0]]
  $region57: #{stmha_block.7} parent=0
    _
  %s8 = ssub.s32 1, %s6
  %s9 = scalar_select 0, %s8, %s6
  $region1: #{stmha_block.7} parent=0
    #allocation2 [shape = 'u8[4096]{0}', space=vmem, size = 0x1000, scoped, tag = 'input window, operand 1, single buffered']
    #allocation3 [shape = 's32[2]{0}', space=sflag, size = 0x8, scoped, tag = 'scoped memory for stmha_block.7']
    %10 = vsyncpa [#allocation3], 0
    loop: start=0, step=1, limit=8
    $region2: #{stmha_block.7} parent=1 // loop_pre_header
      _
    $region3: #{stmha_block.7} parent=1 // loop_header
      %s12 = sphi 0, %s16
      %p13 = scmp.ge.s32.totalorder %s12, 8
      %s22 = sphi 0, %s24
      %s25 = sphi 0, %s22
      %s26 = sphi 0, %s25
      %s42 = sphi 0, %s26
      %s46 = sphi 0, %s46
      %s48 = sphi 0, %s46
      %s49 = sphi 0, %s48
      %s63 = sphi 0, %s49
      %s67 = sphi 0, %s67
      %s69 = sphi 0, %s67
      %s70 = sphi 0, %s69
      %s84 = sphi 0, %s70
      %s88 = sphi 0, %s88
      %s90 = sphi 0, %s88
      %s91 = sphi 0, %s90
      %s105 = sphi 0, %s91
      %s109 = sphi 0, %s109
      %s111 = sphi 0, %s109
      %s112 = sphi 0, %s111
      %s126 = sphi 0, %s112
      %s132 = sphi 0, %s134
      %s135 = sphi 0, %s132
      %s136 = sphi 0, %s135
      %s152 = sphi 0, %s136
    $region4: #{stmha_block.7} parent=1 // loop_header_branch
      %15 = sbr.rel (%p13) target = $region8
    $region5: #{stmha_block.7} parent=1 // loop_body
      %s17 = ssub.s32 %s12, 1
      %s18 = ssub.s32 %s12, 2
      %s19 = sadd.s32 %s12, 1
      %s20 = ssub.s32 %s12, %s19
      %p21 = scmp.eq.s32.totalorder %s20, 0
      %s23 = sadd.s32 %s22, 1
      %s24 = scalar_select %p21, %s22, %s23
      %p27 = pneg %p21
      %p28 = scmp.eq.s32.totalorder %s12, 5
      %p29 = por %p27, %p28
      %p30 = scmp.ne.s32.totalorder %s22, %s25
      %p31 = scmp.eq.s32.totalorder %s12, 0
      %p32 = por %p30, %p31
      %p33 = scmp.ne.s32.totalorder %s22, %s25
      %p34 = scmp.eq.s32.totalorder %s17, 5
      %p35 = por %p33, %p34
      %p36 = scmp.ne.s32.totalorder %s25, %s26
      %p37 = scmp.eq.s32.totalorder %s17, 0
      %p38 = por %p36, %p37
      %p39 = scmp.ne.s32.totalorder %s25, %s26
      %p40 = scmp.eq.s32.totalorder %s18, 5
      %p41 = por %p39, %p40
      %p43 = scmp.ne.s32.totalorder %s26, %s42
      %p44 = scmp.eq.s32.totalorder %s18, 0
      %p45 = por %p43, %p44
      %s47 = sadd.s32 %s46, 1
      %p50 = scmp.eq.s32.totalorder %s12, 5
      %p51 = scmp.ne.s32.totalorder %s46, %s48
      %p52 = scmp.eq.s32.totalorder %s12, 0
      %p53 = por %p51, %p52
      %p54 = scmp.ne.s32.totalorder %s46, %s48
      %p55 = scmp.eq.s32.totalorder %s17, 5
      %p56 = por %p54, %p55
      %p57 = scmp.ne.s32.totalorder %s48, %s49
      %p58 = scmp.eq.s32.totalorder %s17, 0
      %p59 = por %p57, %p58
      %p60 = scmp.ne.s32.totalorder %s48, %s49
      %p61 = scmp.eq.s32.totalorder %s18, 5
      %p62 = por %p60, %p61
      %p64 = scmp.ne.s32.totalorder %s49, %s63
      %p65 = scmp.eq.s32.totalorder %s18, 0
      %p66 = por %p64, %p65
      %s68 = sadd.s32 %s67, 1
      %p71 = scmp.eq.s32.totalorder %s12, 5
      %p72 = scmp.ne.s32.totalorder %s67, %s69
      %p73 = scmp.eq.s32.totalorder %s12, 0
      %p74 = por %p72, %p73
      %p75 = scmp.ne.s32.totalorder %s67, %s69
      %p76 = scmp.eq.s32.totalorder %s17, 5
      %p77 = por %p75, %p76
      %p78 = scmp.ne.s32.totalorder %s69, %s70
      %p79 = scmp.eq.s32.totalorder %s17, 0
      %p80 = por %p78, %p79
      %p81 = scmp.ne.s32.totalorder %s69, %s70
      %p82 = scmp.eq.s32.totalorder %s18, 5
      %p83 = por %p81, %p82
      %p85 = scmp.ne.s32.totalorder %s70, %s84
      %p86 = scmp.eq.s32.totalorder %s18, 0
      %p87 = por %p85, %p86
      %s89 = sadd.s32 %s88, 1
      %p92 = scmp.eq.s32.totalorder %s12, 5
      %p93 = scmp.ne.s32.totalorder %s88, %s90
      %p94 = scmp.eq.s32.totalorder %s12, 0
      %p95 = por %p93, %p94
      %p96 = scmp.ne.s32.totalorder %s88, %s90
      %p97 = scmp.eq.s32.totalorder %s17, 5
      %p98 = por %p96, %p97
      %p99 = scmp.ne.s32.totalorder %s90, %s91
      %p100 = scmp.eq.s32.totalorder %s17, 0
      %p101 = por %p99, %p100
      %p102 = scmp.ne.s32.totalorder %s90, %s91
      %p103 = scmp.eq.s32.totalorder %s18, 5
      %p104 = por %p102, %p103
      %p106 = scmp.ne.s32.totalorder %s91, %s105
      %p107 = scmp.eq.s32.totalorder %s18, 0
      %p108 = por %p106, %p107
      %s110 = sadd.s32 %s109, 1
      %p113 = scmp.eq.s32.totalorder %s12, 5
      %p114 = scmp.ne.s32.totalorder %s109, %s111
      %p115 = scmp.eq.s32.totalorder %s12, 0
      %p116 = por %p114, %p115
      %p117 = scmp.ne.s32.totalorder %s109, %s111
      %p118 = scmp.eq.s32.totalorder %s17, 5
      %p119 = por %p117, %p118
      %p120 = scmp.ne.s32.totalorder %s111, %s112
      %p121 = scmp.eq.s32.totalorder %s17, 0
      %p122 = por %p120, %p121
      %p123 = scmp.ne.s32.totalorder %s111, %s112
      %p124 = scmp.eq.s32.totalorder %s18, 5
      %p125 = por %p123, %p124
      %p127 = scmp.ne.s32.totalorder %s112, %s126
      %p128 = scmp.eq.s32.totalorder %s18, 0
      %p129 = por %p127, %p128
      %s130 = ssub.s32 %s12, %s19
      %p131 = scmp.eq.s32.totalorder %s130, 0
      %s133 = sadd.s32 %s132, 1
      %s134 = scalar_select %p131, %s132, %s133
      %p137 = pneg %p131
      %p138 = scmp.eq.s32.totalorder %s12, 5
      %p139 = por %p137, %p138
      %p140 = scmp.ne.s32.totalorder %s132, %s135
      %p141 = scmp.eq.s32.totalorder %s12, 0
      %p142 = por %p140, %p141
      %p143 = scmp.ne.s32.totalorder %s132, %s135
      %p144 = scmp.eq.s32.totalorder %s17, 5
      %p145 = por %p143, %p144
      %p146 = scmp.ne.s32.totalorder %s135, %s136
      %p147 = scmp.eq.s32.totalorder %s17, 0
      %p148 = por %p146, %p147
      %p149 = scmp.ne.s32.totalorder %s135, %s136
      %p150 = scmp.eq.s32.totalorder %s18, 5
      %p151 = por %p149, %p150
      %p153 = scmp.ne.s32.totalorder %s136, %s152
      %p154 = scmp.eq.s32.totalorder %s18, 0
      %p155 = por %p153, %p154
      %p156 = scmp.le.s32.totalorder 1, %s12
      %p157 = scmp.lt.s32.totalorder %s12, 7
      %p158 = pnand %p156, %p157
      %p159 = pneg %p158
      // Predicated region
      $region9: #{stmha_block.7} parent=5 // pred_check
        _
      $region10: #{stmha_block.7} parent=5 // pred_check_branch
        %161 = sbr.rel (%p158) target = $region12
      $region11: #{stmha_block.7} parent=5 // pred_region
        %s162 = ssub.s32 %s12, 1
        // Predicated region
        $region13: #{stmha_block.7} parent=11 // pred_check
          %p163 = pneg %p59
        $region14: #{stmha_block.7} parent=11 // pred_check_branch
          %165 = sbr.rel (%p163) target = $region16
        $region15: #{stmha_block.7} parent=11 // pred_region
          %167 = vsyncadd [#allocation3], 0
          %s169 = sshll.u32 %s1, 4
          %s170 = int_to_ptr.hbm [resolvable:$true] %s169
          %s171 = sshll.u32 [#allocation2], 4
          %s172 = int_to_ptr.vmem [resolvable:$true] %s171
          %174 = dma.hbm_to_vmem [thread:$0]  %s170, 128, %s172, [#allocation3]
        $region16: #{stmha_block.7} parent=11 // pred_fallthru
          _
        // Predicated region
        $region17: #{stmha_block.7} parent=11 // pred_check
          %p175 = pneg %p80
        $region18: #{stmha_block.7} parent=11 // pred_check_branch
          %177 = sbr.rel (%p175) target = $region20
        $region19: #{stmha_block.7} parent=11 // pred_region
          _
        $region20: #{stmha_block.7} parent=11 // pred_fallthru
          _
        // Predicated region
        $region21: #{stmha_block.7} parent=11 // pred_check
          %p178 = pneg %p101
        $region22: #{stmha_block.7} parent=11 // pred_check_branch
          %180 = sbr.rel (%p178) target = $region24
        $region23: #{stmha_block.7} parent=11 // pred_region
          _
        $region24: #{stmha_block.7} parent=11 // pred_fallthru
          _
        // Predicated region
        $region25: #{stmha_block.7} parent=11 // pred_check
          %p181 = pneg %p122
        $region26: #{stmha_block.7} parent=11 // pred_check_branch
          %183 = sbr.rel (%p181) target = $region28
        $region27: #{stmha_block.7} parent=11 // pred_region
          _
        $region28: #{stmha_block.7} parent=11 // pred_fallthru
          _
      $region12: #{stmha_block.7} parent=5 // pred_fallthru
        _
      %p184 = scmp.lt.s32.totalorder %s12, 6
      // Predicated region
      $region29: #{stmha_block.7} parent=5 // pred_check
        %p185 = pneg %p184
      $region30: #{stmha_block.7} parent=5 // pred_check_branch
        %187 = sbr.rel (%p185) target = $region32
      $region31: #{stmha_block.7} parent=5 // pred_region
        // Predicated region
        $region33: #{stmha_block.7} parent=31 // pred_check
          %p188 = pneg %p32
        $region34: #{stmha_block.7} parent=31 // pred_check_branch
          %190 = sbr.rel (%p188) target = $region36
        $region35: #{stmha_block.7} parent=31 // pred_region
          %p191 = scmp.lt.s32.totalorder %s12, 5
          %s192 = scalar_select %p191, %s12, 5
          %s193 = smul.addr %s192, 8
          %s194 = scalar_lea.vmem %s0, %s193
        $region36: #{stmha_block.7} parent=31 // pred_fallthru
          _
      $region32: #{stmha_block.7} parent=5 // pred_fallthru
        _
      %p195 = scmp.le.s32.totalorder 1, %s12
      %p196 = scmp.lt.s32.totalorder %s12, 7
      %p197 = pnand %p195, %p196
      %p198 = pneg %p197
      // Predicated region
      $region37: #{stmha_block.7} parent=5 // pred_check
        _
      $region38: #{stmha_block.7} parent=5 // pred_check_branch
        %200 = sbr.rel (%p197) target = $region40
      $region39: #{stmha_block.7} parent=5 // pred_region
        %s201 = ssub.s32 %s12, 1
        // Predicated region
        $region41: #{stmha_block.7} parent=39 // pred_check
          %p202 = pneg %p59
        $region42: #{stmha_block.7} parent=39 // pred_check_branch
          %204 = sbr.rel (%p202) target = $region44
        $region43: #{stmha_block.7} parent=39 // pred_region
          %206 = dma.done [#allocation3], 128
        $region44: #{stmha_block.7} parent=39 // pred_fallthru
          _
        %p207 = scmp.lt.s32.totalorder %s17, 5
        %s208 = scalar_select %p207, %s17, 5
        %s209 = smul.addr %s208, 8
        %s210 = scalar_lea.vmem %s0, %s209
        %p211 = pneg %p38
        %p212 = pneg %p35
        %p213 = pneg %p59
        %p214 = pneg %p56
        %p215 = pneg %p80
        %p216 = pneg %p77
        %p217 = pneg %p101
        %p218 = pneg %p98
        %p219 = pneg %p122
        %p220 = pneg %p119
        %p221 = pneg %p148
        %p222 = pneg %p145
        %p223 = scmp.lt.s32.totalorder %s17, 5
        %s224 = scalar_select %p223, %s17, 5
        %s225 = smul.addr %s224, 8
        %s226 = scalar_lea.vmem %s5, %s225
        %p227 = scmp.lt.s32.totalorder %s17, 5
        %s228 = scalar_select %p227, %s17, 5
        %s229 = smul.addr %s228, 8
        %s230 = scalar_lea.vmem %s0, %s229
        %p231 = scmp.lt.s32.totalorder %s17, 5
        %s232 = scalar_select %p231, %s17, 5
        %s233 = smul.addr %s232, 8
        %s234 = scalar_lea.vmem %s5, %s233
        %v235 = vld [vmem:[%s230] sm:$0xff]
        %v236 = vld [vmem:[#allocation2] sm:$0x3f]
        %v237 = vld [vmem:[%s2] sm:$0xff]
        %vm238 = vcmask 48128
        %v240 = vsel %vm238, %v235, 0
        %vm242 = vcmask 1045504
        %v244 = vsel %vm242, %v236, 0
        %246 = vmatpush.msra.mxu0 0.0
        %247 = vmatpush.msra.mxu0 0.0
        %248 = vmatpush.msra.mxu0 0.0
        %249 = vmatpush.msra.mxu0 0.0
        %250 = vmatpush.msra.mxu0 0.0
        %251 = vmatpush.msra.mxu0 0.0
        %252 = vmatpush.msra.mxu0 0.0
        %253 = vmatpush.msra.mxu0 0.0
        %254 = vmatpush.msra.mxu0 0.0
        %255 = vmatpush.msra.mxu0 0.0
        %256 = vmatpush.msra.mxu0 0.0
        %257 = vmatpush.msra.mxu0 0.0
        %258 = vmatpush.msra.mxu0 0.0
        %259 = vmatpush.msra.mxu0 0.0
        %260 = vmatpush.msra.mxu0 0.0
        %261 = vmatpush.msra.mxu0 %v244
        %262 = vmatmul.f32.gmra.mxu0 %v240
        %v263 = vpop.f32.mrf.mxu0
        %v264 = vadd.f32 %v237, %v263
        %265 = vdwg.mxu0
        %vm266 = vcmask 261120
        %v267 = vsel %vm266, %v264, 0.0
        %268 = vadd.xlane.f32.xlu0 %v267
        %v269 = vpop.xlane.xlu0 %268
        %v270 = vrcp.pop 32.0
        %v271 = vmul.f32 32.0, %v270
        %v272 = vsub.f32 1.0, %v271
        %v273 = vmul.f32 %v270, %v272
        %v274 = vadd.f32 %v270, %v273
        %vm275 = vweird.f32 %v270
        %v276 = vsel %vm275, %v270, %v274
        %v277 = vmul.f32 %v269, %v276
        %v278 = vsub.f32 %v264, %v277
        %v279 = vmul.f32 %v278, %v278
        %v280 = vsel %vm266, %v279, 0.0
        %281 = vadd.xlane.f32.xlu0 %v280
        %v282 = vpop.xlane.xlu0 %281
        %v283 = vmul.f32 %v282, %v276
        %v284 = vadd.f32 %v283, 1e-06
        %v285 = vrsqrt.pop %v284
        %v286 = vmul.f32 %v285, %v284
        %v287 = vmul.f32 %v286, %v285
        %v288 = vmul.f32 0.5, %v287
        %v289 = vsub.f32 1.5, %v288
        %v290 = vmul.f32 %v285, %v289
        %vm291 = vweird.f32 %v284
        %vm292 = vweird.f32 %v285
        %vm293 = vmor %vm291, %vm292
        %v294 = vsel %vm293, %v285, %v290
        %v295 = vmul.f32 %v278, %v294
        %v296 = vld [vmem:[%s3] sm:$0x1]
        %v298 = vperm.slane %v296, 0
        %v300 = vmul.f32 %v295, %v298
        %v301 = vld [vmem:[%s4] sm:$0x1]
        %v303 = vperm.slane %v301, 0
        %v305 = vadd.f32 %v300, %v303
        %306 = vst.msk [vmem:[%s234] sm:$0xff] %vm266, %v305
        %p307 = scmp.lt.s32.totalorder %s17, 5
        %s308 = scalar_select %p307, %s17, 5
        %s309 = smul.addr %s308, 8
        %s310 = scalar_lea.vmem %s5, %s309
        // Predicated region
        $region45: #{stmha_block.7} parent=39 // pred_check
          %p311 = pneg %p145
        $region46: #{stmha_block.7} parent=39 // pred_check_branch
          %313 = sbr.rel (%p311) target = $region48
        $region47: #{stmha_block.7} parent=39 // pred_region
          _
        $region48: #{stmha_block.7} parent=39 // pred_fallthru
          _
      $region40: #{stmha_block.7} parent=5 // pred_fallthru
        _
      %p314 = scmp.le.s32.totalorder 2, %s12
      // Predicated region
      $region49: #{stmha_block.7} parent=5 // pred_check
        %p315 = pneg %p314
      $region50: #{stmha_block.7} parent=5 // pred_check_branch
        %317 = sbr.rel (%p315) target = $region52
      $region51: #{stmha_block.7} parent=5 // pred_region
        %s318 = ssub.s32 %s12, 2
        // Predicated region
        $region53: #{stmha_block.7} parent=51 // pred_check
          %p319 = pneg %p151
        $region54: #{stmha_block.7} parent=51 // pred_check_branch
          %321 = sbr.rel (%p319) target = $region56
        $region55: #{stmha_block.7} parent=51 // pred_region
          %p322 = scmp.lt.s32.totalorder %s18, 5
          %s323 = scalar_select %p322, %s18, 5
          %s324 = smul.addr %s323, 8
          %s325 = scalar_lea.vmem %s5, %s324
        $region56: #{stmha_block.7} parent=51 // pred_fallthru
          _
      $region52: #{stmha_block.7} parent=5 // pred_fallthru
        _
    $region6: #{stmha_block.7} parent=1 // loop_footer
      %s16 = sadd.s32 1, %s12
    $region7: #{stmha_block.7} parent=1 // loop_footer_branch
      %11 = sbr.rel target = $region3
    $region8: #{stmha_block.7} parent=1 // loop_exit
      _
    %326 = vsyncpa [#allocation3], 1
    %s327 = scalar_lea.sflag [#allocation3], 1
    %328 = vsyncpa %s327, 1

// kernel: stmha_block.8
$region0: #{stmha_block.8}
  #allocation0 [shape = 'u32[]', space=smem, size = 0x4, offset = 0x4, fixed_abs, tag = 'smem constant byte address 0x4 - core index']
  #allocation1 [shape = 'u32[72,128]{1,0:T(1,128)}', space=vmem, size = 0x9000, scoped, tag = 'internal scratch']
  %s0 = inlined_call_operand.vmem [shape: f32[6,8,32], index: 0, kind: input, shape index: {}]
  %s1 = inlined_call_operand.vmem [shape: f32[32,96], index: 1, kind: input, shape index: {}]
  %s2 = inlined_call_operand.vmem [shape: f32[1,96], index: 2, kind: input, shape index: {}]
  %s3 = inlined_call_operand.hbm [shape: f32[32,32], index: 3, kind: input, shape index: {}]
  %s4 = inlined_call_operand.vmem [shape: f32[1,32], index: 4, kind: input, shape index: {}]
  %s5 = inlined_call_operand.vmem [shape: f32[1,32], index: 5, kind: input, shape index: {}]
  %s6 = inlined_call_operand.vmem [shape: f32[1,32], index: 6, kind: input, shape index: {}]
  %s7 = inlined_call_operand.vmem [shape: f32[6,8,32], index: 7, kind: output, shape index: {}]
  %s8 = sld [smem:[#allocation0]]
  $region65: #{stmha_block.8} parent=0
    _
  %s10 = ssub.s32 1, %s8
  %s11 = scalar_select 0, %s10, %s8
  $region1: #{stmha_block.8} parent=0
    #allocation2 [shape = 'u8[16384]{0}', space=vmem, size = 0x4000, scoped, tag = 'input window, operand 3, single buffered']
    #allocation3 [shape = 's32[2]{0}', space=sflag, size = 0x8, scoped, tag = 'scoped memory for stmha_block.8']
    %12 = vsyncpa [#allocation3], 0
    loop: start=0, step=1, limit=8
    $region2: #{stmha_block.8} parent=1 // loop_pre_header
      _
    $region3: #{stmha_block.8} parent=1 // loop_header
      %s14 = sphi 0, %s18
      %p15 = scmp.ge.s32.totalorder %s14, 8
      %s24 = sphi 0, %s26
      %s27 = sphi 0, %s24
      %s28 = sphi 0, %s27
      %s44 = sphi 0, %s28
      %s48 = sphi 0, %s48
      %s50 = sphi 0, %s48
      %s51 = sphi 0, %s50
      %s65 = sphi 0, %s51
      %s69 = sphi 0, %s69
      %s71 = sphi 0, %s69
      %s72 = sphi 0, %s71
      %s86 = sphi 0, %s72
      %s90 = sphi 0, %s90
      %s92 = sphi 0, %s90
      %s93 = sphi 0, %s92
      %s107 = sphi 0, %s93
      %s111 = sphi 0, %s111
      %s113 = sphi 0, %s111
      %s114 = sphi 0, %s113
      %s128 = sphi 0, %s114
      %s132 = sphi 0, %s132
      %s134 = sphi 0, %s132
      %s135 = sphi 0, %s134
      %s149 = sphi 0, %s135
      %s153 = sphi 0, %s153
      %s155 = sphi 0, %s153
      %s156 = sphi 0, %s155
      %s170 = sphi 0, %s156
      %s176 = sphi 0, %s178
      %s179 = sphi 0, %s176
      %s180 = sphi 0, %s179
      %s196 = sphi 0, %s180
    $region4: #{stmha_block.8} parent=1 // loop_header_branch
      %17 = sbr.rel (%p15) target = $region8
    $region5: #{stmha_block.8} parent=1 // loop_body
      %s19 = ssub.s32 %s14, 1
      %s20 = ssub.s32 %s14, 2
      %s21 = sadd.s32 %s14, 1
      %s22 = ssub.s32 %s14, %s21
      %p23 = scmp.eq.s32.totalorder %s22, 0
      %s25 = sadd.s32 %s24, 1
      %s26 = scalar_select %p23, %s24, %s25
      %p29 = pneg %p23
      %p30 = scmp.eq.s32.totalorder %s14, 5
      %p31 = por %p29, %p30
      %p32 = scmp.ne.s32.totalorder %s24, %s27
      %p33 = scmp.eq.s32.totalorder %s14, 0
      %p34 = por %p32, %p33
      %p35 = scmp.ne.s32.totalorder %s24, %s27
      %p36 = scmp.eq.s32.totalorder %s19, 5
      %p37 = por %p35, %p36
      %p38 = scmp.ne.s32.totalorder %s27, %s28
      %p39 = scmp.eq.s32.totalorder %s19, 0
      %p40 = por %p38, %p39
      %p41 = scmp.ne.s32.totalorder %s27, %s28
      %p42 = scmp.eq.s32.totalorder %s20, 5
      %p43 = por %p41, %p42
      %p45 = scmp.ne.s32.totalorder %s28, %s44
      %p46 = scmp.eq.s32.totalorder %s20, 0
      %p47 = por %p45, %p46
      %s49 = sadd.s32 %s48, 1
      %p52 = scmp.eq.s32.totalorder %s14, 5
      %p53 = scmp.ne.s32.totalorder %s48, %s50
      %p54 = scmp.eq.s32.totalorder %s14, 0
      %p55 = por %p53, %p54
      %p56 = scmp.ne.s32.totalorder %s48, %s50
      %p57 = scmp.eq.s32.totalorder %s19, 5
      %p58 = por %p56, %p57
      %p59 = scmp.ne.s32.totalorder %s50, %s51
      %p60 = scmp.eq.s32.totalorder %s19, 0
      %p61 = por %p59, %p60
      %p62 = scmp.ne.s32.totalorder %s50, %s51
      %p63 = scmp.eq.s32.totalorder %s20, 5
      %p64 = por %p62, %p63
      %p66 = scmp.ne.s32.totalorder %s51, %s65
      %p67 = scmp.eq.s32.totalorder %s20, 0
      %p68 = por %p66, %p67
      %s70 = sadd.s32 %s69, 1
      %p73 = scmp.eq.s32.totalorder %s14, 5
      %p74 = scmp.ne.s32.totalorder %s69, %s71
      %p75 = scmp.eq.s32.totalorder %s14, 0
      %p76 = por %p74, %p75
      %p77 = scmp.ne.s32.totalorder %s69, %s71
      %p78 = scmp.eq.s32.totalorder %s19, 5
      %p79 = por %p77, %p78
      %p80 = scmp.ne.s32.totalorder %s71, %s72
      %p81 = scmp.eq.s32.totalorder %s19, 0
      %p82 = por %p80, %p81
      %p83 = scmp.ne.s32.totalorder %s71, %s72
      %p84 = scmp.eq.s32.totalorder %s20, 5
      %p85 = por %p83, %p84
      %p87 = scmp.ne.s32.totalorder %s72, %s86
      %p88 = scmp.eq.s32.totalorder %s20, 0
      %p89 = por %p87, %p88
      %s91 = sadd.s32 %s90, 1
      %p94 = scmp.eq.s32.totalorder %s14, 5
      %p95 = scmp.ne.s32.totalorder %s90, %s92
      %p96 = scmp.eq.s32.totalorder %s14, 0
      %p97 = por %p95, %p96
      %p98 = scmp.ne.s32.totalorder %s90, %s92
      %p99 = scmp.eq.s32.totalorder %s19, 5
      %p100 = por %p98, %p99
      %p101 = scmp.ne.s32.totalorder %s92, %s93
      %p102 = scmp.eq.s32.totalorder %s19, 0
      %p103 = por %p101, %p102
      %p104 = scmp.ne.s32.totalorder %s92, %s93
      %p105 = scmp.eq.s32.totalorder %s20, 5
      %p106 = por %p104, %p105
      %p108 = scmp.ne.s32.totalorder %s93, %s107
      %p109 = scmp.eq.s32.totalorder %s20, 0
      %p110 = por %p108, %p109
      %s112 = sadd.s32 %s111, 1
      %p115 = scmp.eq.s32.totalorder %s14, 5
      %p116 = scmp.ne.s32.totalorder %s111, %s113
      %p117 = scmp.eq.s32.totalorder %s14, 0
      %p118 = por %p116, %p117
      %p119 = scmp.ne.s32.totalorder %s111, %s113
      %p120 = scmp.eq.s32.totalorder %s19, 5
      %p121 = por %p119, %p120
      %p122 = scmp.ne.s32.totalorder %s113, %s114
      %p123 = scmp.eq.s32.totalorder %s19, 0
      %p124 = por %p122, %p123
      %p125 = scmp.ne.s32.totalorder %s113, %s114
      %p126 = scmp.eq.s32.totalorder %s20, 5
      %p127 = por %p125, %p126
      %p129 = scmp.ne.s32.totalorder %s114, %s128
      %p130 = scmp.eq.s32.totalorder %s20, 0
      %p131 = por %p129, %p130
      %s133 = sadd.s32 %s132, 1
      %p136 = scmp.eq.s32.totalorder %s14, 5
      %p137 = scmp.ne.s32.totalorder %s132, %s134
      %p138 = scmp.eq.s32.totalorder %s14, 0
      %p139 = por %p137, %p138
      %p140 = scmp.ne.s32.totalorder %s132, %s134
      %p141 = scmp.eq.s32.totalorder %s19, 5
      %p142 = por %p140, %p141
      %p143 = scmp.ne.s32.totalorder %s134, %s135
      %p144 = scmp.eq.s32.totalorder %s19, 0
      %p145 = por %p143, %p144
      %p146 = scmp.ne.s32.totalorder %s134, %s135
      %p147 = scmp.eq.s32.totalorder %s20, 5
      %p148 = por %p146, %p147
      %p150 = scmp.ne.s32.totalorder %s135, %s149
      %p151 = scmp.eq.s32.totalorder %s20, 0
      %p152 = por %p150, %p151
      %s154 = sadd.s32 %s153, 1
      %p157 = scmp.eq.s32.totalorder %s14, 5
      %p158 = scmp.ne.s32.totalorder %s153, %s155
      %p159 = scmp.eq.s32.totalorder %s14, 0
      %p160 = por %p158, %p159
      %p161 = scmp.ne.s32.totalorder %s153, %s155
      %p162 = scmp.eq.s32.totalorder %s19, 5
      %p163 = por %p161, %p162
      %p164 = scmp.ne.s32.totalorder %s155, %s156
      %p165 = scmp.eq.s32.totalorder %s19, 0
      %p166 = por %p164, %p165
      %p167 = scmp.ne.s32.totalorder %s155, %s156
      %p168 = scmp.eq.s32.totalorder %s20, 5
      %p169 = por %p167, %p168
      %p171 = scmp.ne.s32.totalorder %s156, %s170
      %p172 = scmp.eq.s32.totalorder %s20, 0
      %p173 = por %p171, %p172
      %s174 = ssub.s32 %s14, %s21
      %p175 = scmp.eq.s32.totalorder %s174, 0
      %s177 = sadd.s32 %s176, 1
      %s178 = scalar_select %p175, %s176, %s177
      %p181 = pneg %p175
      %p182 = scmp.eq.s32.totalorder %s14, 5
      %p183 = por %p181, %p182
      %p184 = scmp.ne.s32.totalorder %s176, %s179
      %p185 = scmp.eq.s32.totalorder %s14, 0
      %p186 = por %p184, %p185
      %p187 = scmp.ne.s32.totalorder %s176, %s179
      %p188 = scmp.eq.s32.totalorder %s19, 5
      %p189 = por %p187, %p188
      %p190 = scmp.ne.s32.totalorder %s179, %s180
      %p191 = scmp.eq.s32.totalorder %s19, 0
      %p192 = por %p190, %p191
      %p193 = scmp.ne.s32.totalorder %s179, %s180
      %p194 = scmp.eq.s32.totalorder %s20, 5
      %p195 = por %p193, %p194
      %p197 = scmp.ne.s32.totalorder %s180, %s196
      %p198 = scmp.eq.s32.totalorder %s20, 0
      %p199 = por %p197, %p198
      %p200 = scmp.le.s32.totalorder 1, %s14
      %p201 = scmp.lt.s32.totalorder %s14, 7
      %p202 = pnand %p200, %p201
      %p203 = pneg %p202
      // Predicated region
      $region9: #{stmha_block.8} parent=5 // pred_check
        _
      $region10: #{stmha_block.8} parent=5 // pred_check_branch
        %205 = sbr.rel (%p202) target = $region12
      $region11: #{stmha_block.8} parent=5 // pred_region
        %s206 = ssub.s32 %s14, 1
        // Predicated region
        $region13: #{stmha_block.8} parent=11 // pred_check
          %p207 = pneg %p61
        $region14: #{stmha_block.8} parent=11 // pred_check_branch
          %209 = sbr.rel (%p207) target = $region16
        $region15: #{stmha_block.8} parent=11 // pred_region
          _
        $region16: #{stmha_block.8} parent=11 // pred_fallthru
          _
        // Predicated region
        $region17: #{stmha_block.8} parent=11 // pred_check
          %p210 = pneg %p82
        $region18: #{stmha_block.8} parent=11 // pred_check_branch
          %212 = sbr.rel (%p210) target = $region20
        $region19: #{stmha_block.8} parent=11 // pred_region
          _
        $region20: #{stmha_block.8} parent=11 // pred_fallthru
          _
        // Predicated region
        $region21: #{stmha_block.8} parent=11 // pred_check
          %p213 = pneg %p103
        $region22: #{stmha_block.8} parent=11 // pred_check_branch
          %215 = sbr.rel (%p213) target = $region24
        $region23: #{stmha_block.8} parent=11 // pred_region
          %217 = vsyncadd [#allocation3], 0
          %s218 = sshll.u32 %s3, 4
          %s219 = int_to_ptr.hbm [resolvable:$true] %s218
          %s220 = sshll.u32 [#allocation2], 4
          %s221 = int_to_ptr.vmem [resolvable:$true] %s220
          %226 = dma.hbm_to_vmem [thread:$0]  %s219, 512, %s221, [#allocation3], 128, 128, 8
        $region24: #{stmha_block.8} parent=11 // pred_fallthru
          _
        // Predicated region
        $region25: #{stmha_block.8} parent=11 // pred_check
          %p227 = pneg %p124
        $region26: #{stmha_block.8} parent=11 // pred_check_branch
          %229 = sbr.rel (%p227) target = $region28
        $region27: #{stmha_block.8} parent=11 // pred_region
          _
        $region28: #{stmha_block.8} parent=11 // pred_fallthru
          _
        // Predicated region
        $region29: #{stmha_block.8} parent=11 // pred_check
          %p230 = pneg %p145
        $region30: #{stmha_block.8} parent=11 // pred_check_branch
          %232 = sbr.rel (%p230) target = $region32
        $region31: #{stmha_block.8} parent=11 // pred_region
          _
        $region32: #{stmha_block.8} parent=11 // pred_fallthru
          _
        // Predicated region
        $region33: #{stmha_block.8} parent=11 // pred_check
          %p233 = pneg %p166
        $region34: #{stmha_block.8} parent=11 // pred_check_branch
          %235 = sbr.rel (%p233) target = $region36
        $region35: #{stmha_block.8} parent=11 // pred_region
          _
        $region36: #{stmha_block.8} parent=11 // pred_fallthru
          _
      $region12: #{stmha_block.8} parent=5 // pred_fallthru
        _
      %p236 = scmp.lt.s32.totalorder %s14, 6
      // Predicated region
      $region37: #{stmha_block.8} parent=5 // pred_check
        %p237 = pneg %p236
      $region38: #{stmha_block.8} parent=5 // pred_check_branch
        %239 = sbr.rel (%p237) target = $region40
      $region39: #{stmha_block.8} parent=5 // pred_region
        // Predicated region
        $region41: #{stmha_block.8} parent=39 // pred_check
          %p240 = pneg %p34
        $region42: #{stmha_block.8} parent=39 // pred_check_branch
          %242 = sbr.rel (%p240) target = $region44
        $region43: #{stmha_block.8} parent=39 // pred_region
          %p243 = scmp.lt.s32.totalorder %s14, 5
          %s244 = scalar_select %p243, %s14, 5
          %s245 = smul.addr %s244, 8
          %s246 = scalar_lea.vmem %s0, %s245
        $region44: #{stmha_block.8} parent=39 // pred_fallthru
          _
      $region40: #{stmha_block.8} parent=5 // pred_fallthru
        _
      %p247 = scmp.le.s32.totalorder 1, %s14
      %p248 = scmp.lt.s32.totalorder %s14, 7
      %p249 = pnand %p247, %p248
      %p250 = pneg %p249
      // Predicated region
      $region45: #{stmha_block.8} parent=5 // pred_check
        _
      $region46: #{stmha_block.8} parent=5 // pred_check_branch
        %252 = sbr.rel (%p249) target = $region48
      $region47: #{stmha_block.8} parent=5 // pred_region
        %s253 = ssub.s32 %s14, 1
        // Predicated region
        $region49: #{stmha_block.8} parent=47 // pred_check
          %p254 = pneg %p103
        $region50: #{stmha_block.8} parent=47 // pred_check_branch
          %256 = sbr.rel (%p254) target = $region52
        $region51: #{stmha_block.8} parent=47 // pred_region
          %258 = dma.done [#allocation3], 512
        $region52: #{stmha_block.8} parent=47 // pred_fallthru
          _
        %p259 = scmp.lt.s32.totalorder %s19, 5
        %s260 = scalar_select %p259, %s19, 5
        %s261 = smul.addr %s260, 8
        %s262 = scalar_lea.vmem %s0, %s261
        %p263 = pneg %p40
        %p264 = pneg %p37
        %p265 = pneg %p61
        %p266 = pneg %p58
        %p267 = pneg %p82
        %p268 = pneg %p79
        %p269 = pneg %p103
        %p270 = pneg %p100
        %p271 = pneg %p124
        %p272 = pneg %p121
        %p273 = pneg %p145
        %p274 = pneg %p142
        %p275 = pneg %p166
        %p276 = pneg %p163
        %p277 = pneg %p192
        %p278 = pneg %p189
        %p279 = scmp.lt.s32.totalorder %s19, 5
        %s280 = scalar_select %p279, %s19, 5
        %s281 = smul.addr %s280, 8
        %s282 = scalar_lea.vmem %s7, %s281
        %p283 = scmp.lt.s32.totalorder %s19, 5
        %s284 = scalar_select %p283, %s19, 5
        %s285 = smul.addr %s284, 8
        %s286 = scalar_lea.vmem %s0, %s285
        %p287 = scmp.lt.s32.totalorder %s19, 5
        %s288 = scalar_select %p287, %s19, 5
        %s289 = smul.addr %s288, 8
        %s290 = scalar_lea.vmem %s7, %s289
        %v291 = vld [vmem:[%s286] sm:$0xff]
        %v292 = vld [vmem:[%s1] sm:$0xff]
        %v293 = vld [vmem:[%s1 + $0x8] sm:$0xff]
        %v294 = vld [vmem:[%s1 + $0x10] sm:$0xff]
        %v295 = vld [vmem:[%s1 + $0x18] sm:$0xff]
        %v296 = vld [vmem:[%s2] sm:$0x1]
        %v298 = vperm.slane %v296, 0
        %vm300 = vcmask 261120
        %v302 = vsel %vm300, %v291, 0
        %304 = vmatpush.msra.mxu0 0.0
        %305 = vmatpush.msra.mxu0 0.0
        %306 = vmatpush.msra.mxu0 0.0
        %307 = vmatpush.msra.mxu0 0.0
        %308 = vmatpush.msra.mxu0 0.0
        %309 = vmatpush.msra.mxu0 0.0
        %310 = vmatpush.msra.mxu0 0.0
        %311 = vmatpush.msra.mxu0 0.0
        %312 = vmatpush.msra.mxu0 0.0
        %313 = vmatpush.msra.mxu0 0.0
        %314 = vmatpush.msra.mxu0 0.0
        %315 = vmatpush.msra.mxu0 0.0
        %316 = vmatpush.msra.mxu0 %v295
        %317 = vmatpush.msra.mxu0 %v294
        %318 = vmatpush.msra.mxu0 %v293
        %319 = vmatpush.msra.mxu0 %v292
        %320 = vmatmul.f32.gmra.mxu0 %v302
        %v321 = vpop.f32.mrf.mxu0
        %v322 = vadd.f32 %v298, %v321
        %323 = vdwg.mxu0
        %v324 = vld [vmem:[#allocation2] sm:$0xff]
        %v325 = vld [vmem:[#allocation2 + $0x8] sm:$0xff]
        %v326 = vld [vmem:[#allocation2 + $0x10] sm:$0xff]
        %v327 = vld [vmem:[#allocation2 + $0x18] sm:$0xff]
        %329 = vrot.lane.b32.xlu0 %v322, 96
        %v330 = vpop.permute.xlu0 %329
        %vm331 = vcmask 64512
        %v332 = vsel %vm331, %v322, 0
        %v334 = vsel %vm331, %v330, 0
        %336 = vmatpush.xpose.msra.mxu0 0.0
        %337 = vmatpush.xpose.msra.mxu0 0.0
        %338 = vmatpush.xpose.msra.mxu0 0.0
        %339 = vmatpush.xpose.msra.mxu0 0.0
        %340 = vmatpush.xpose.msra.mxu0 0.0
        %341 = vmatpush.xpose.msra.mxu0 0.0
        %342 = vmatpush.xpose.msra.mxu0 0.0
        %343 = vmatpush.xpose.msra.mxu0 0.0
        %344 = vmatpush.xpose.msra.mxu0 0.0
        %345 = vmatpush.xpose.msra.mxu0 0.0
        %346 = vmatpush.xpose.msra.mxu0 0.0
        %347 = vmatpush.xpose.msra.mxu0 0.0
        %348 = vmatpush.xpose.msra.mxu0 0.0
        %349 = vmatpush.xpose.msra.mxu0 0.0
        %350 = vmatpush.xpose.msra.mxu0 0.0
        %351 = vmatpush.xpose.msra.mxu0 %v334
        %352 = vmatmul.f32.gmra.mxu0 %v332
        %v353 = vpop.f32.mrf.mxu0
        %v354 = vadd.f32 0.0, %v353
        %355 = vdwg.mxu0
        %v356 = vmul.f32 %v354, 0.35355338
        %v357 = vsel %vm331, %v356, -inf
        %358 = vmax.xlane.f32.xlu0 %v357
        %v359 = vpop.xlane.xlu0 %358
        %v360 = vsub.f32 %v356, %v359
        %v361 = vmul.f32 %v360, 1.442695
        %v362 = vpow.pop %v361
        %v363 = vsel %vm331, %v362, 0.0
        %364 = vadd.xlane.f32.xlu0 %v363
        %v365 = vpop.xlane.xlu0 %364
        %v366 = vrcp.pop %v365
        %v367 = vmul.f32 %v362, %v366
        %368 = vrot.lane.b32.xlu0 %v322, 64
        %v369 = vpop.permute.xlu0 %368
        %v372 = vsel %vm331, %v367, 0
        %374 = vmatpush.msra.mxu0 0.0
        %375 = vmatpush.msra.mxu0 0.0
        %376 = vmatpush.msra.mxu0 0.0
        %377 = vmatpush.msra.mxu0 0.0
        %378 = vmatpush.msra.mxu0 0.0
        %379 = vmatpush.msra.mxu0 0.0
        %380 = vmatpush.msra.mxu0 0.0
        %381 = vmatpush.msra.mxu0 0.0
        %382 = vmatpush.msra.mxu0 0.0
        %383 = vmatpush.msra.mxu0 0.0
        %384 = vmatpush.msra.mxu0 0.0
        %385 = vmatpush.msra.mxu0 0.0
        %386 = vmatpush.msra.mxu0 0.0
        %387 = vmatpush.msra.mxu0 0.0
        %388 = vmatpush.msra.mxu0 0.0
        %389 = vmatpush.msra.mxu0 %v369
        %390 = vmatmul.f32.gmra.mxu0 %v372
        %v391 = vpop.f32.mrf.mxu0
        %v392 = vadd.f32 0.0, %v391
        %393 = vdwg.mxu0
        %394 = vrot.lane.b32.xlu0 %v322, 120
        %v395 = vpop.permute.xlu0 %394
        %396 = vrot.lane.b32.xlu0 %v322, 88
        %v397 = vpop.permute.xlu0 %396
        %v398 = vsel %vm331, %v395, 0
        %v400 = vsel %vm331, %v397, 0
        %402 = vmatpush.xpose.msra.mxu0 0.0
        %403 = vmatpush.xpose.msra.mxu0 0.0
        %404 = vmatpush.xpose.msra.mxu0 0.0
        %405 = vmatpush.xpose.msra.mxu0 0.0
        %406 = vmatpush.xpose.msra.mxu0 0.0
        %407 = vmatpush.xpose.msra.mxu0 0.0
        %408 = vmatpush.xpose.msra.mxu0 0.0
        %409 = vmatpush.xpose.msra.mxu0 0.0
        %410 = vmatpush.xpose.msra.mxu0 0.0
        %411 = vmatpush.xpose.msra.mxu0 0.0
        %412 = vmatpush.xpose.msra.mxu0 0.0
        %413 = vmatpush.xpose.msra.mxu0 0.0
        %414 = vmatpush.xpose.msra.mxu0 0.0
        %415 = vmatpush.xpose.msra.mxu0 0.0
        %416 = vmatpush.xpose.msra.mxu0 0.0
        %417 = vmatpush.xpose.msra.mxu0 %v400
        %418 = vmatmul.f32.gmra.mxu0 %v398
        %v419 = vpop.f32.mrf.mxu0
        %v420 = vadd.f32 0.0, %v419
        %421 = vdwg.mxu0
        %v422 = vmul.f32 %v420, 0.35355338
        %v423 = vsel %vm331, %v422, -inf
        %424 = vmax.xlane.f32.xlu0 %v423
        %v425 = vpop.xlane.xlu0 %424
        %v426 = vsub.f32 %v422, %v425
        %v427 = vmul.f32 %v426, 1.442695
        %v428 = vpow.pop %v427
        %v429 = vsel %vm331, %v428, 0.0
        %430 = vadd.xlane.f32.xlu0 %v429
        %v431 = vpop.xlane.xlu0 %430
        %v432 = vrcp.pop %v431
        %v433 = vmul.f32 %v428, %v432
        %434 = vrot.lane.b32.xlu0 %v322, 56
        %v435 = vpop.permute.xlu0 %434
        %v438 = vsel %vm331, %v433, 0
        %440 = vmatpush.msra.mxu0 0.0
        %441 = vmatpush.msra.mxu0 0.0
        %442 = vmatpush.msra.mxu0 0.0
        %443 = vmatpush.msra.mxu0 0.0
        %444 = vmatpush.msra.mxu0 0.0
        %445 = vmatpush.msra.mxu0 0.0
        %446 = vmatpush.msra.mxu0 0.0
        %447 = vmatpush.msra.mxu0 0.0
        %448 = vmatpush.msra.mxu0 0.0
        %449 = vmatpush.msra.mxu0 0.0
        %450 = vmatpush.msra.mxu0 0.0
        %451 = vmatpush.msra.mxu0 0.0
        %452 = vmatpush.msra.mxu0 0.0
        %453 = vmatpush.msra.mxu0 0.0
        %454 = vmatpush.msra.mxu0 0.0
        %455 = vmatpush.msra.mxu0 %v435
        %456 = vmatmul.f32.gmra.mxu0 %v438
        %v457 = vpop.f32.mrf.mxu0
        %v458 = vadd.f32 0.0, %v457
        %459 = vdwg.mxu0
        %v461 = vsel %vm331, %v458, 0
        %463 = vmatpush.msra.mxu0 0.0
        %464 = vmatpush.msra.mxu0 0.0
        %465 = vmatpush.msra.mxu0 0.0
        %466 = vmatpush.msra.mxu0 0.0
        %467 = vmatpush.msra.mxu0 0.0
        %468 = vmatpush.msra.mxu0 0.0
        %469 = vmatpush.msra.mxu0 0.0
        %470 = vmatpush.msra.mxu0 0.0
        %471 = vmatpush.msra.mxu0 0.0
        %472 = vmatpush.msra.mxu0 0.0
        %473 = vmatpush.msra.mxu0 0.0
        %474 = vmatpush.msra.mxu0 0.0
        %475 = vmatpush.msra.mxu0 0.0
        %476 = vmatpush.msra.mxu0 0.0
        %477 = vmatpush.msra.mxu0 0.0
        %478 = vmatpush.msra.mxu0 %v325
        %479 = vmatmul.f32.gmra.mxu0 %v461
        %v480 = vpop.f32.mrf.mxu0
        %v481 = vadd.f32 0.0, %v480
        %482 = vdwg.mxu0
        %v484 = vsel %vm331, %v392, 0
        %486 = vmatpush.msra.mxu0 0.0
        %487 = vmatpush.msra.mxu0 0.0
        %488 = vmatpush.msra.mxu0 0.0
        %489 = vmatpush.msra.mxu0 0.0
        %490 = vmatpush.msra.mxu0 0.0
        %491 = vmatpush.msra.mxu0 0.0
        %492 = vmatpush.msra.mxu0 0.0
        %493 = vmatpush.msra.mxu0 0.0
        %494 = vmatpush.msra.mxu0 0.0
        %495 = vmatpush.msra.mxu0 0.0
        %496 = vmatpush.msra.mxu0 0.0
        %497 = vmatpush.msra.mxu0 0.0
        %498 = vmatpush.msra.mxu0 0.0
        %499 = vmatpush.msra.mxu0 0.0
        %500 = vmatpush.msra.mxu0 0.0
        %501 = vmatpush.msra.mxu0 %v324
        %502 = vmatmul.f32.gmra.mxu0 %v484
        %v503 = vpop.f32.mrf.mxu0
        %v504 = vadd.f32 %v481, %v503
        %505 = vdwg.mxu0
        %506 = vrot.lane.b32.xlu0 %v322, 112
        %v507 = vpop.permute.xlu0 %506
        %508 = vrot.lane.b32.xlu0 %v322, 80
        %v509 = vpop.permute.xlu0 %508
        %v510 = vsel %vm331, %v507, 0
        %v512 = vsel %vm331, %v509, 0
        %514 = vmatpush.xpose.msra.mxu0 0.0
        %515 = vmatpush.xpose.msra.mxu0 0.0
        %516 = vmatpush.xpose.msra.mxu0 0.0
        %517 = vmatpush.xpose.msra.mxu0 0.0
        %518 = vmatpush.xpose.msra.mxu0 0.0
        %519 = vmatpush.xpose.msra.mxu0 0.0
        %520 = vmatpush.xpose.msra.mxu0 0.0
        %521 = vmatpush.xpose.msra.mxu0 0.0
        %522 = vmatpush.xpose.msra.mxu0 0.0
        %523 = vmatpush.xpose.msra.mxu0 0.0
        %524 = vmatpush.xpose.msra.mxu0 0.0
        %525 = vmatpush.xpose.msra.mxu0 0.0
        %526 = vmatpush.xpose.msra.mxu0 0.0
        %527 = vmatpush.xpose.msra.mxu0 0.0
        %528 = vmatpush.xpose.msra.mxu0 0.0
        %529 = vmatpush.xpose.msra.mxu0 %v512
        %530 = vmatmul.f32.gmra.mxu0 %v510
        %v531 = vpop.f32.mrf.mxu0
        %v532 = vadd.f32 0.0, %v531
        %533 = vdwg.mxu0
        %v534 = vmul.f32 %v532, 0.35355338
        %v535 = vsel %vm331, %v534, -inf
        %536 = vmax.xlane.f32.xlu0 %v535
        %v537 = vpop.xlane.xlu0 %536
        %v538 = vsub.f32 %v534, %v537
        %v539 = vmul.f32 %v538, 1.442695
        %v540 = vpow.pop %v539
        %v541 = vsel %vm331, %v540, 0.0
        %542 = vadd.xlane.f32.xlu0 %v541
        %v543 = vpop.xlane.xlu0 %542
        %v544 = vrcp.pop %v543
        %v545 = vmul.f32 %v540, %v544
        %546 = vrot.lane.b32.xlu0 %v322, 48
        %v547 = vpop.permute.xlu0 %546
        %v550 = vsel %vm331, %v545, 0
        %552 = vmatpush.msra.mxu0 0.0
        %553 = vmatpush.msra.mxu0 0.0
        %554 = vmatpush.msra.mxu0 0.0
        %555 = vmatpush.msra.mxu0 0.0
        %556 = vmatpush.msra.mxu0 0.0
        %557 = vmatpush.msra.mxu0 0.0
        %558 = vmatpush.msra.mxu0 0.0
        %559 = vmatpush.msra.mxu0 0.0
        %560 = vmatpush.msra.mxu0 0.0
        %561 = vmatpush.msra.mxu0 0.0
        %562 = vmatpush.msra.mxu0 0.0
        %563 = vmatpush.msra.mxu0 0.0
        %564 = vmatpush.msra.mxu0 0.0
        %565 = vmatpush.msra.mxu0 0.0
        %566 = vmatpush.msra.mxu0 0.0
        %567 = vmatpush.msra.mxu0 %v547
        %568 = vmatmul.f32.gmra.mxu0 %v550
        %v569 = vpop.f32.mrf.mxu0
        %v570 = vadd.f32 0.0, %v569
        %571 = vdwg.mxu0
        %v573 = vsel %vm331, %v570, 0
        %575 = vmatpush.msra.mxu0 0.0
        %576 = vmatpush.msra.mxu0 0.0
        %577 = vmatpush.msra.mxu0 0.0
        %578 = vmatpush.msra.mxu0 0.0
        %579 = vmatpush.msra.mxu0 0.0
        %580 = vmatpush.msra.mxu0 0.0
        %581 = vmatpush.msra.mxu0 0.0
        %582 = vmatpush.msra.mxu0 0.0
        %583 = vmatpush.msra.mxu0 0.0
        %584 = vmatpush.msra.mxu0 0.0
        %585 = vmatpush.msra.mxu0 0.0
        %586 = vmatpush.msra.mxu0 0.0
        %587 = vmatpush.msra.mxu0 0.0
        %588 = vmatpush.msra.mxu0 0.0
        %589 = vmatpush.msra.mxu0 0.0
        %590 = vmatpush.msra.mxu0 %v326
        %591 = vmatmul.f32.gmra.mxu0 %v573
        %v592 = vpop.f32.mrf.mxu0
        %v593 = vadd.f32 0.0, %v592
        %594 = vdwg.mxu0
        %v595 = vadd.f32 %v504, %v593
        %596 = vrot.lane.b32.xlu0 %v322, 104
        %v597 = vpop.permute.xlu0 %596
        %598 = vrot.lane.b32.xlu0 %v322, 72
        %v599 = vpop.permute.xlu0 %598
        %v600 = vsel %vm331, %v597, 0
        %v602 = vsel %vm331, %v599, 0
        %604 = vmatpush.xpose.msra.mxu0 0.0
        %605 = vmatpush.xpose.msra.mxu0 0.0
        %606 = vmatpush.xpose.msra.mxu0 0.0
        %607 = vmatpush.xpose.msra.mxu0 0.0
        %608 = vmatpush.xpose.msra.mxu0 0.0
        %609 = vmatpush.xpose.msra.mxu0 0.0
        %610 = vmatpush.xpose.msra.mxu0 0.0
        %611 = vmatpush.xpose.msra.mxu0 0.0
        %612 = vmatpush.xpose.msra.mxu0 0.0
        %613 = vmatpush.xpose.msra.mxu0 0.0
        %614 = vmatpush.xpose.msra.mxu0 0.0
        %615 = vmatpush.xpose.msra.mxu0 0.0
        %616 = vmatpush.xpose.msra.mxu0 0.0
        %617 = vmatpush.xpose.msra.mxu0 0.0
        %618 = vmatpush.xpose.msra.mxu0 0.0
        %619 = vmatpush.xpose.msra.mxu0 %v602
        %620 = vmatmul.f32.gmra.mxu0 %v600
        %v621 = vpop.f32.mrf.mxu0
        %v622 = vadd.f32 0.0, %v621
        %623 = vdwg.mxu0
        %v624 = vmul.f32 %v622, 0.35355338
        %v625 = vsel %vm331, %v624, -inf
        %626 = vmax.xlane.f32.xlu0 %v625
        %v627 = vpop.xlane.xlu0 %626
        %v628 = vsub.f32 %v624, %v627
        %v629 = vmul.f32 %v628, 1.442695
        %v630 = vpow.pop %v629
        %v631 = vsel %vm331, %v630, 0.0
        %632 = vadd.xlane.f32.xlu0 %v631
        %v633 = vpop.xlane.xlu0 %632
        %v634 = vrcp.pop %v633
        %v635 = vmul.f32 %v630, %v634
        %636 = vrot.lane.b32.xlu0 %v322, 40
        %v637 = vpop.permute.xlu0 %636
        %v640 = vsel %vm331, %v635, 0
        %642 = vmatpush.msra.mxu0 0.0
        %643 = vmatpush.msra.mxu0 0.0
        %644 = vmatpush.msra.mxu0 0.0
        %645 = vmatpush.msra.mxu0 0.0
        %646 = vmatpush.msra.mxu0 0.0
        %647 = vmatpush.msra.mxu0 0.0
        %648 = vmatpush.msra.mxu0 0.0
        %649 = vmatpush.msra.mxu0 0.0
        %650 = vmatpush.msra.mxu0 0.0
        %651 = vmatpush.msra.mxu0 0.0
        %652 = vmatpush.msra.mxu0 0.0
        %653 = vmatpush.msra.mxu0 0.0
        %654 = vmatpush.msra.mxu0 0.0
        %655 = vmatpush.msra.mxu0 0.0
        %656 = vmatpush.msra.mxu0 0.0
        %657 = vmatpush.msra.mxu0 %v637
        %658 = vmatmul.f32.gmra.mxu0 %v640
        %v659 = vpop.f32.mrf.mxu0
        %v660 = vadd.f32 0.0, %v659
        %661 = vdwg.mxu0
        %v663 = vsel %vm331, %v660, 0
        %665 = vmatpush.msra.mxu0 0.0
        %666 = vmatpush.msra.mxu0 0.0
        %667 = vmatpush.msra.mxu0 0.0
        %668 = vmatpush.msra.mxu0 0.0
        %669 = vmatpush.msra.mxu0 0.0
        %670 = vmatpush.msra.mxu0 0.0
        %671 = vmatpush.msra.mxu0 0.0
        %672 = vmatpush.msra.mxu0 0.0
        %673 = vmatpush.msra.mxu0 0.0
        %674 = vmatpush.msra.mxu0 0.0
        %675 = vmatpush.msra.mxu0 0.0
        %676 = vmatpush.msra.mxu0 0.0
        %677 = vmatpush.msra.mxu0 0.0
        %678 = vmatpush.msra.mxu0 0.0
        %679 = vmatpush.msra.mxu0 0.0
        %680 = vmatpush.msra.mxu0 %v327
        %681 = vmatmul.f32.gmra.mxu0 %v663
        %v682 = vpop.f32.mrf.mxu0
        %v683 = vadd.f32 0.0, %v682
        %684 = vdwg.mxu0
        %v685 = vadd.f32 %v595, %v683
        %v686 = vld [vmem:[%s4] sm:$0x1]
        %v688 = vperm.slane %v686, 0
        %v690 = vadd.f32 %v685, %v688
        %v691 = vadd.f32 %v690, %v291
        %v692 = vsel %vm300, %v691, 0.0
        %693 = vadd.xlane.f32.xlu0 %v692
        %v694 = vpop.xlane.xlu0 %693
        %v695 = vrcp.pop 32.0
        %v696 = vmul.f32 32.0, %v695
        %v697 = vsub.f32 1.0, %v696
        %v698 = vmul.f32 %v695, %v697
        %v699 = vadd.f32 %v695, %v698
        %vm700 = vweird.f32 %v695
        %v701 = vsel %vm700, %v695, %v699
        %v702 = vmul.f32 %v694, %v701
        %v703 = vsub.f32 %v691, %v702
        %v704 = vmul.f32 %v703, %v703
        %v705 = vsel %vm300, %v704, 0.0
        %706 = vadd.xlane.f32.xlu0 %v705
        %v707 = vpop.xlane.xlu0 %706
        %v708 = vmul.f32 %v707, %v701
        %v709 = vadd.f32 %v708, 1e-05
        %v710 = vrsqrt.pop %v709
        %v711 = vmul.f32 %v710, %v709
        %v712 = vmul.f32 %v711, %v710
        %v713 = vmul.f32 0.5, %v712
        %v714 = vsub.f32 1.5, %v713
        %v715 = vmul.f32 %v710, %v714
        %vm716 = vweird.f32 %v709
        %vm717 = vweird.f32 %v710
        %vm718 = vmor %vm716, %vm717
        %v719 = vsel %vm718, %v710, %v715
        %v720 = vmul.f32 %v703, %v719
        %v721 = vld [vmem:[%s5] sm:$0x1]
        %v723 = vperm.slane %v721, 0
        %v725 = vmul.f32 %v720, %v723
        %v726 = vld [vmem:[%s6] sm:$0x1]
        %v728 = vperm.slane %v726, 0
        %v730 = vadd.f32 %v725, %v728
        %731 = vst.msk [vmem:[%s290] sm:$0xff] %vm300, %v730
        %p732 = scmp.lt.s32.totalorder %s19, 5
        %s733 = scalar_select %p732, %s19, 5
        %s734 = smul.addr %s733, 8
        %s735 = scalar_lea.vmem %s7, %s734
        // Predicated region
        $region53: #{stmha_block.8} parent=47 // pred_check
          %p736 = pneg %p189
        $region54: #{stmha_block.8} parent=47 // pred_check_branch
          %738 = sbr.rel (%p736) target = $region56
        $region55: #{stmha_block.8} parent=47 // pred_region
          _
        $region56: #{stmha_block.8} parent=47 // pred_fallthru
          _
      $region48: #{stmha_block.8} parent=5 // pred_fallthru
        _
      %p739 = scmp.le.s32.totalorder 2, %s14
      // Predicated region
      $region57: #{stmha_block.8} parent=5 // pred_check
        %p740 = pneg %p739
      $region58: #{stmha_block.8} parent=5 // pred_check_branch
        %742 = sbr.rel (%p740) target = $region60
      $region59: #{stmha_block.8} parent=5 // pred_region
        %s743 = ssub.s32 %s14, 2
        // Predicated region
        $region61: #{stmha_block.8} parent=59 // pred_check
          %p744 = pneg %p195
        $region62: #{stmha_block.8} parent=59 // pred_check_branch
          %746 = sbr.rel (%p744) target = $region64
        $region63: #{stmha_block.8} parent=59 // pred_region
          %p747 = scmp.lt.s32.totalorder %s20, 5
          %s748 = scalar_select %p747, %s20, 5
          %s749 = smul.addr %s748, 8
          %s750 = scalar_lea.vmem %s7, %s749
        $region64: #{stmha_block.8} parent=59 // pred_fallthru
          _
      $region60: #{stmha_block.8} parent=5 // pred_fallthru
        _
    $region6: #{stmha_block.8} parent=1 // loop_footer
      %s18 = sadd.s32 1, %s14
    $region7: #{stmha_block.8} parent=1 // loop_footer_branch
      %13 = sbr.rel target = $region3
    $region8: #{stmha_block.8} parent=1 // loop_exit
      _
    %751 = vsyncpa [#allocation3], 1
    %s752 = scalar_lea.sflag [#allocation3], 1
    %753 = vsyncpa %s752, 1

// kernel: stmha_block.9
$region0: #{stmha_block.9}
  #allocation0 [shape = 'u32[]', space=smem, size = 0x4, offset = 0x4, fixed_abs, tag = 'smem constant byte address 0x4 - core index']
  #allocation1 [shape = 'u32[72,128]{1,0:T(1,128)}', space=vmem, size = 0x9000, scoped, tag = 'internal scratch']
  %s0 = inlined_call_operand.vmem [shape: f32[16,3,32], index: 0, kind: input, shape index: {}]
  %s1 = inlined_call_operand.vmem [shape: f32[32,96], index: 1, kind: input, shape index: {}]
  %s2 = inlined_call_operand.vmem [shape: f32[1,96], index: 2, kind: input, shape index: {}]
  %s3 = inlined_call_operand.vmem [shape: f32[32,32], index: 3, kind: input, shape index: {}]
  %s4 = inlined_call_operand.vmem [shape: f32[1,32], index: 4, kind: input, shape index: {}]
  %s5 = inlined_call_operand.vmem [shape: f32[1,32], index: 5, kind: input, shape index: {}]
  %s6 = inlined_call_operand.vmem [shape: f32[1,32], index: 6, kind: input, shape index: {}]
  %s7 = inlined_call_operand.vmem [shape: f32[16,3,32], index: 7, kind: output, shape index: {}]
  %s8 = sld [smem:[#allocation0]]
  $region61: #{stmha_block.9} parent=0
    _
  %s10 = ssub.s32 1, %s8
  %s11 = scalar_select 0, %s10, %s8
  loop: start=0, step=1, limit=18
  $region2: #{stmha_block.9} parent=0 // loop_pre_header
    _
  $region3: #{stmha_block.9} parent=0 // loop_header
    %s13 = sphi 0, %s17
    %p14 = scmp.ge.s32.totalorder %s13, 18
    %s23 = sphi 0, %s25
    %s26 = sphi 0, %s23
    %s27 = sphi 0, %s26
    %s43 = sphi 0, %s27
    %s47 = sphi 0, %s47
    %s49 = sphi 0, %s47
    %s50 = sphi 0, %s49
    %s64 = sphi 0, %s50
    %s68 = sphi 0, %s68
    %s70 = sphi 0, %s68
    %s71 = sphi 0, %s70
    %s85 = sphi 0, %s71
    %s89 = sphi 0, %s89
    %s91 = sphi 0, %s89
    %s92 = sphi 0, %s91
    %s106 = sphi 0, %s92
    %s110 = sphi 0, %s110
    %s112 = sphi 0, %s110
    %s113 = sphi 0, %s112
    %s127 = sphi 0, %s113
    %s131 = sphi 0, %s131
    %s133 = sphi 0, %s131
    %s134 = sphi 0, %s133
    %s148 = sphi 0, %s134
    %s152 = sphi 0, %s152
    %s154 = sphi 0, %s152
    %s155 = sphi 0, %s154
    %s169 = sphi 0, %s155
    %s175 = sphi 0, %s177
    %s178 = sphi 0, %s175
    %s179 = sphi 0, %s178
    %s195 = sphi 0, %s179
  $region4: #{stmha_block.9} parent=0 // loop_header_branch
    %16 = sbr.rel (%p14) target = $region8
  $region5: #{stmha_block.9} parent=0 // loop_body
    %s18 = ssub.s32 %s13, 1
    %s19 = ssub.s32 %s13, 2
    %s20 = sadd.s32 %s13, 1
    %s21 = ssub.s32 %s13, %s20
    %p22 = scmp.eq.s32.totalorder %s21, 0
    %s24 = sadd.s32 %s23, 1
    %s25 = scalar_select %p22, %s23, %s24
    %p28 = pneg %p22
    %p29 = scmp.eq.s32.totalorder %s13, 15
    %p30 = por %p28, %p29
    %p31 = scmp.ne.s32.totalorder %s23, %s26
    %p32 = scmp.eq.s32.totalorder %s13, 0
    %p33 = por %p31, %p32
    %p34 = scmp.ne.s32.totalorder %s23, %s26
    %p35 = scmp.eq.s32.totalorder %s18, 15
    %p36 = por %p34, %p35
    %p37 = scmp.ne.s32.totalorder %s26, %s27
    %p38 = scmp.eq.s32.totalorder %s18, 0
    %p39 = por %p37, %p38
    %p40 = scmp.ne.s32.totalorder %s26, %s27
    %p41 = scmp.eq.s32.totalorder %s19, 15
    %p42 = por %p40, %p41
    %p44 = scmp.ne.s32.totalorder %s27, %s43
    %p45 = scmp.eq.s32.totalorder %s19, 0
    %p46 = por %p44, %p45
    %s48 = sadd.s32 %s47, 1
    %p51 = scmp.eq.s32.totalorder %s13, 15
    %p52 = scmp.ne.s32.totalorder %s47, %s49
    %p53 = scmp.eq.s32.totalorder %s13, 0
    %p54 = por %p52, %p53
    %p55 = scmp.ne.s32.totalorder %s47, %s49
    %p56 = scmp.eq.s32.totalorder %s18, 15
    %p57 = por %p55, %p56
    %p58 = scmp.ne.s32.totalorder %s49, %s50
    %p59 = scmp.eq.s32.totalorder %s18, 0
    %p60 = por %p58, %p59
    %p61 = scmp.ne.s32.totalorder %s49, %s50
    %p62 = scmp.eq.s32.totalorder %s19, 15
    %p63 = por %p61, %p62
    %p65 = scmp.ne.s32.totalorder %s50, %s64
    %p66 = scmp.eq.s32.totalorder %s19, 0
    %p67 = por %p65, %p66
    %s69 = sadd.s32 %s68, 1
    %p72 = scmp.eq.s32.totalorder %s13, 15
    %p73 = scmp.ne.s32.totalorder %s68, %s70
    %p74 = scmp.eq.s32.totalorder %s13, 0
    %p75 = por %p73, %p74
    %p76 = scmp.ne.s32.totalorder %s68, %s70
    %p77 = scmp.eq.s32.totalorder %s18, 15
    %p78 = por %p76, %p77
    %p79 = scmp.ne.s32.totalorder %s70, %s71
    %p80 = scmp.eq.s32.totalorder %s18, 0
    %p81 = por %p79, %p80
    %p82 = scmp.ne.s32.totalorder %s70, %s71
    %p83 = scmp.eq.s32.totalorder %s19, 15
    %p84 = por %p82, %p83
    %p86 = scmp.ne.s32.totalorder %s71, %s85
    %p87 = scmp.eq.s32.totalorder %s19, 0
    %p88 = por %p86, %p87
    %s90 = sadd.s32 %s89, 1
    %p93 = scmp.eq.s32.totalorder %s13, 15
    %p94 = scmp.ne.s32.totalorder %s89, %s91
    %p95 = scmp.eq.s32.totalorder %s13, 0
    %p96 = por %p94, %p95
    %p97 = scmp.ne.s32.totalorder %s89, %s91
    %p98 = scmp.eq.s32.totalorder %s18, 15
    %p99 = por %p97, %p98
    %p100 = scmp.ne.s32.totalorder %s91, %s92
    %p101 = scmp.eq.s32.totalorder %s18, 0
    %p102 = por %p100, %p101
    %p103 = scmp.ne.s32.totalorder %s91, %s92
    %p104 = scmp.eq.s32.totalorder %s19, 15
    %p105 = por %p103, %p104
    %p107 = scmp.ne.s32.totalorder %s92, %s106
    %p108 = scmp.eq.s32.totalorder %s19, 0
    %p109 = por %p107, %p108
    %s111 = sadd.s32 %s110, 1
    %p114 = scmp.eq.s32.totalorder %s13, 15
    %p115 = scmp.ne.s32.totalorder %s110, %s112
    %p116 = scmp.eq.s32.totalorder %s13, 0
    %p117 = por %p115, %p116
    %p118 = scmp.ne.s32.totalorder %s110, %s112
    %p119 = scmp.eq.s32.totalorder %s18, 15
    %p120 = por %p118, %p119
    %p121 = scmp.ne.s32.totalorder %s112, %s113
    %p122 = scmp.eq.s32.totalorder %s18, 0
    %p123 = por %p121, %p122
    %p124 = scmp.ne.s32.totalorder %s112, %s113
    %p125 = scmp.eq.s32.totalorder %s19, 15
    %p126 = por %p124, %p125
    %p128 = scmp.ne.s32.totalorder %s113, %s127
    %p129 = scmp.eq.s32.totalorder %s19, 0
    %p130 = por %p128, %p129
    %s132 = sadd.s32 %s131, 1
    %p135 = scmp.eq.s32.totalorder %s13, 15
    %p136 = scmp.ne.s32.totalorder %s131, %s133
    %p137 = scmp.eq.s32.totalorder %s13, 0
    %p138 = por %p136, %p137
    %p139 = scmp.ne.s32.totalorder %s131, %s133
    %p140 = scmp.eq.s32.totalorder %s18, 15
    %p141 = por %p139, %p140
    %p142 = scmp.ne.s32.totalorder %s133, %s134
    %p143 = scmp.eq.s32.totalorder %s18, 0
    %p144 = por %p142, %p143
    %p145 = scmp.ne.s32.totalorder %s133, %s134
    %p146 = scmp.eq.s32.totalorder %s19, 15
    %p147 = por %p145, %p146
    %p149 = scmp.ne.s32.totalorder %s134, %s148
    %p150 = scmp.eq.s32.totalorder %s19, 0
    %p151 = por %p149, %p150
    %s153 = sadd.s32 %s152, 1
    %p156 = scmp.eq.s32.totalorder %s13, 15
    %p157 = scmp.ne.s32.totalorder %s152, %s154
    %p158 = scmp.eq.s32.totalorder %s13, 0
    %p159 = por %p157, %p158
    %p160 = scmp.ne.s32.totalorder %s152, %s154
    %p161 = scmp.eq.s32.totalorder %s18, 15
    %p162 = por %p160, %p161
    %p163 = scmp.ne.s32.totalorder %s154, %s155
    %p164 = scmp.eq.s32.totalorder %s18, 0
    %p165 = por %p163, %p164
    %p166 = scmp.ne.s32.totalorder %s154, %s155
    %p167 = scmp.eq.s32.totalorder %s19, 15
    %p168 = por %p166, %p167
    %p170 = scmp.ne.s32.totalorder %s155, %s169
    %p171 = scmp.eq.s32.totalorder %s19, 0
    %p172 = por %p170, %p171
    %s173 = ssub.s32 %s13, %s20
    %p174 = scmp.eq.s32.totalorder %s173, 0
    %s176 = sadd.s32 %s175, 1
    %s177 = scalar_select %p174, %s175, %s176
    %p180 = pneg %p174
    %p181 = scmp.eq.s32.totalorder %s13, 15
    %p182 = por %p180, %p181
    %p183 = scmp.ne.s32.totalorder %s175, %s178
    %p184 = scmp.eq.s32.totalorder %s13, 0
    %p185 = por %p183, %p184
    %p186 = scmp.ne.s32.totalorder %s175, %s178
    %p187 = scmp.eq.s32.totalorder %s18, 15
    %p188 = por %p186, %p187
    %p189 = scmp.ne.s32.totalorder %s178, %s179
    %p190 = scmp.eq.s32.totalorder %s18, 0
    %p191 = por %p189, %p190
    %p192 = scmp.ne.s32.totalorder %s178, %s179
    %p193 = scmp.eq.s32.totalorder %s19, 15
    %p194 = por %p192, %p193
    %p196 = scmp.ne.s32.totalorder %s179, %s195
    %p197 = scmp.eq.s32.totalorder %s19, 0
    %p198 = por %p196, %p197
    %p199 = scmp.le.s32.totalorder 1, %s13
    %p200 = scmp.lt.s32.totalorder %s13, 17
    %p201 = pnand %p199, %p200
    %p202 = pneg %p201
    // Predicated region
    $region9: #{stmha_block.9} parent=5 // pred_check
      _
    $region10: #{stmha_block.9} parent=5 // pred_check_branch
      %204 = sbr.rel (%p201) target = $region12
    $region11: #{stmha_block.9} parent=5 // pred_region
      %s205 = ssub.s32 %s13, 1
      // Predicated region
      $region13: #{stmha_block.9} parent=11 // pred_check
        %p206 = pneg %p60
      $region14: #{stmha_block.9} parent=11 // pred_check_branch
        %208 = sbr.rel (%p206) target = $region16
      $region15: #{stmha_block.9} parent=11 // pred_region
        _
      $region16: #{stmha_block.9} parent=11 // pred_fallthru
        _
      // Predicated region
      $region17: #{stmha_block.9} parent=11 // pred_check
        %p209 = pneg %p81
      $region18: #{stmha_block.9} parent=11 // pred_check_branch
        %211 = sbr.rel (%p209) target = $region20
      $region19: #{stmha_block.9} parent=11 // pred_region
        _
      $region20: #{stmha_block.9} parent=11 // pred_fallthru
        _
      // Predicated region
      $region21: #{stmha_block.9} parent=11 // pred_check
        %p212 = pneg %p102
      $region22: #{stmha_block.9} parent=11 // pred_check_branch
        %214 = sbr.rel (%p212) target = $region24
      $region23: #{stmha_block.9} parent=11 // pred_region
        _
      $region24: #{stmha_block.9} parent=11 // pred_fallthru
        _
      // Predicated region
      $region25: #{stmha_block.9} parent=11 // pred_check
        %p215 = pneg %p123
      $region26: #{stmha_block.9} parent=11 // pred_check_branch
        %217 = sbr.rel (%p215) target = $region28
      $region27: #{stmha_block.9} parent=11 // pred_region
        _
      $region28: #{stmha_block.9} parent=11 // pred_fallthru
        _
      // Predicated region
      $region29: #{stmha_block.9} parent=11 // pred_check
        %p218 = pneg %p144
      $region30: #{stmha_block.9} parent=11 // pred_check_branch
        %220 = sbr.rel (%p218) target = $region32
      $region31: #{stmha_block.9} parent=11 // pred_region
        _
      $region32: #{stmha_block.9} parent=11 // pred_fallthru
        _
      // Predicated region
      $region33: #{stmha_block.9} parent=11 // pred_check
        %p221 = pneg %p165
      $region34: #{stmha_block.9} parent=11 // pred_check_branch
        %223 = sbr.rel (%p221) target = $region36
      $region35: #{stmha_block.9} parent=11 // pred_region
        _
      $region36: #{stmha_block.9} parent=11 // pred_fallthru
        _
    $region12: #{stmha_block.9} parent=5 // pred_fallthru
      _
    %p224 = scmp.lt.s32.totalorder %s13, 16
    // Predicated region
    $region37: #{stmha_block.9} parent=5 // pred_check
      %p225 = pneg %p224
    $region38: #{stmha_block.9} parent=5 // pred_check_branch
      %227 = sbr.rel (%p225) target = $region40
    $region39: #{stmha_block.9} parent=5 // pred_region
      // Predicated region
      $region41: #{stmha_block.9} parent=39 // pred_check
        %p228 = pneg %p33
      $region42: #{stmha_block.9} parent=39 // pred_check_branch
        %230 = sbr.rel (%p228) target = $region44
      $region43: #{stmha_block.9} parent=39 // pred_region
        %p231 = scmp.lt.s32.totalorder %s13, 15
        %s232 = scalar_select %p231, %s13, 15
        %s233 = smul.addr %s232, 4
        %s234 = scalar_lea.vmem %s0, %s233
      $region44: #{stmha_block.9} parent=39 // pred_fallthru
        _
    $region40: #{stmha_block.9} parent=5 // pred_fallthru
      _
    %p235 = scmp.le.s32.totalorder 1, %s13
    %p236 = scmp.lt.s32.totalorder %s13, 17
    %p237 = pnand %p235, %p236
    %p238 = pneg %p237
    // Predicated region
    $region45: #{stmha_block.9} parent=5 // pred_check
      _
    $region46: #{stmha_block.9} parent=5 // pred_check_branch
      %240 = sbr.rel (%p237) target = $region48
    $region47: #{stmha_block.9} parent=5 // pred_region
      %s241 = ssub.s32 %s13, 1
      %p242 = scmp.lt.s32.totalorder %s18, 15
      %s243 = scalar_select %p242, %s18, 15
      %s244 = smul.addr %s243, 4
      %s245 = scalar_lea.vmem %s0, %s244
      %p246 = pneg %p39
      %p247 = pneg %p36
      %p248 = pneg %p60
      %p249 = pneg %p57
      %p250 = pneg %p81
      %p251 = pneg %p78
      %p252 = pneg %p102
      %p253 = pneg %p99
      %p254 = pneg %p123
      %p255 = pneg %p120
      %p256 = pneg %p144
      %p257 = pneg %p141
      %p258 = pneg %p165
      %p259 = pneg %p162
      %p260 = pneg %p191
      %p261 = pneg %p188
      %p262 = scmp.lt.s32.totalorder %s18, 15
      %s263 = scalar_select %p262, %s18, 15
      %s264 = smul.addr %s263, 4
      %s265 = scalar_lea.vmem %s7, %s264
      %p266 = scmp.lt.s32.totalorder %s18, 15
      %s267 = scalar_select %p266, %s18, 15
      %s268 = smul.addr %s267, 4
      %s269 = scalar_lea.vmem %s0, %s268
      %p270 = scmp.lt.s32.totalorder %s18, 15
      %s271 = scalar_select %p270, %s18, 15
      %s272 = smul.addr %s271, 4
      %s273 = scalar_lea.vmem %s7, %s272
      %v274 = vld [vmem:[%s269] sm:$0x7]
      %v275 = vld [vmem:[%s1] sm:$0xff]
      %v276 = vld [vmem:[%s1 + $0x8] sm:$0xff]
      %v277 = vld [vmem:[%s1 + $0x10] sm:$0xff]
      %v278 = vld [vmem:[%s1 + $0x18] sm:$0xff]
      %v279 = vld [vmem:[%s2] sm:$0x1]
      %v281 = vperm.slane %v279, 0
      %vm283 = vcmask 261120
      %v285 = vsel %vm283, %v274, 0
      %287 = vmatpush.msra.mxu0 0.0
      %288 = vmatpush.msra.mxu0 0.0
      %289 = vmatpush.msra.mxu0 0.0
      %290 = vmatpush.msra.mxu0 0.0
      %291 = vmatpush.msra.mxu0 0.0
      %292 = vmatpush.msra.mxu0 0.0
      %293 = vmatpush.msra.mxu0 0.0
      %294 = vmatpush.msra.mxu0 0.0
      %295 = vmatpush.msra.mxu0 0.0
      %296 = vmatpush.msra.mxu0 0.0
      %297 = vmatpush.msra.mxu0 0.0
      %298 = vmatpush.msra.mxu0 0.0
      %299 = vmatpush.msra.mxu0 %v278
      %300 = vmatpush.msra.mxu0 %v277
      %301 = vmatpush.msra.mxu0 %v276
      %302 = vmatpush.msra.mxu0 %v275
      %303 = vmatmul.f32.gmra.mxu0 %v285
      %v304 = vpop.f32.mrf.mxu0
      %v305 = vadd.f32 %v281, %v304
      %306 = vdwg.mxu0
      %v307 = vld [vmem:[%s3] sm:$0xff]
      %v308 = vld [vmem:[%s3 + $0x8] sm:$0xff]
      %v309 = vld [vmem:[%s3 + $0x10] sm:$0xff]
      %v310 = vld [vmem:[%s3 + $0x18] sm:$0xff]
      %312 = vrot.lane.b32.xlu0 %v305, 96
      %v313 = vpop.permute.xlu0 %312
      %vm314 = vcmask 64512
      %v315 = vsel %vm314, %v305, 0
      %v317 = vsel %vm314, %v313, 0
      %319 = vmatpush.xpose.msra.mxu0 0.0
      %320 = vmatpush.xpose.msra.mxu0 0.0
      %321 = vmatpush.xpose.msra.mxu0 0.0
      %322 = vmatpush.xpose.msra.mxu0 0.0
      %323 = vmatpush.xpose.msra.mxu0 0.0
      %324 = vmatpush.xpose.msra.mxu0 0.0
      %325 = vmatpush.xpose.msra.mxu0 0.0
      %326 = vmatpush.xpose.msra.mxu0 0.0
      %327 = vmatpush.xpose.msra.mxu0 0.0
      %328 = vmatpush.xpose.msra.mxu0 0.0
      %329 = vmatpush.xpose.msra.mxu0 0.0
      %330 = vmatpush.xpose.msra.mxu0 0.0
      %331 = vmatpush.xpose.msra.mxu0 0.0
      %332 = vmatpush.xpose.msra.mxu0 0.0
      %333 = vmatpush.xpose.msra.mxu0 0.0
      %334 = vmatpush.xpose.msra.mxu0 %v317
      %335 = vmatmul.f32.gmra.mxu0 %v315
      %v336 = vpop.f32.mrf.mxu0
      %v337 = vadd.f32 0.0, %v336
      %338 = vdwg.mxu0
      %v339 = vmul.f32 %v337, 0.35355338
      %vm340 = vcmask 18432
      %v341 = vsel %vm340, %v339, -inf
      %342 = vmax.xlane.f32.xlu0 %v341
      %v343 = vpop.xlane.xlu0 %342
      %v344 = vsub.f32 %v339, %v343
      %v345 = vmul.f32 %v344, 1.442695
      %v346 = vpow.pop %v345
      %v347 = vsel %vm340, %v346, 0.0
      %348 = vadd.xlane.f32.xlu0 %v347
      %v349 = vpop.xlane.xlu0 %348
      %v350 = vrcp.pop %v349
      %v351 = vmul.f32 %v346, %v350
      %352 = vrot.lane.b32.xlu0 %v305, 64
      %v353 = vpop.permute.xlu0 %352
      %vm354 = vcmask 23552
      %v356 = vsel %vm354, %v351, 0
      %vm358 = vcmask 1042432
      %v359 = vsel %vm358, %v353, 0
      %361 = vmatpush.msra.mxu0 0.0
      %362 = vmatpush.msra.mxu0 0.0
      %363 = vmatpush.msra.mxu0 0.0
      %364 = vmatpush.msra.mxu0 0.0
      %365 = vmatpush.msra.mxu0 0.0
      %366 = vmatpush.msra.mxu0 0.0
      %367 = vmatpush.msra.mxu0 0.0
      %368 = vmatpush.msra.mxu0 0.0
      %369 = vmatpush.msra.mxu0 0.0
      %370 = vmatpush.msra.mxu0 0.0
      %371 = vmatpush.msra.mxu0 0.0
      %372 = vmatpush.msra.mxu0 0.0
      %373 = vmatpush.msra.mxu0 0.0
      %374 = vmatpush.msra.mxu0 0.0
      %375 = vmatpush.msra.mxu0 0.0
      %376 = vmatpush.msra.mxu0 %v359
      %377 = vmatmul.f32.gmra.mxu0 %v356
      %v378 = vpop.f32.mrf.mxu0
      %v379 = vadd.f32 0.0, %v378
      %380 = vdwg.mxu0
      %381 = vrot.lane.b32.xlu0 %v305, 120
      %v382 = vpop.permute.xlu0 %381
      %383 = vrot.lane.b32.xlu0 %v305, 88
      %v384 = vpop.permute.xlu0 %383
      %v385 = vsel %vm314, %v382, 0
      %v387 = vsel %vm314, %v384, 0
      %389 = vmatpush.xpose.msra.mxu0 0.0
      %390 = vmatpush.xpose.msra.mxu0 0.0
      %391 = vmatpush.xpose.msra.mxu0 0.0
      %392 = vmatpush.xpose.msra.mxu0 0.0
      %393 = vmatpush.xpose.msra.mxu0 0.0
      %394 = vmatpush.xpose.msra.mxu0 0.0
      %395 = vmatpush.xpose.msra.mxu0 0.0
      %396 = vmatpush.xpose.msra.mxu0 0.0
      %397 = vmatpush.xpose.msra.mxu0 0.0
      %398 = vmatpush.xpose.msra.mxu0 0.0
      %399 = vmatpush.xpose.msra.mxu0 0.0
      %400 = vmatpush.xpose.msra.mxu0 0.0
      %401 = vmatpush.xpose.msra.mxu0 0.0
      %402 = vmatpush.xpose.msra.mxu0 0.0
      %403 = vmatpush.xpose.msra.mxu0 0.0
      %404 = vmatpush.xpose.msra.mxu0 %v387
      %405 = vmatmul.f32.gmra.mxu0 %v385
      %v406 = vpop.f32.mrf.mxu0
      %v407 = vadd.f32 0.0, %v406
      %408 = vdwg.mxu0
      %v409 = vmul.f32 %v407, 0.35355338
      %v410 = vsel %vm340, %v409, -inf
      %411 = vmax.xlane.f32.xlu0 %v410
      %v412 = vpop.xlane.xlu0 %411
      %v413 = vsub.f32 %v409, %v412
      %v414 = vmul.f32 %v413, 1.442695
      %v415 = vpow.pop %v414
      %v416 = vsel %vm340, %v415, 0.0
      %417 = vadd.xlane.f32.xlu0 %v416
      %v418 = vpop.xlane.xlu0 %417
      %v419 = vrcp.pop %v418
      %v420 = vmul.f32 %v415, %v419
      %421 = vrot.lane.b32.xlu0 %v305, 56
      %v422 = vpop.permute.xlu0 %421
      %v424 = vsel %vm354, %v420, 0
      %v426 = vsel %vm358, %v422, 0
      %428 = vmatpush.msra.mxu0 0.0
      %429 = vmatpush.msra.mxu0 0.0
      %430 = vmatpush.msra.mxu0 0.0
      %431 = vmatpush.msra.mxu0 0.0
      %432 = vmatpush.msra.mxu0 0.0
      %433 = vmatpush.msra.mxu0 0.0
      %434 = vmatpush.msra.mxu0 0.0
      %435 = vmatpush.msra.mxu0 0.0
      %436 = vmatpush.msra.mxu0 0.0
      %437 = vmatpush.msra.mxu0 0.0
      %438 = vmatpush.msra.mxu0 0.0
      %439 = vmatpush.msra.mxu0 0.0
      %440 = vmatpush.msra.mxu0 0.0
      %441 = vmatpush.msra.mxu0 0.0
      %442 = vmatpush.msra.mxu0 0.0
      %443 = vmatpush.msra.mxu0 %v426
      %444 = vmatmul.f32.gmra.mxu0 %v424
      %v445 = vpop.f32.mrf.mxu0
      %v446 = vadd.f32 0.0, %v445
      %447 = vdwg.mxu0
      %v449 = vsel %vm314, %v446, 0
      %451 = vmatpush.msra.mxu0 0.0
      %452 = vmatpush.msra.mxu0 0.0
      %453 = vmatpush.msra.mxu0 0.0
      %454 = vmatpush.msra.mxu0 0.0
      %455 = vmatpush.msra.mxu0 0.0
      %456 = vmatpush.msra.mxu0 0.0
      %457 = vmatpush.msra.mxu0 0.0
      %458 = vmatpush.msra.mxu0 0.0
      %459 = vmatpush.msra.mxu0 0.0
      %460 = vmatpush.msra.mxu0 0.0
      %461 = vmatpush.msra.mxu0 0.0
      %462 = vmatpush.msra.mxu0 0.0
      %463 = vmatpush.msra.mxu0 0.0
      %464 = vmatpush.msra.mxu0 0.0
      %465 = vmatpush.msra.mxu0 0.0
      %466 = vmatpush.msra.mxu0 %v308
      %467 = vmatmul.f32.gmra.mxu0 %v449
      %v468 = vpop.f32.mrf.mxu0
      %v469 = vadd.f32 0.0, %v468
      %470 = vdwg.mxu0
      %v472 = vsel %vm314, %v379, 0
      %474 = vmatpush.msra.mxu0 0.0
      %475 = vmatpush.msra.mxu0 0.0
      %476 = vmatpush.msra.mxu0 0.0
      %477 = vmatpush.msra.mxu0 0.0
      %478 = vmatpush.msra.mxu0 0.0
      %479 = vmatpush.msra.mxu0 0.0
      %480 = vmatpush.msra.mxu0 0.0
      %481 = vmatpush.msra.mxu0 0.0
      %482 = vmatpush.msra.mxu0 0.0
      %483 = vmatpush.msra.mxu0 0.0
      %484 = vmatpush.msra.mxu0 0.0
      %485 = vmatpush.msra.mxu0 0.0
      %486 = vmatpush.msra.mxu0 0.0
      %487 = vmatpush.msra.mxu0 0.0
      %488 = vmatpush.msra.mxu0 0.0
      %489 = vmatpush.msra.mxu0 %v307
      %490 = vmatmul.f32.gmra.mxu0 %v472
      %v491 = vpop.f32.mrf.mxu0
      %v492 = vadd.f32 %v469, %v491
      %493 = vdwg.mxu0
      %494 = vrot.lane.b32.xlu0 %v305, 112
      %v495 = vpop.permute.xlu0 %494
      %496 = vrot.lane.b32.xlu0 %v305, 80
      %v497 = vpop.permute.xlu0 %496
      %v498 = vsel %vm314, %v495, 0
      %v500 = vsel %vm314, %v497, 0
      %502 = vmatpush.xpose.msra.mxu0 0.0
      %503 = vmatpush.xpose.msra.mxu0 0.0
      %504 = vmatpush.xpose.msra.mxu0 0.0
      %505 = vmatpush.xpose.msra.mxu0 0.0
      %506 = vmatpush.xpose.msra.mxu0 0.0
      %507 = vmatpush.xpose.msra.mxu0 0.0
      %508 = vmatpush.xpose.msra.mxu0 0.0
      %509 = vmatpush.xpose.msra.mxu0 0.0
      %510 = vmatpush.xpose.msra.mxu0 0.0
      %511 = vmatpush.xpose.msra.mxu0 0.0
      %512 = vmatpush.xpose.msra.mxu0 0.0
      %513 = vmatpush.xpose.msra.mxu0 0.0
      %514 = vmatpush.xpose.msra.mxu0 0.0
      %515 = vmatpush.xpose.msra.mxu0 0.0
      %516 = vmatpush.xpose.msra.mxu0 0.0
      %517 = vmatpush.xpose.msra.mxu0 %v500
      %518 = vmatmul.f32.gmra.mxu0 %v498
      %v519 = vpop.f32.mrf.mxu0
      %v520 = vadd.f32 0.0, %v519
      %521 = vdwg.mxu0
      %v522 = vmul.f32 %v520, 0.35355338
      %v523 = vsel %vm340, %v522, -inf
      %524 = vmax.xlane.f32.xlu0 %v523
      %v525 = vpop.xlane.xlu0 %524
      %v526 = vsub.f32 %v522, %v525
      %v527 = vmul.f32 %v526, 1.442695
      %v528 = vpow.pop %v527
      %v529 = vsel %vm340, %v528, 0.0
      %530 = vadd.xlane.f32.xlu0 %v529
      %v531 = vpop.xlane.xlu0 %530
      %v532 = vrcp.pop %v531
      %v533 = vmul.f32 %v528, %v532
      %534 = vrot.lane.b32.xlu0 %v305, 48
      %v535 = vpop.permute.xlu0 %534
      %v537 = vsel %vm354, %v533, 0
      %v539 = vsel %vm358, %v535, 0
      %541 = vmatpush.msra.mxu0 0.0
      %542 = vmatpush.msra.mxu0 0.0
      %543 = vmatpush.msra.mxu0 0.0
      %544 = vmatpush.msra.mxu0 0.0
      %545 = vmatpush.msra.mxu0 0.0
      %546 = vmatpush.msra.mxu0 0.0
      %547 = vmatpush.msra.mxu0 0.0
      %548 = vmatpush.msra.mxu0 0.0
      %549 = vmatpush.msra.mxu0 0.0
      %550 = vmatpush.msra.mxu0 0.0
      %551 = vmatpush.msra.mxu0 0.0
      %552 = vmatpush.msra.mxu0 0.0
      %553 = vmatpush.msra.mxu0 0.0
      %554 = vmatpush.msra.mxu0 0.0
      %555 = vmatpush.msra.mxu0 0.0
      %556 = vmatpush.msra.mxu0 %v539
      %557 = vmatmul.f32.gmra.mxu0 %v537
      %v558 = vpop.f32.mrf.mxu0
      %v559 = vadd.f32 0.0, %v558
      %560 = vdwg.mxu0
      %v562 = vsel %vm314, %v559, 0
      %564 = vmatpush.msra.mxu0 0.0
      %565 = vmatpush.msra.mxu0 0.0
      %566 = vmatpush.msra.mxu0 0.0
      %567 = vmatpush.msra.mxu0 0.0
      %568 = vmatpush.msra.mxu0 0.0
      %569 = vmatpush.msra.mxu0 0.0
      %570 = vmatpush.msra.mxu0 0.0
      %571 = vmatpush.msra.mxu0 0.0
      %572 = vmatpush.msra.mxu0 0.0
      %573 = vmatpush.msra.mxu0 0.0
      %574 = vmatpush.msra.mxu0 0.0
      %575 = vmatpush.msra.mxu0 0.0
      %576 = vmatpush.msra.mxu0 0.0
      %577 = vmatpush.msra.mxu0 0.0
      %578 = vmatpush.msra.mxu0 0.0
      %579 = vmatpush.msra.mxu0 %v309
      %580 = vmatmul.f32.gmra.mxu0 %v562
      %v581 = vpop.f32.mrf.mxu0
      %v582 = vadd.f32 0.0, %v581
      %583 = vdwg.mxu0
      %v584 = vadd.f32 %v492, %v582
      %585 = vrot.lane.b32.xlu0 %v305, 104
      %v586 = vpop.permute.xlu0 %585
      %587 = vrot.lane.b32.xlu0 %v305, 72
      %v588 = vpop.permute.xlu0 %587
      %v589 = vsel %vm314, %v586, 0
      %v591 = vsel %vm314, %v588, 0
      %593 = vmatpush.xpose.msra.mxu0 0.0
      %594 = vmatpush.xpose.msra.mxu0 0.0
      %595 = vmatpush.xpose.msra.mxu0 0.0
      %596 = vmatpush.xpose.msra.mxu0 0.0
      %597 = vmatpush.xpose.msra.mxu0 0.0
      %598 = vmatpush.xpose.msra.mxu0 0.0
      %599 = vmatpush.xpose.msra.mxu0 0.0
      %600 = vmatpush.xpose.msra.mxu0 0.0
      %601 = vmatpush.xpose.msra.mxu0 0.0
      %602 = vmatpush.xpose.msra.mxu0 0.0
      %603 = vmatpush.xpose.msra.mxu0 0.0
      %604 = vmatpush.xpose.msra.mxu0 0.0
      %605 = vmatpush.xpose.msra.mxu0 0.0
      %606 = vmatpush.xpose.msra.mxu0 0.0
      %607 = vmatpush.xpose.msra.mxu0 0.0
      %608 = vmatpush.xpose.msra.mxu0 %v591
      %609 = vmatmul.f32.gmra.mxu0 %v589
      %v610 = vpop.f32.mrf.mxu0
      %v611 = vadd.f32 0.0, %v610
      %612 = vdwg.mxu0
      %v613 = vmul.f32 %v611, 0.35355338
      %v614 = vsel %vm340, %v613, -inf
      %615 = vmax.xlane.f32.xlu0 %v614
      %v616 = vpop.xlane.xlu0 %615
      %v617 = vsub.f32 %v613, %v616
      %v618 = vmul.f32 %v617, 1.442695
      %v619 = vpow.pop %v618
      %v620 = vsel %vm340, %v619, 0.0
      %621 = vadd.xlane.f32.xlu0 %v620
      %v622 = vpop.xlane.xlu0 %621
      %v623 = vrcp.pop %v622
      %v624 = vmul.f32 %v619, %v623
      %625 = vrot.lane.b32.xlu0 %v305, 40
      %v626 = vpop.permute.xlu0 %625
      %v628 = vsel %vm354, %v624, 0
      %v630 = vsel %vm358, %v626, 0
      %632 = vmatpush.msra.mxu0 0.0
      %633 = vmatpush.msra.mxu0 0.0
      %634 = vmatpush.msra.mxu0 0.0
      %635 = vmatpush.msra.mxu0 0.0
      %636 = vmatpush.msra.mxu0 0.0
      %637 = vmatpush.msra.mxu0 0.0
      %638 = vmatpush.msra.mxu0 0.0
      %639 = vmatpush.msra.mxu0 0.0
      %640 = vmatpush.msra.mxu0 0.0
      %641 = vmatpush.msra.mxu0 0.0
      %642 = vmatpush.msra.mxu0 0.0
      %643 = vmatpush.msra.mxu0 0.0
      %644 = vmatpush.msra.mxu0 0.0
      %645 = vmatpush.msra.mxu0 0.0
      %646 = vmatpush.msra.mxu0 0.0
      %647 = vmatpush.msra.mxu0 %v630
      %648 = vmatmul.f32.gmra.mxu0 %v628
      %v649 = vpop.f32.mrf.mxu0
      %v650 = vadd.f32 0.0, %v649
      %651 = vdwg.mxu0
      %v653 = vsel %vm314, %v650, 0
      %655 = vmatpush.msra.mxu0 0.0
      %656 = vmatpush.msra.mxu0 0.0
      %657 = vmatpush.msra.mxu0 0.0
      %658 = vmatpush.msra.mxu0 0.0
      %659 = vmatpush.msra.mxu0 0.0
      %660 = vmatpush.msra.mxu0 0.0
      %661 = vmatpush.msra.mxu0 0.0
      %662 = vmatpush.msra.mxu0 0.0
      %663 = vmatpush.msra.mxu0 0.0
      %664 = vmatpush.msra.mxu0 0.0
      %665 = vmatpush.msra.mxu0 0.0
      %666 = vmatpush.msra.mxu0 0.0
      %667 = vmatpush.msra.mxu0 0.0
      %668 = vmatpush.msra.mxu0 0.0
      %669 = vmatpush.msra.mxu0 0.0
      %670 = vmatpush.msra.mxu0 %v310
      %671 = vmatmul.f32.gmra.mxu0 %v653
      %v672 = vpop.f32.mrf.mxu0
      %v673 = vadd.f32 0.0, %v672
      %674 = vdwg.mxu0
      %v675 = vadd.f32 %v584, %v673
      %v676 = vld [vmem:[%s4] sm:$0x1]
      %v678 = vperm.slane %v676, 0
      %v680 = vadd.f32 %v675, %v678
      %v681 = vadd.f32 %v680, %v274
      %vm682 = vcmask 256000
      %v683 = vsel %vm682, %v681, 0.0
      %684 = vadd.xlane.f32.xlu0 %v683
      %v685 = vpop.xlane.xlu0 %684
      %v686 = vrcp.pop 32.0
      %v687 = vmul.f32 32.0, %v686
      %v688 = vsub.f32 1.0, %v687
      %v689 = vmul.f32 %v686, %v688
      %v690 = vadd.f32 %v686, %v689
      %vm691 = vweird.f32 %v686
      %v692 = vsel %vm691, %v686, %v690
      %v693 = vmul.f32 %v685, %v692
      %v694 = vsub.f32 %v681, %v693
      %v695 = vmul.f32 %v694, %v694
      %v696 = vsel %vm682, %v695, 0.0
      %697 = vadd.xlane.f32.xlu0 %v696
      %v698 = vpop.xlane.xlu0 %697
      %v699 = vmul.f32 %v698, %v692
      %v700 = vadd.f32 %v699, 1e-05
      %v701 = vrsqrt.pop %v700
      %v702 = vmul.f32 %v701, %v700
      %v703 = vmul.f32 %v702, %v701
      %v704 = vmul.f32 0.5, %v703
      %v705 = vsub.f32 1.5, %v704
      %v706 = vmul.f32 %v701, %v705
      %vm707 = vweird.f32 %v700
      %vm708 = vweird.f32 %v701
      %vm709 = vmor %vm707, %vm708
      %v710 = vsel %vm709, %v701, %v706
      %v711 = vmul.f32 %v694, %v710
      %v712 = vld [vmem:[%s5] sm:$0x1]
      %v714 = vperm.slane %v712, 0
      %v716 = vmul.f32 %v711, %v714
      %v717 = vld [vmem:[%s6] sm:$0x1]
      %v719 = vperm.slane %v717, 0
      %v721 = vadd.f32 %v716, %v719
      %722 = vst.msk [vmem:[%s273] sm:$0x7] %vm682, %v721
      %p723 = scmp.lt.s32.totalorder %s18, 15
      %s724 = scalar_select %p723, %s18, 15
      %s725 = smul.addr %s724, 4
      %s726 = scalar_lea.vmem %s7, %s725
      // Predicated region
      $region49: #{stmha_block.9} parent=47 // pred_check
        %p727 = pneg %p188
      $region50: #{stmha_block.9} parent=47 // pred_check_branch
        %729 = sbr.rel (%p727) target = $region52
      $region51: #{stmha_block.9} parent=47 // pred_region
        _
      $region52: #{stmha_block.9} parent=47 // pred_fallthru
        _
    $region48: #{stmha_block.9} parent=5 // pred_fallthru
      _
    %p730 = scmp.le.s32.totalorder 2, %s13
    // Predicated region
    $region53: #{stmha_block.9} parent=5 // pred_check
      %p731 = pneg %p730
    $region54: #{stmha_block.9} parent=5 // pred_check_branch
      %733 = sbr.rel (%p731) target = $region56
    $region55: #{stmha_block.9} parent=5 // pred_region
      %s734 = ssub.s32 %s13, 2
      // Predicated region
      $region57: #{stmha_block.9} parent=55 // pred_check
        %p735 = pneg %p194
      $region58: #{stmha_block.9} parent=55 // pred_check_branch
        %737 = sbr.rel (%p735) target = $region60
      $region59: #{stmha_block.9} parent=55 // pred_region
        %p738 = scmp.lt.s32.totalorder %s19, 15
        %s739 = scalar_select %p738, %s19, 15
        %s740 = smul.addr %s739, 4
        %s741 = scalar_lea.vmem %s7, %s740
      $region60: #{stmha_block.9} parent=55 // pred_fallthru
        _
    $region56: #{stmha_block.9} parent=5 // pred_fallthru
      _
  $region6: #{stmha_block.9} parent=0 // loop_footer
    %s17 = sadd.s32 1, %s13
  $region7: #{stmha_block.9} parent=0 // loop_footer_branch
    %12 = sbr.rel target = $region3
  $region8: #{stmha_block.9} parent=0 // loop_exit
    _

// kernel: stmha_block.10
$region0: #{stmha_block.10}
  #allocation0 [shape = 'u32[]', space=smem, size = 0x4, offset = 0x4, fixed_abs, tag = 'smem constant byte address 0x4 - core index']
  #allocation1 [shape = 'u32[72,128]{1,0:T(1,128)}', space=vmem, size = 0x9000, scoped, tag = 'internal scratch']
  %s0 = inlined_call_operand.vmem [shape: f32[48,32], index: 0, kind: input, shape index: {}]
  %s1 = inlined_call_operand.vmem [shape: f32[32,64], index: 1, kind: input, shape index: {}]
  %s2 = inlined_call_operand.vmem [shape: f32[1,64], index: 2, kind: input, shape index: {}]
  %s3 = inlined_call_operand.vmem [shape: f32[64,32], index: 3, kind: input, shape index: {}]
  %s4 = inlined_call_operand.vmem [shape: f32[1,32], index: 4, kind: input, shape index: {}]
  %s5 = inlined_call_operand.vmem [shape: f32[1,32], index: 5, kind: input, shape index: {}]
  %s6 = inlined_call_operand.vmem [shape: f32[1,32], index: 6, kind: input, shape index: {}]
  %s7 = inlined_call_operand.vmem [shape: f32[48,32], index: 7, kind: output, shape index: {}]
  %s8 = sld [smem:[#allocation0]]
  $region38: #{stmha_block.10} parent=0
    _
  %s10 = ssub.s32 1, %s8
  %s11 = scalar_select 0, %s10, %s8
  // Predicated region
  $region2: #{stmha_block.10} parent=0 // pred_check
    _
  $region3: #{stmha_block.10} parent=0 // pred_check_branch
    %13 = sbr.rel (0) target = $region5
  $region4: #{stmha_block.10} parent=0 // pred_region
    _
  $region5: #{stmha_block.10} parent=0 // pred_fallthru
    _
  // Predicated region
  $region6: #{stmha_block.10} parent=0 // pred_check
    _
  $region7: #{stmha_block.10} parent=0 // pred_check_branch
    %15 = sbr.rel (0) target = $region9
  $region8: #{stmha_block.10} parent=0 // pred_region
    _
  $region9: #{stmha_block.10} parent=0 // pred_fallthru
    _
  // Predicated region
  $region10: #{stmha_block.10} parent=0 // pred_check
    _
  $region11: #{stmha_block.10} parent=0 // pred_check_branch
    %17 = sbr.rel (0) target = $region13
  $region12: #{stmha_block.10} parent=0 // pred_region
    _
  $region13: #{stmha_block.10} parent=0 // pred_fallthru
    _
  // Predicated region
  $region14: #{stmha_block.10} parent=0 // pred_check
    _
  $region15: #{stmha_block.10} parent=0 // pred_check_branch
    %19 = sbr.rel (0) target = $region17
  $region16: #{stmha_block.10} parent=0 // pred_region
    _
  $region17: #{stmha_block.10} parent=0 // pred_fallthru
    _
  // Predicated region
  $region18: #{stmha_block.10} parent=0 // pred_check
    _
  $region19: #{stmha_block.10} parent=0 // pred_check_branch
    %21 = sbr.rel (0) target = $region21
  $region20: #{stmha_block.10} parent=0 // pred_region
    _
  $region21: #{stmha_block.10} parent=0 // pred_fallthru
    _
  // Predicated region
  $region22: #{stmha_block.10} parent=0 // pred_check
    _
  $region23: #{stmha_block.10} parent=0 // pred_check_branch
    %23 = sbr.rel (0) target = $region25
  $region24: #{stmha_block.10} parent=0 // pred_region
    _
  $region25: #{stmha_block.10} parent=0 // pred_fallthru
    _
  // Predicated region
  $region26: #{stmha_block.10} parent=0 // pred_check
    _
  $region27: #{stmha_block.10} parent=0 // pred_check_branch
    %25 = sbr.rel (0) target = $region29
  $region28: #{stmha_block.10} parent=0 // pred_region
    _
  $region29: #{stmha_block.10} parent=0 // pred_fallthru
    _
  %v26 = vld [vmem:[%s0] sm:$0xff]
  %v27 = vld [vmem:[%s0 + $0x8] sm:$0xff]
  %v28 = vld [vmem:[%s0 + $0x10] sm:$0xff]
  %v29 = vld [vmem:[%s0 + $0x18] sm:$0xff]
  %v30 = vld [vmem:[%s0 + $0x20] sm:$0xff]
  %v31 = vld [vmem:[%s0 + $0x28] sm:$0xff]
  %v32 = vld [vmem:[%s1] sm:$0xff]
  %v33 = vld [vmem:[%s1 + $0x8] sm:$0xff]
  %v34 = vld [vmem:[%s1 + $0x10] sm:$0xff]
  %v35 = vld [vmem:[%s1 + $0x18] sm:$0xff]
  %v36 = vld [vmem:[%s2] sm:$0x1]
  %v38 = vperm.slane %v36, 0
  %vm40 = vcmask 261120
  %v42 = vsel %vm40, %v26, 0
  %v45 = vsel %vm40, %v27, 0
  %v48 = vsel %vm40, %v28, 0
  %v51 = vsel %vm40, %v29, 0
  %v54 = vsel %vm40, %v30, 0
  %v57 = vsel %vm40, %v31, 0
  %59 = vmatpush.msra.mxu0 0.0
  %60 = vmatpush.msra.mxu0 0.0
  %61 = vmatpush.msra.mxu0 0.0
  %62 = vmatpush.msra.mxu0 0.0
  %63 = vmatpush.msra.mxu0 0.0
  %64 = vmatpush.msra.mxu0 0.0
  %65 = vmatpush.msra.mxu0 0.0
  %66 = vmatpush.msra.mxu0 0.0
  %67 = vmatpush.msra.mxu0 0.0
  %68 = vmatpush.msra.mxu0 0.0
  %69 = vmatpush.msra.mxu0 0.0
  %70 = vmatpush.msra.mxu0 0.0
  %71 = vmatpush.msra.mxu0 %v35
  %72 = vmatpush.msra.mxu0 %v34
  %73 = vmatpush.msra.mxu0 %v33
  %74 = vmatpush.msra.mxu0 %v32
  %75 = vmatmul.f32.gmra.mxu0 %v42
  %v76 = vpop.f32.mrf.mxu0
  %v77 = vadd.f32 %v38, %v76
  %78 = vmatmul.f32.gmra.mxu0 %v45
  %v79 = vpop.f32.mrf.mxu0
  %v80 = vadd.f32 %v38, %v79
  %81 = vmatmul.f32.gmra.mxu0 %v48
  %v82 = vpop.f32.mrf.mxu0
  %v83 = vadd.f32 %v38, %v82
  %84 = vmatmul.f32.gmra.mxu0 %v51
  %v85 = vpop.f32.mrf.mxu0
  %v86 = vadd.f32 %v38, %v85
  %87 = vmatmul.f32.gmra.mxu0 %v54
  %v88 = vpop.f32.mrf.mxu0
  %v89 = vadd.f32 %v38, %v88
  %90 = vmatmul.f32.gmra.mxu0 %v57
  %v91 = vpop.f32.mrf.mxu0
  %v92 = vadd.f32 %v38, %v91
  %93 = vdwg.mxu0
  %v94 = vmax.f32 %v77, 0.0
  %v95 = vmax.f32 %v80, 0.0
  %v96 = vmax.f32 %v83, 0.0
  %v97 = vmax.f32 %v86, 0.0
  %v98 = vmax.f32 %v89, 0.0
  %v99 = vmax.f32 %v92, 0.0
  %v100 = vld [vmem:[%s3] sm:$0xff]
  %v101 = vld [vmem:[%s3 + $0x8] sm:$0xff]
  %v102 = vld [vmem:[%s3 + $0x10] sm:$0xff]
  %v103 = vld [vmem:[%s3 + $0x18] sm:$0xff]
  %v104 = vld [vmem:[%s3 + $0x20] sm:$0xff]
  %v105 = vld [vmem:[%s3 + $0x28] sm:$0xff]
  %v106 = vld [vmem:[%s3 + $0x30] sm:$0xff]
  %v107 = vld [vmem:[%s3 + $0x38] sm:$0xff]
  %v108 = vld [vmem:[%s4] sm:$0x1]
  %v110 = vperm.slane %v108, 0
  %vm112 = vcmask 523264
  %v114 = vsel %vm112, %v94, 0
  %v117 = vsel %vm112, %v95, 0
  %v120 = vsel %vm112, %v96, 0
  %v123 = vsel %vm112, %v97, 0
  %v126 = vsel %vm112, %v98, 0
  %v129 = vsel %vm112, %v99, 0
  %131 = vmatpush.msra.mxu0 0.0
  %132 = vmatpush.msra.mxu0 0.0
  %133 = vmatpush.msra.mxu0 0.0
  %134 = vmatpush.msra.mxu0 0.0
  %135 = vmatpush.msra.mxu0 0.0
  %136 = vmatpush.msra.mxu0 0.0
  %137 = vmatpush.msra.mxu0 0.0
  %138 = vmatpush.msra.mxu0 0.0
  %139 = vmatpush.msra.mxu0 %v107
  %140 = vmatpush.msra.mxu0 %v106
  %141 = vmatpush.msra.mxu0 %v105
  %142 = vmatpush.msra.mxu0 %v104
  %143 = vmatpush.msra.mxu0 %v103
  %144 = vmatpush.msra.mxu0 %v102
  %145 = vmatpush.msra.mxu0 %v101
  %146 = vmatpush.msra.mxu0 %v100
  %147 = vmatmul.f32.gmra.mxu0 %v114
  %v148 = vpop.f32.mrf.mxu0
  %v149 = vadd.f32 %v110, %v148
  %150 = vmatmul.f32.gmra.mxu0 %v117
  %v151 = vpop.f32.mrf.mxu0
  %v152 = vadd.f32 %v110, %v151
  %153 = vmatmul.f32.gmra.mxu0 %v120
  %v154 = vpop.f32.mrf.mxu0
  %v155 = vadd.f32 %v110, %v154
  %156 = vmatmul.f32.gmra.mxu0 %v123
  %v157 = vpop.f32.mrf.mxu0
  %v158 = vadd.f32 %v110, %v157
  %159 = vmatmul.f32.gmra.mxu0 %v126
  %v160 = vpop.f32.mrf.mxu0
  %v161 = vadd.f32 %v110, %v160
  %162 = vmatmul.f32.gmra.mxu0 %v129
  %v163 = vpop.f32.mrf.mxu0
  %v164 = vadd.f32 %v110, %v163
  %165 = vdwg.mxu0
  %v166 = vadd.f32 %v149, %v26
  %v167 = vadd.f32 %v152, %v27
  %v168 = vadd.f32 %v155, %v28
  %v169 = vadd.f32 %v158, %v29
  %v170 = vadd.f32 %v161, %v30
  %v171 = vadd.f32 %v164, %v31
  %v172 = vsel %vm40, %v166, 0.0
  %173 = vadd.xlane.f32.xlu0 %v172
  %v174 = vpop.xlane.xlu0 %173
  %v175 = vsel %vm40, %v167, 0.0
  %176 = vadd.xlane.f32.xlu0 %v175
  %v177 = vpop.xlane.xlu0 %176
  %v178 = vsel %vm40, %v168, 0.0
  %179 = vadd.xlane.f32.xlu0 %v178
  %v180 = vpop.xlane.xlu0 %179
  %v181 = vsel %vm40, %v169, 0.0
  %182 = vadd.xlane.f32.xlu0 %v181
  %v183 = vpop.xlane.xlu0 %182
  %v184 = vsel %vm40, %v170, 0.0
  %185 = vadd.xlane.f32.xlu0 %v184
  %v186 = vpop.xlane.xlu0 %185
  %v187 = vsel %vm40, %v171, 0.0
  %188 = vadd.xlane.f32.xlu0 %v187
  %v189 = vpop.xlane.xlu0 %188
  %v190 = vrcp.pop 32.0
  %v191 = vmul.f32 32.0, %v190
  %v192 = vsub.f32 1.0, %v191
  %v193 = vmul.f32 %v190, %v192
  %v194 = vadd.f32 %v190, %v193
  %vm195 = vweird.f32 %v190
  %v196 = vsel %vm195, %v190, %v194
  %v197 = vmul.f32 %v174, %v196
  %v198 = vmul.f32 %v177, %v196
  %v199 = vmul.f32 %v180, %v196
  %v200 = vmul.f32 %v183, %v196
  %v201 = vmul.f32 %v186, %v196
  %v202 = vmul.f32 %v189, %v196
  %v203 = vsub.f32 %v166, %v197
  %v204 = vsub.f32 %v167, %v198
  %v205 = vsub.f32 %v168, %v199
  %v206 = vsub.f32 %v169, %v200
  %v207 = vsub.f32 %v170, %v201
  %v208 = vsub.f32 %v171, %v202
  %v209 = vmul.f32 %v203, %v203
  %v210 = vmul.f32 %v204, %v204
  %v211 = vmul.f32 %v205, %v205
  %v212 = vmul.f32 %v206, %v206
  %v213 = vmul.f32 %v207, %v207
  %v214 = vmul.f32 %v208, %v208
  %v215 = vsel %vm40, %v209, 0.0
  %216 = vadd.xlane.f32.xlu0 %v215
  %v217 = vpop.xlane.xlu0 %216
  %v218 = vsel %vm40, %v210, 0.0
  %219 = vadd.xlane.f32.xlu0 %v218
  %v220 = vpop.xlane.xlu0 %219
  %v221 = vsel %vm40, %v211, 0.0
  %222 = vadd.xlane.f32.xlu0 %v221
  %v223 = vpop.xlane.xlu0 %222
  %v224 = vsel %vm40, %v212, 0.0
  %225 = vadd.xlane.f32.xlu0 %v224
  %v226 = vpop.xlane.xlu0 %225
  %v227 = vsel %vm40, %v213, 0.0
  %228 = vadd.xlane.f32.xlu0 %v227
  %v229 = vpop.xlane.xlu0 %228
  %v230 = vsel %vm40, %v214, 0.0
  %231 = vadd.xlane.f32.xlu0 %v230
  %v232 = vpop.xlane.xlu0 %231
  %v233 = vmul.f32 %v217, %v196
  %v234 = vmul.f32 %v220, %v196
  %v235 = vmul.f32 %v223, %v196
  %v236 = vmul.f32 %v226, %v196
  %v237 = vmul.f32 %v229, %v196
  %v238 = vmul.f32 %v232, %v196
  %v239 = vadd.f32 %v233, 1e-06
  %v240 = vadd.f32 %v234, 1e-06
  %v241 = vadd.f32 %v235, 1e-06
  %v242 = vadd.f32 %v236, 1e-06
  %v243 = vadd.f32 %v237, 1e-06
  %v244 = vadd.f32 %v238, 1e-06
  %v245 = vrsqrt.pop %v239
  %v246 = vmul.f32 %v245, %v239
  %v247 = vmul.f32 %v246, %v245
  %v248 = vmul.f32 0.5, %v247
  %v249 = vsub.f32 1.5, %v248
  %v250 = vmul.f32 %v245, %v249
  %vm251 = vweird.f32 %v239
  %vm252 = vweird.f32 %v245
  %vm253 = vmor %vm251, %vm252
  %v254 = vsel %vm253, %v245, %v250
  %v255 = vrsqrt.pop %v240
  %v256 = vmul.f32 %v255, %v240
  %v257 = vmul.f32 %v256, %v255
  %v258 = vmul.f32 0.5, %v257
  %v259 = vsub.f32 1.5, %v258
  %v260 = vmul.f32 %v255, %v259
  %vm261 = vweird.f32 %v240
  %vm262 = vweird.f32 %v255
  %vm263 = vmor %vm261, %vm262
  %v264 = vsel %vm263, %v255, %v260
  %v265 = vrsqrt.pop %v241
  %v266 = vmul.f32 %v265, %v241
  %v267 = vmul.f32 %v266, %v265
  %v268 = vmul.f32 0.5, %v267
  %v269 = vsub.f32 1.5, %v268
  %v270 = vmul.f32 %v265, %v269
  %vm271 = vweird.f32 %v241
  %vm272 = vweird.f32 %v265
  %vm273 = vmor %vm271, %vm272
  %v274 = vsel %vm273, %v265, %v270
  %v275 = vrsqrt.pop %v242
  %v276 = vmul.f32 %v275, %v242
  %v277 = vmul.f32 %v276, %v275
  %v278 = vmul.f32 0.5, %v277
  %v279 = vsub.f32 1.5, %v278
  %v280 = vmul.f32 %v275, %v279
  %vm281 = vweird.f32 %v242
  %vm282 = vweird.f32 %v275
  %vm283 = vmor %vm281, %vm282
  %v284 = vsel %vm283, %v275, %v280
  %v285 = vrsqrt.pop %v243
  %v286 = vmul.f32 %v285, %v243
  %v287 = vmul.f32 %v286, %v285
  %v288 = vmul.f32 0.5, %v287
  %v289 = vsub.f32 1.5, %v288
  %v290 = vmul.f32 %v285, %v289
  %vm291 = vweird.f32 %v243
  %vm292 = vweird.f32 %v285
  %vm293 = vmor %vm291, %vm292
  %v294 = vsel %vm293, %v285, %v290
  %v295 = vrsqrt.pop %v244
  %v296 = vmul.f32 %v295, %v244
  %v297 = vmul.f32 %v296, %v295
  %v298 = vmul.f32 0.5, %v297
  %v299 = vsub.f32 1.5, %v298
  %v300 = vmul.f32 %v295, %v299
  %vm301 = vweird.f32 %v244
  %vm302 = vweird.f32 %v295
  %vm303 = vmor %vm301, %vm302
  %v304 = vsel %vm303, %v295, %v300
  %v305 = vmul.f32 %v203, %v254
  %v306 = vmul.f32 %v204, %v264
  %v307 = vmul.f32 %v205, %v274
  %v308 = vmul.f32 %v206, %v284
  %v309 = vmul.f32 %v207, %v294
  %v310 = vmul.f32 %v208, %v304
  %v311 = vld [vmem:[%s5] sm:$0x1]
  %v313 = vperm.slane %v311, 0
  %v315 = vmul.f32 %v305, %v313
  %v316 = vmul.f32 %v306, %v313
  %v317 = vmul.f32 %v307, %v313
  %v318 = vmul.f32 %v308, %v313
  %v319 = vmul.f32 %v309, %v313
  %v320 = vmul.f32 %v310, %v313
  %v321 = vld [vmem:[%s6] sm:$0x1]
  %v323 = vperm.slane %v321, 0
  %v325 = vadd.f32 %v315, %v323
  %v326 = vadd.f32 %v316, %v323
  %v327 = vadd.f32 %v317, %v323
  %v328 = vadd.f32 %v318, %v323
  %v329 = vadd.f32 %v319, %v323
  %v330 = vadd.f32 %v320, %v323
  %331 = vst.msk [vmem:[%s7] sm:$0xff] %vm40, %v325
  %332 = vst.msk [vmem:[%s7 + $0x8] sm:$0xff] %vm40, %v326
  %333 = vst.msk [vmem:[%s7 + $0x10] sm:$0xff] %vm40, %v327
  %334 = vst.msk [vmem:[%s7 + $0x18] sm:$0xff] %vm40, %v328
  %335 = vst.msk [vmem:[%s7 + $0x20] sm:$0xff] %vm40, %v329
  %336 = vst.msk [vmem:[%s7 + $0x28] sm:$0xff] %vm40, %v330
  // Predicated region
  $region30: #{stmha_block.10} parent=0 // pred_check
    _
  $region31: #{stmha_block.10} parent=0 // pred_check_branch
    %338 = sbr.rel (0) target = $region33
  $region32: #{stmha_block.10} parent=0 // pred_region
    _
  $region33: #{stmha_block.10} parent=0 // pred_fallthru
    _
  // Predicated region
  $region34: #{stmha_block.10} parent=0 // pred_check
    _
  $region35: #{stmha_block.10} parent=0 // pred_check_branch
    %340 = sbr.rel (0) target = $region37
  $region36: #{stmha_block.10} parent=0 // pred_region
    _
  $region37: #{stmha_block.10} parent=0 // pred_fallthru
    _

// kernel: stmha_block.13
$region0: #{stmha_block.13}
  #allocation0 [shape = 'u32[]', space=smem, size = 0x4, offset = 0x4, fixed_abs, tag = 'smem constant byte address 0x4 - core index']
  #allocation1 [shape = 'u32[72,128]{1,0:T(1,128)}', space=vmem, size = 0x9000, scoped, tag = 'internal scratch']
  %s0 = inlined_call_operand.vmem [shape: f32[48,32], index: 0, kind: input, shape index: {}]
  %s1 = inlined_call_operand.vmem [shape: f32[32,64], index: 1, kind: input, shape index: {}]
  %s2 = inlined_call_operand.vmem [shape: f32[1,64], index: 2, kind: input, shape index: {}]
  %s3 = inlined_call_operand.vmem [shape: f32[64,32], index: 3, kind: input, shape index: {}]
  %s4 = inlined_call_operand.vmem [shape: f32[1,32], index: 4, kind: input, shape index: {}]
  %s5 = inlined_call_operand.vmem [shape: f32[1,32], index: 5, kind: input, shape index: {}]
  %s6 = inlined_call_operand.vmem [shape: f32[1,32], index: 6, kind: input, shape index: {}]
  %s7 = inlined_call_operand.hbm [shape: f32[48,32], index: 7, kind: output, shape index: {}]
  %s8 = sld [smem:[#allocation0]]
  $region38: #{stmha_block.13} parent=0
    _
  %s10 = ssub.s32 1, %s8
  %s11 = scalar_select 0, %s10, %s8
  $region1: #{stmha_block.13} parent=0
    #allocation2 [shape = 'u8[24576]{0}', space=vmem, size = 0x6000, scoped, tag = 'output window, operand 0, single buffered']
    #allocation3 [shape = 's32[1]{0}', space=sflag, size = 0x4, scoped, tag = 'scoped memory for stmha_block.13']
    %12 = vsyncpa [#allocation3], 0
    // Predicated region
    $region2: #{stmha_block.13} parent=1 // pred_check
      _
    $region3: #{stmha_block.13} parent=1 // pred_check_branch
      %14 = sbr.rel (0) target = $region5
    $region4: #{stmha_block.13} parent=1 // pred_region
      _
    $region5: #{stmha_block.13} parent=1 // pred_fallthru
      _
    // Predicated region
    $region6: #{stmha_block.13} parent=1 // pred_check
      _
    $region7: #{stmha_block.13} parent=1 // pred_check_branch
      %16 = sbr.rel (0) target = $region9
    $region8: #{stmha_block.13} parent=1 // pred_region
      _
    $region9: #{stmha_block.13} parent=1 // pred_fallthru
      _
    // Predicated region
    $region10: #{stmha_block.13} parent=1 // pred_check
      _
    $region11: #{stmha_block.13} parent=1 // pred_check_branch
      %18 = sbr.rel (0) target = $region13
    $region12: #{stmha_block.13} parent=1 // pred_region
      _
    $region13: #{stmha_block.13} parent=1 // pred_fallthru
      _
    // Predicated region
    $region14: #{stmha_block.13} parent=1 // pred_check
      _
    $region15: #{stmha_block.13} parent=1 // pred_check_branch
      %20 = sbr.rel (0) target = $region17
    $region16: #{stmha_block.13} parent=1 // pred_region
      _
    $region17: #{stmha_block.13} parent=1 // pred_fallthru
      _
    // Predicated region
    $region18: #{stmha_block.13} parent=1 // pred_check
      _
    $region19: #{stmha_block.13} parent=1 // pred_check_branch
      %22 = sbr.rel (0) target = $region21
    $region20: #{stmha_block.13} parent=1 // pred_region
      _
    $region21: #{stmha_block.13} parent=1 // pred_fallthru
      _
    // Predicated region
    $region22: #{stmha_block.13} parent=1 // pred_check
      _
    $region23: #{stmha_block.13} parent=1 // pred_check_branch
      %24 = sbr.rel (0) target = $region25
    $region24: #{stmha_block.13} parent=1 // pred_region
      _
    $region25: #{stmha_block.13} parent=1 // pred_fallthru
      _
    // Predicated region
    $region26: #{stmha_block.13} parent=1 // pred_check
      _
    $region27: #{stmha_block.13} parent=1 // pred_check_branch
      %26 = sbr.rel (0) target = $region29
    $region28: #{stmha_block.13} parent=1 // pred_region
      _
    $region29: #{stmha_block.13} parent=1 // pred_fallthru
      _
    %v27 = vld [vmem:[%s0] sm:$0xff]
    %v28 = vld [vmem:[%s0 + $0x8] sm:$0xff]
    %v29 = vld [vmem:[%s0 + $0x10] sm:$0xff]
    %v30 = vld [vmem:[%s0 + $0x18] sm:$0xff]
    %v31 = vld [vmem:[%s0 + $0x20] sm:$0xff]
    %v32 = vld [vmem:[%s0 + $0x28] sm:$0xff]
    %v33 = vld [vmem:[%s1] sm:$0xff]
    %v34 = vld [vmem:[%s1 + $0x8] sm:$0xff]
    %v35 = vld [vmem:[%s1 + $0x10] sm:$0xff]
    %v36 = vld [vmem:[%s1 + $0x18] sm:$0xff]
    %v37 = vld [vmem:[%s2] sm:$0x1]
    %v39 = vperm.slane %v37, 0
    %vm41 = vcmask 261120
    %v43 = vsel %vm41, %v27, 0
    %v46 = vsel %vm41, %v28, 0
    %v49 = vsel %vm41, %v29, 0
    %v52 = vsel %vm41, %v30, 0
    %v55 = vsel %vm41, %v31, 0
    %v58 = vsel %vm41, %v32, 0
    %60 = vmatpush.msra.mxu0 0.0
    %61 = vmatpush.msra.mxu0 0.0
    %62 = vmatpush.msra.mxu0 0.0
    %63 = vmatpush.msra.mxu0 0.0
    %64 = vmatpush.msra.mxu0 0.0
    %65 = vmatpush.msra.mxu0 0.0
    %66 = vmatpush.msra.mxu0 0.0
    %67 = vmatpush.msra.mxu0 0.0
    %68 = vmatpush.msra.mxu0 0.0
    %69 = vmatpush.msra.mxu0 0.0
    %70 = vmatpush.msra.mxu0 0.0
    %71 = vmatpush.msra.mxu0 0.0
    %72 = vmatpush.msra.mxu0 %v36
    %73 = vmatpush.msra.mxu0 %v35
    %74 = vmatpush.msra.mxu0 %v34
    %75 = vmatpush.msra.mxu0 %v33
    %76 = vmatmul.f32.gmra.mxu0 %v43
    %v77 = vpop.f32.mrf.mxu0
    %v78 = vadd.f32 %v39, %v77
    %79 = vmatmul.f32.gmra.mxu0 %v46
    %v80 = vpop.f32.mrf.mxu0
    %v81 = vadd.f32 %v39, %v80
    %82 = vmatmul.f32.gmra.mxu0 %v49
    %v83 = vpop.f32.mrf.mxu0
    %v84 = vadd.f32 %v39, %v83
    %85 = vmatmul.f32.gmra.mxu0 %v52
    %v86 = vpop.f32.mrf.mxu0
    %v87 = vadd.f32 %v39, %v86
    %88 = vmatmul.f32.gmra.mxu0 %v55
    %v89 = vpop.f32.mrf.mxu0
    %v90 = vadd.f32 %v39, %v89
    %91 = vmatmul.f32.gmra.mxu0 %v58
    %v92 = vpop.f32.mrf.mxu0
    %v93 = vadd.f32 %v39, %v92
    %94 = vdwg.mxu0
    %v95 = vmax.f32 %v78, 0.0
    %v96 = vmax.f32 %v81, 0.0
    %v97 = vmax.f32 %v84, 0.0
    %v98 = vmax.f32 %v87, 0.0
    %v99 = vmax.f32 %v90, 0.0
    %v100 = vmax.f32 %v93, 0.0
    %v101 = vld [vmem:[%s3] sm:$0xff]
    %v102 = vld [vmem:[%s3 + $0x8] sm:$0xff]
    %v103 = vld [vmem:[%s3 + $0x10] sm:$0xff]
    %v104 = vld [vmem:[%s3 + $0x18] sm:$0xff]
    %v105 = vld [vmem:[%s3 + $0x20] sm:$0xff]
    %v106 = vld [vmem:[%s3 + $0x28] sm:$0xff]
    %v107 = vld [vmem:[%s3 + $0x30] sm:$0xff]
    %v108 = vld [vmem:[%s3 + $0x38] sm:$0xff]
    %v109 = vld [vmem:[%s4] sm:$0x1]
    %v111 = vperm.slane %v109, 0
    %vm113 = vcmask 523264
    %v115 = vsel %vm113, %v95, 0
    %v118 = vsel %vm113, %v96, 0
    %v121 = vsel %vm113, %v97, 0
    %v124 = vsel %vm113, %v98, 0
    %v127 = vsel %vm113, %v99, 0
    %v130 = vsel %vm113, %v100, 0
    %132 = vmatpush.msra.mxu0 0.0
    %133 = vmatpush.msra.mxu0 0.0
    %134 = vmatpush.msra.mxu0 0.0
    %135 = vmatpush.msra.mxu0 0.0
    %136 = vmatpush.msra.mxu0 0.0
    %137 = vmatpush.msra.mxu0 0.0
    %138 = vmatpush.msra.mxu0 0.0
    %139 = vmatpush.msra.mxu0 0.0
    %140 = vmatpush.msra.mxu0 %v108
    %141 = vmatpush.msra.mxu0 %v107
    %142 = vmatpush.msra.mxu0 %v106
    %143 = vmatpush.msra.mxu0 %v105
    %144 = vmatpush.msra.mxu0 %v104
    %145 = vmatpush.msra.mxu0 %v103
    %146 = vmatpush.msra.mxu0 %v102
    %147 = vmatpush.msra.mxu0 %v101
    %148 = vmatmul.f32.gmra.mxu0 %v115
    %v149 = vpop.f32.mrf.mxu0
    %v150 = vadd.f32 %v111, %v149
    %151 = vmatmul.f32.gmra.mxu0 %v118
    %v152 = vpop.f32.mrf.mxu0
    %v153 = vadd.f32 %v111, %v152
    %154 = vmatmul.f32.gmra.mxu0 %v121
    %v155 = vpop.f32.mrf.mxu0
    %v156 = vadd.f32 %v111, %v155
    %157 = vmatmul.f32.gmra.mxu0 %v124
    %v158 = vpop.f32.mrf.mxu0
    %v159 = vadd.f32 %v111, %v158
    %160 = vmatmul.f32.gmra.mxu0 %v127
    %v161 = vpop.f32.mrf.mxu0
    %v162 = vadd.f32 %v111, %v161
    %163 = vmatmul.f32.gmra.mxu0 %v130
    %v164 = vpop.f32.mrf.mxu0
    %v165 = vadd.f32 %v111, %v164
    %166 = vdwg.mxu0
    %v167 = vadd.f32 %v150, %v27
    %v168 = vadd.f32 %v153, %v28
    %v169 = vadd.f32 %v156, %v29
    %v170 = vadd.f32 %v159, %v30
    %v171 = vadd.f32 %v162, %v31
    %v172 = vadd.f32 %v165, %v32
    %v173 = vsel %vm41, %v167, 0.0
    %174 = vadd.xlane.f32.xlu0 %v173
    %v175 = vpop.xlane.xlu0 %174
    %v176 = vsel %vm41, %v168, 0.0
    %177 = vadd.xlane.f32.xlu0 %v176
    %v178 = vpop.xlane.xlu0 %177
    %v179 = vsel %vm41, %v169, 0.0
    %180 = vadd.xlane.f32.xlu0 %v179
    %v181 = vpop.xlane.xlu0 %180
    %v182 = vsel %vm41, %v170, 0.0
    %183 = vadd.xlane.f32.xlu0 %v182
    %v184 = vpop.xlane.xlu0 %183
    %v185 = vsel %vm41, %v171, 0.0
    %186 = vadd.xlane.f32.xlu0 %v185
    %v187 = vpop.xlane.xlu0 %186
    %v188 = vsel %vm41, %v172, 0.0
    %189 = vadd.xlane.f32.xlu0 %v188
    %v190 = vpop.xlane.xlu0 %189
    %v191 = vrcp.pop 32.0
    %v192 = vmul.f32 32.0, %v191
    %v193 = vsub.f32 1.0, %v192
    %v194 = vmul.f32 %v191, %v193
    %v195 = vadd.f32 %v191, %v194
    %vm196 = vweird.f32 %v191
    %v197 = vsel %vm196, %v191, %v195
    %v198 = vmul.f32 %v175, %v197
    %v199 = vmul.f32 %v178, %v197
    %v200 = vmul.f32 %v181, %v197
    %v201 = vmul.f32 %v184, %v197
    %v202 = vmul.f32 %v187, %v197
    %v203 = vmul.f32 %v190, %v197
    %v204 = vsub.f32 %v167, %v198
    %v205 = vsub.f32 %v168, %v199
    %v206 = vsub.f32 %v169, %v200
    %v207 = vsub.f32 %v170, %v201
    %v208 = vsub.f32 %v171, %v202
    %v209 = vsub.f32 %v172, %v203
    %v210 = vmul.f32 %v204, %v204
    %v211 = vmul.f32 %v205, %v205
    %v212 = vmul.f32 %v206, %v206
    %v213 = vmul.f32 %v207, %v207
    %v214 = vmul.f32 %v208, %v208
    %v215 = vmul.f32 %v209, %v209
    %v216 = vsel %vm41, %v210, 0.0
    %217 = vadd.xlane.f32.xlu0 %v216
    %v218 = vpop.xlane.xlu0 %217
    %v219 = vsel %vm41, %v211, 0.0
    %220 = vadd.xlane.f32.xlu0 %v219
    %v221 = vpop.xlane.xlu0 %220
    %v222 = vsel %vm41, %v212, 0.0
    %223 = vadd.xlane.f32.xlu0 %v222
    %v224 = vpop.xlane.xlu0 %223
    %v225 = vsel %vm41, %v213, 0.0
    %226 = vadd.xlane.f32.xlu0 %v225
    %v227 = vpop.xlane.xlu0 %226
    %v228 = vsel %vm41, %v214, 0.0
    %229 = vadd.xlane.f32.xlu0 %v228
    %v230 = vpop.xlane.xlu0 %229
    %v231 = vsel %vm41, %v215, 0.0
    %232 = vadd.xlane.f32.xlu0 %v231
    %v233 = vpop.xlane.xlu0 %232
    %v234 = vmul.f32 %v218, %v197
    %v235 = vmul.f32 %v221, %v197
    %v236 = vmul.f32 %v224, %v197
    %v237 = vmul.f32 %v227, %v197
    %v238 = vmul.f32 %v230, %v197
    %v239 = vmul.f32 %v233, %v197
    %v240 = vadd.f32 %v234, 1e-06
    %v241 = vadd.f32 %v235, 1e-06
    %v242 = vadd.f32 %v236, 1e-06
    %v243 = vadd.f32 %v237, 1e-06
    %v244 = vadd.f32 %v238, 1e-06
    %v245 = vadd.f32 %v239, 1e-06
    %v246 = vrsqrt.pop %v240
    %v247 = vmul.f32 %v246, %v240
    %v248 = vmul.f32 %v247, %v246
    %v249 = vmul.f32 0.5, %v248
    %v250 = vsub.f32 1.5, %v249
    %v251 = vmul.f32 %v246, %v250
    %vm252 = vweird.f32 %v240
    %vm253 = vweird.f32 %v246
    %vm254 = vmor %vm252, %vm253
    %v255 = vsel %vm254, %v246, %v251
    %v256 = vrsqrt.pop %v241
    %v257 = vmul.f32 %v256, %v241
    %v258 = vmul.f32 %v257, %v256
    %v259 = vmul.f32 0.5, %v258
    %v260 = vsub.f32 1.5, %v259
    %v261 = vmul.f32 %v256, %v260
    %vm262 = vweird.f32 %v241
    %vm263 = vweird.f32 %v256
    %vm264 = vmor %vm262, %vm263
    %v265 = vsel %vm264, %v256, %v261
    %v266 = vrsqrt.pop %v242
    %v267 = vmul.f32 %v266, %v242
    %v268 = vmul.f32 %v267, %v266
    %v269 = vmul.f32 0.5, %v268
    %v270 = vsub.f32 1.5, %v269
    %v271 = vmul.f32 %v266, %v270
    %vm272 = vweird.f32 %v242
    %vm273 = vweird.f32 %v266
    %vm274 = vmor %vm272, %vm273
    %v275 = vsel %vm274, %v266, %v271
    %v276 = vrsqrt.pop %v243
    %v277 = vmul.f32 %v276, %v243
    %v278 = vmul.f32 %v277, %v276
    %v279 = vmul.f32 0.5, %v278
    %v280 = vsub.f32 1.5, %v279
    %v281 = vmul.f32 %v276, %v280
    %vm282 = vweird.f32 %v243
    %vm283 = vweird.f32 %v276
    %vm284 = vmor %vm282, %vm283
    %v285 = vsel %vm284, %v276, %v281
    %v286 = vrsqrt.pop %v244
    %v287 = vmul.f32 %v286, %v244
    %v288 = vmul.f32 %v287, %v286
    %v289 = vmul.f32 0.5, %v288
    %v290 = vsub.f32 1.5, %v289
    %v291 = vmul.f32 %v286, %v290
    %vm292 = vweird.f32 %v244
    %vm293 = vweird.f32 %v286
    %vm294 = vmor %vm292, %vm293
    %v295 = vsel %vm294, %v286, %v291
    %v296 = vrsqrt.pop %v245
    %v297 = vmul.f32 %v296, %v245
    %v298 = vmul.f32 %v297, %v296
    %v299 = vmul.f32 0.5, %v298
    %v300 = vsub.f32 1.5, %v299
    %v301 = vmul.f32 %v296, %v300
    %vm302 = vweird.f32 %v245
    %vm303 = vweird.f32 %v296
    %vm304 = vmor %vm302, %vm303
    %v305 = vsel %vm304, %v296, %v301
    %v306 = vmul.f32 %v204, %v255
    %v307 = vmul.f32 %v205, %v265
    %v308 = vmul.f32 %v206, %v275
    %v309 = vmul.f32 %v207, %v285
    %v310 = vmul.f32 %v208, %v295
    %v311 = vmul.f32 %v209, %v305
    %v312 = vld [vmem:[%s5] sm:$0x1]
    %v314 = vperm.slane %v312, 0
    %v316 = vmul.f32 %v306, %v314
    %v317 = vmul.f32 %v307, %v314
    %v318 = vmul.f32 %v308, %v314
    %v319 = vmul.f32 %v309, %v314
    %v320 = vmul.f32 %v310, %v314
    %v321 = vmul.f32 %v311, %v314
    %v322 = vld [vmem:[%s6] sm:$0x1]
    %v324 = vperm.slane %v322, 0
    %v326 = vadd.f32 %v316, %v324
    %v327 = vadd.f32 %v317, %v324
    %v328 = vadd.f32 %v318, %v324
    %v329 = vadd.f32 %v319, %v324
    %v330 = vadd.f32 %v320, %v324
    %v331 = vadd.f32 %v321, %v324
    %332 = vst.msk [vmem:[#allocation2] sm:$0xff] %vm41, %v326
    %333 = vst.msk [vmem:[#allocation2 + $0x8] sm:$0xff] %vm41, %v327
    %334 = vst.msk [vmem:[#allocation2 + $0x10] sm:$0xff] %vm41, %v328
    %335 = vst.msk [vmem:[#allocation2 + $0x18] sm:$0xff] %vm41, %v329
    %336 = vst.msk [vmem:[#allocation2 + $0x20] sm:$0xff] %vm41, %v330
    %337 = vst.msk [vmem:[#allocation2 + $0x28] sm:$0xff] %vm41, %v331
    // Predicated region
    $region30: #{stmha_block.13} parent=1 // pred_check
      _
    $region31: #{stmha_block.13} parent=1 // pred_check_branch
      %339 = sbr.rel (0) target = $region33
    $region32: #{stmha_block.13} parent=1 // pred_region
      %341 = vsyncadd [#allocation3], 0
      %s342 = sshll.u32 [#allocation2], 4
      %s343 = int_to_ptr.vmem [resolvable:$true] %s342
      %s344 = sshll.u32 %s7, 4
      %s345 = int_to_ptr.hbm [resolvable:$true] %s344
      %350 = dma.vmem_to_hbm [thread:$0]  %s343, 768, %s345, [#allocation3], 128, 128, 8
    $region33: #{stmha_block.13} parent=1 // pred_fallthru
      _
    // Predicated region
    $region34: #{stmha_block.13} parent=1 // pred_check
      _
    $region35: #{stmha_block.13} parent=1 // pred_check_branch
      %352 = sbr.rel (0) target = $region37
    $region36: #{stmha_block.13} parent=1 // pred_region
      %354 = dma.done [#allocation3], 768
    $region37: #{stmha_block.13} parent=1 // pred_fallthru
      _
    %355 = vsyncpa [#allocation3], 1

// kernel: stmha_block.11
$region0: #{stmha_block.11}
  #allocation0 [shape = 'u32[]', space=smem, size = 0x4, offset = 0x4, fixed_abs, tag = 'smem constant byte address 0x4 - core index']
  #allocation1 [shape = 'u32[72,128]{1,0:T(1,128)}', space=vmem, size = 0x9000, scoped, tag = 'internal scratch']
  %s0 = inlined_call_operand.vmem [shape: f32[6,8,32], index: 0, kind: input, shape index: {}]
  %s1 = inlined_call_operand.vmem [shape: f32[32,96], index: 1, kind: input, shape index: {}]
  %s2 = inlined_call_operand.vmem [shape: f32[1,96], index: 2, kind: input, shape index: {}]
  %s3 = inlined_call_operand.vmem [shape: f32[32,32], index: 3, kind: input, shape index: {}]
  %s4 = inlined_call_operand.vmem [shape: f32[1,32], index: 4, kind: input, shape index: {}]
  %s5 = inlined_call_operand.vmem [shape: f32[1,32], index: 5, kind: input, shape index: {}]
  %s6 = inlined_call_operand.vmem [shape: f32[1,32], index: 6, kind: input, shape index: {}]
  %s7 = inlined_call_operand.vmem [shape: f32[6,8,32], index: 7, kind: output, shape index: {}]
  %s8 = sld [smem:[#allocation0]]
  $region61: #{stmha_block.11} parent=0
    _
  %s10 = ssub.s32 1, %s8
  %s11 = scalar_select 0, %s10, %s8
  loop: start=0, step=1, limit=8
  $region2: #{stmha_block.11} parent=0 // loop_pre_header
    _
  $region3: #{stmha_block.11} parent=0 // loop_header
    %s13 = sphi 0, %s17
    %p14 = scmp.ge.s32.totalorder %s13, 8
    %s23 = sphi 0, %s25
    %s26 = sphi 0, %s23
    %s27 = sphi 0, %s26
    %s43 = sphi 0, %s27
    %s47 = sphi 0, %s47
    %s49 = sphi 0, %s47
    %s50 = sphi 0, %s49
    %s64 = sphi 0, %s50
    %s68 = sphi 0, %s68
    %s70 = sphi 0, %s68
    %s71 = sphi 0, %s70
    %s85 = sphi 0, %s71
    %s89 = sphi 0, %s89
    %s91 = sphi 0, %s89
    %s92 = sphi 0, %s91
    %s106 = sphi 0, %s92
    %s110 = sphi 0, %s110
    %s112 = sphi 0, %s110
    %s113 = sphi 0, %s112
    %s127 = sphi 0, %s113
    %s131 = sphi 0, %s131
    %s133 = sphi 0, %s131
    %s134 = sphi 0, %s133
    %s148 = sphi 0, %s134
    %s152 = sphi 0, %s152
    %s154 = sphi 0, %s152
    %s155 = sphi 0, %s154
    %s169 = sphi 0, %s155
    %s175 = sphi 0, %s177
    %s178 = sphi 0, %s175
    %s179 = sphi 0, %s178
    %s195 = sphi 0, %s179
  $region4: #{stmha_block.11} parent=0 // loop_header_branch
    %16 = sbr.rel (%p14) target = $region8
  $region5: #{stmha_block.11} parent=0 // loop_body
    %s18 = ssub.s32 %s13, 1
    %s19 = ssub.s32 %s13, 2
    %s20 = sadd.s32 %s13, 1
    %s21 = ssub.s32 %s13, %s20
    %p22 = scmp.eq.s32.totalorder %s21, 0
    %s24 = sadd.s32 %s23, 1
    %s25 = scalar_select %p22, %s23, %s24
    %p28 = pneg %p22
    %p29 = scmp.eq.s32.totalorder %s13, 5
    %p30 = por %p28, %p29
    %p31 = scmp.ne.s32.totalorder %s23, %s26
    %p32 = scmp.eq.s32.totalorder %s13, 0
    %p33 = por %p31, %p32
    %p34 = scmp.ne.s32.totalorder %s23, %s26
    %p35 = scmp.eq.s32.totalorder %s18, 5
    %p36 = por %p34, %p35
    %p37 = scmp.ne.s32.totalorder %s26, %s27
    %p38 = scmp.eq.s32.totalorder %s18, 0
    %p39 = por %p37, %p38
    %p40 = scmp.ne.s32.totalorder %s26, %s27
    %p41 = scmp.eq.s32.totalorder %s19, 5
    %p42 = por %p40, %p41
    %p44 = scmp.ne.s32.totalorder %s27, %s43
    %p45 = scmp.eq.s32.totalorder %s19, 0
    %p46 = por %p44, %p45
    %s48 = sadd.s32 %s47, 1
    %p51 = scmp.eq.s32.totalorder %s13, 5
    %p52 = scmp.ne.s32.totalorder %s47, %s49
    %p53 = scmp.eq.s32.totalorder %s13, 0
    %p54 = por %p52, %p53
    %p55 = scmp.ne.s32.totalorder %s47, %s49
    %p56 = scmp.eq.s32.totalorder %s18, 5
    %p57 = por %p55, %p56
    %p58 = scmp.ne.s32.totalorder %s49, %s50
    %p59 = scmp.eq.s32.totalorder %s18, 0
    %p60 = por %p58, %p59
    %p61 = scmp.ne.s32.totalorder %s49, %s50
    %p62 = scmp.eq.s32.totalorder %s19, 5
    %p63 = por %p61, %p62
    %p65 = scmp.ne.s32.totalorder %s50, %s64
    %p66 = scmp.eq.s32.totalorder %s19, 0
    %p67 = por %p65, %p66
    %s69 = sadd.s32 %s68, 1
    %p72 = scmp.eq.s32.totalorder %s13, 5
    %p73 = scmp.ne.s32.totalorder %s68, %s70
    %p74 = scmp.eq.s32.totalorder %s13, 0
    %p75 = por %p73, %p74
    %p76 = scmp.ne.s32.totalorder %s68, %s70
    %p77 = scmp.eq.s32.totalorder %s18, 5
    %p78 = por %p76, %p77
    %p79 = scmp.ne.s32.totalorder %s70, %s71
    %p80 = scmp.eq.s32.totalorder %s18, 0
    %p81 = por %p79, %p80
    %p82 = scmp.ne.s32.totalorder %s70, %s71
    %p83 = scmp.eq.s32.totalorder %s19, 5
    %p84 = por %p82, %p83
    %p86 = scmp.ne.s32.totalorder %s71, %s85
    %p87 = scmp.eq.s32.totalorder %s19, 0
    %p88 = por %p86, %p87
    %s90 = sadd.s32 %s89, 1
    %p93 = scmp.eq.s32.totalorder %s13, 5
    %p94 = scmp.ne.s32.totalorder %s89, %s91
    %p95 = scmp.eq.s32.totalorder %s13, 0
    %p96 = por %p94, %p95
    %p97 = scmp.ne.s32.totalorder %s89, %s91
    %p98 = scmp.eq.s32.totalorder %s18, 5
    %p99 = por %p97, %p98
    %p100 = scmp.ne.s32.totalorder %s91, %s92
    %p101 = scmp.eq.s32.totalorder %s18, 0
    %p102 = por %p100, %p101
    %p103 = scmp.ne.s32.totalorder %s91, %s92
    %p104 = scmp.eq.s32.totalorder %s19, 5
    %p105 = por %p103, %p104
    %p107 = scmp.ne.s32.totalorder %s92, %s106
    %p108 = scmp.eq.s32.totalorder %s19, 0
    %p109 = por %p107, %p108
    %s111 = sadd.s32 %s110, 1
    %p114 = scmp.eq.s32.totalorder %s13, 5
    %p115 = scmp.ne.s32.totalorder %s110, %s112
    %p116 = scmp.eq.s32.totalorder %s13, 0
    %p117 = por %p115, %p116
    %p118 = scmp.ne.s32.totalorder %s110, %s112
    %p119 = scmp.eq.s32.totalorder %s18, 5
    %p120 = por %p118, %p119
    %p121 = scmp.ne.s32.totalorder %s112, %s113
    %p122 = scmp.eq.s32.totalorder %s18, 0
    %p123 = por %p121, %p122
    %p124 = scmp.ne.s32.totalorder %s112, %s113
    %p125 = scmp.eq.s32.totalorder %s19, 5
    %p126 = por %p124, %p125
    %p128 = scmp.ne.s32.totalorder %s113, %s127
    %p129 = scmp.eq.s32.totalorder %s19, 0
    %p130 = por %p128, %p129
    %s132 = sadd.s32 %s131, 1
    %p135 = scmp.eq.s32.totalorder %s13, 5
    %p136 = scmp.ne.s32.totalorder %s131, %s133
    %p137 = scmp.eq.s32.totalorder %s13, 0
    %p138 = por %p136, %p137
    %p139 = scmp.ne.s32.totalorder %s131, %s133
    %p140 = scmp.eq.s32.totalorder %s18, 5
    %p141 = por %p139, %p140
    %p142 = scmp.ne.s32.totalorder %s133, %s134
    %p143 = scmp.eq.s32.totalorder %s18, 0
    %p144 = por %p142, %p143
    %p145 = scmp.ne.s32.totalorder %s133, %s134
    %p146 = scmp.eq.s32.totalorder %s19, 5
    %p147 = por %p145, %p146
    %p149 = scmp.ne.s32.totalorder %s134, %s148
    %p150 = scmp.eq.s32.totalorder %s19, 0
    %p151 = por %p149, %p150
    %s153 = sadd.s32 %s152, 1
    %p156 = scmp.eq.s32.totalorder %s13, 5
    %p157 = scmp.ne.s32.totalorder %s152, %s154
    %p158 = scmp.eq.s32.totalorder %s13, 0
    %p159 = por %p157, %p158
    %p160 = scmp.ne.s32.totalorder %s152, %s154
    %p161 = scmp.eq.s32.totalorder %s18, 5
    %p162 = por %p160, %p161
    %p163 = scmp.ne.s32.totalorder %s154, %s155
    %p164 = scmp.eq.s32.totalorder %s18, 0
    %p165 = por %p163, %p164
    %p166 = scmp.ne.s32.totalorder %s154, %s155
    %p167 = scmp.eq.s32.totalorder %s19, 5
    %p168 = por %p166, %p167
    %p170 = scmp.ne.s32.totalorder %s155, %s169
    %p171 = scmp.eq.s32.totalorder %s19, 0
    %p172 = por %p170, %p171
    %s173 = ssub.s32 %s13, %s20
    %p174 = scmp.eq.s32.totalorder %s173, 0
    %s176 = sadd.s32 %s175, 1
    %s177 = scalar_select %p174, %s175, %s176
    %p180 = pneg %p174
    %p181 = scmp.eq.s32.totalorder %s13, 5
    %p182 = por %p180, %p181
    %p183 = scmp.ne.s32.totalorder %s175, %s178
    %p184 = scmp.eq.s32.totalorder %s13, 0
    %p185 = por %p183, %p184
    %p186 = scmp.ne.s32.totalorder %s175, %s178
    %p187 = scmp.eq.s32.totalorder %s18, 5
    %p188 = por %p186, %p187
    %p189 = scmp.ne.s32.totalorder %s178, %s179
    %p190 = scmp.eq.s32.totalorder %s18, 0
    %p191 = por %p189, %p190
    %p192 = scmp.ne.s32.totalorder %s178, %s179
    %p193 = scmp.eq.s32.totalorder %s19, 5
    %p194 = por %p192, %p193
    %p196 = scmp.ne.s32.totalorder %s179, %s195
    %p197 = scmp.eq.s32.totalorder %s19, 0
    %p198 = por %p196, %p197
    %p199 = scmp.le.s32.totalorder 1, %s13
    %p200 = scmp.lt.s32.totalorder %s13, 7
    %p201 = pnand %p199, %p200
    %p202 = pneg %p201
    // Predicated region
    $region9: #{stmha_block.11} parent=5 // pred_check
      _
    $region10: #{stmha_block.11} parent=5 // pred_check_branch
      %204 = sbr.rel (%p201) target = $region12
    $region11: #{stmha_block.11} parent=5 // pred_region
      %s205 = ssub.s32 %s13, 1
      // Predicated region
      $region13: #{stmha_block.11} parent=11 // pred_check
        %p206 = pneg %p60
      $region14: #{stmha_block.11} parent=11 // pred_check_branch
        %208 = sbr.rel (%p206) target = $region16
      $region15: #{stmha_block.11} parent=11 // pred_region
        _
      $region16: #{stmha_block.11} parent=11 // pred_fallthru
        _
      // Predicated region
      $region17: #{stmha_block.11} parent=11 // pred_check
        %p209 = pneg %p81
      $region18: #{stmha_block.11} parent=11 // pred_check_branch
        %211 = sbr.rel (%p209) target = $region20
      $region19: #{stmha_block.11} parent=11 // pred_region
        _
      $region20: #{stmha_block.11} parent=11 // pred_fallthru
        _
      // Predicated region
      $region21: #{stmha_block.11} parent=11 // pred_check
        %p212 = pneg %p102
      $region22: #{stmha_block.11} parent=11 // pred_check_branch
        %214 = sbr.rel (%p212) target = $region24
      $region23: #{stmha_block.11} parent=11 // pred_region
        _
      $region24: #{stmha_block.11} parent=11 // pred_fallthru
        _
      // Predicated region
      $region25: #{stmha_block.11} parent=11 // pred_check
        %p215 = pneg %p123
      $region26: #{stmha_block.11} parent=11 // pred_check_branch
        %217 = sbr.rel (%p215) target = $region28
      $region27: #{stmha_block.11} parent=11 // pred_region
        _
      $region28: #{stmha_block.11} parent=11 // pred_fallthru
        _
      // Predicated region
      $region29: #{stmha_block.11} parent=11 // pred_check
        %p218 = pneg %p144
      $region30: #{stmha_block.11} parent=11 // pred_check_branch
        %220 = sbr.rel (%p218) target = $region32
      $region31: #{stmha_block.11} parent=11 // pred_region
        _
      $region32: #{stmha_block.11} parent=11 // pred_fallthru
        _
      // Predicated region
      $region33: #{stmha_block.11} parent=11 // pred_check
        %p221 = pneg %p165
      $region34: #{stmha_block.11} parent=11 // pred_check_branch
        %223 = sbr.rel (%p221) target = $region36
      $region35: #{stmha_block.11} parent=11 // pred_region
        _
      $region36: #{stmha_block.11} parent=11 // pred_fallthru
        _
    $region12: #{stmha_block.11} parent=5 // pred_fallthru
      _
    %p224 = scmp.lt.s32.totalorder %s13, 6
    // Predicated region
    $region37: #{stmha_block.11} parent=5 // pred_check
      %p225 = pneg %p224
    $region38: #{stmha_block.11} parent=5 // pred_check_branch
      %227 = sbr.rel (%p225) target = $region40
    $region39: #{stmha_block.11} parent=5 // pred_region
      // Predicated region
      $region41: #{stmha_block.11} parent=39 // pred_check
        %p228 = pneg %p33
      $region42: #{stmha_block.11} parent=39 // pred_check_branch
        %230 = sbr.rel (%p228) target = $region44
      $region43: #{stmha_block.11} parent=39 // pred_region
        %p231 = scmp.lt.s32.totalorder %s13, 5
        %s232 = scalar_select %p231, %s13, 5
        %s233 = smul.addr %s232, 8
        %s234 = scalar_lea.vmem %s0, %s233
      $region44: #{stmha_block.11} parent=39 // pred_fallthru
        _
    $region40: #{stmha_block.11} parent=5 // pred_fallthru
      _
    %p235 = scmp.le.s32.totalorder 1, %s13
    %p236 = scmp.lt.s32.totalorder %s13, 7
    %p237 = pnand %p235, %p236
    %p238 = pneg %p237
    // Predicated region
    $region45: #{stmha_block.11} parent=5 // pred_check
      _
    $region46: #{stmha_block.11} parent=5 // pred_check_branch
      %240 = sbr.rel (%p237) target = $region48
    $region47: #{stmha_block.11} parent=5 // pred_region
      %s241 = ssub.s32 %s13, 1
      %p242 = scmp.lt.s32.totalorder %s18, 5
      %s243 = scalar_select %p242, %s18, 5
      %s244 = smul.addr %s243, 8
      %s245 = scalar_lea.vmem %s0, %s244
      %p246 = pneg %p39
      %p247 = pneg %p36
      %p248 = pneg %p60
      %p249 = pneg %p57
      %p250 = pneg %p81
      %p251 = pneg %p78
      %p252 = pneg %p102
      %p253 = pneg %p99
      %p254 = pneg %p123
      %p255 = pneg %p120
      %p256 = pneg %p144
      %p257 = pneg %p141
      %p258 = pneg %p165
      %p259 = pneg %p162
      %p260 = pneg %p191
      %p261 = pneg %p188
      %p262 = scmp.lt.s32.totalorder %s18, 5
      %s263 = scalar_select %p262, %s18, 5
      %s264 = smul.addr %s263, 8
      %s265 = scalar_lea.vmem %s7, %s264
      %p266 = scmp.lt.s32.totalorder %s18, 5
      %s267 = scalar_select %p266, %s18, 5
      %s268 = smul.addr %s267, 8
      %s269 = scalar_lea.vmem %s0, %s268
      %p270 = scmp.lt.s32.totalorder %s18, 5
      %s271 = scalar_select %p270, %s18, 5
      %s272 = smul.addr %s271, 8
      %s273 = scalar_lea.vmem %s7, %s272
      %v274 = vld [vmem:[%s269] sm:$0xff]
      %v275 = vld [vmem:[%s1] sm:$0xff]
      %v276 = vld [vmem:[%s1 + $0x8] sm:$0xff]
      %v277 = vld [vmem:[%s1 + $0x10] sm:$0xff]
      %v278 = vld [vmem:[%s1 + $0x18] sm:$0xff]
      %v279 = vld [vmem:[%s2] sm:$0x1]
      %v281 = vperm.slane %v279, 0
      %vm283 = vcmask 261120
      %v285 = vsel %vm283, %v274, 0
      %287 = vmatpush.msra.mxu0 0.0
      %288 = vmatpush.msra.mxu0 0.0
      %289 = vmatpush.msra.mxu0 0.0
      %290 = vmatpush.msra.mxu0 0.0
      %291 = vmatpush.msra.mxu0 0.0
      %292 = vmatpush.msra.mxu0 0.0
      %293 = vmatpush.msra.mxu0 0.0
      %294 = vmatpush.msra.mxu0 0.0
      %295 = vmatpush.msra.mxu0 0.0
      %296 = vmatpush.msra.mxu0 0.0
      %297 = vmatpush.msra.mxu0 0.0
      %298 = vmatpush.msra.mxu0 0.0
      %299 = vmatpush.msra.mxu0 %v278
      %300 = vmatpush.msra.mxu0 %v277
      %301 = vmatpush.msra.mxu0 %v276
      %302 = vmatpush.msra.mxu0 %v275
      %303 = vmatmul.f32.gmra.mxu0 %v285
      %v304 = vpop.f32.mrf.mxu0
      %v305 = vadd.f32 %v281, %v304
      %306 = vdwg.mxu0
      %v307 = vld [vmem:[%s3] sm:$0xff]
      %v308 = vld [vmem:[%s3 + $0x8] sm:$0xff]
      %v309 = vld [vmem:[%s3 + $0x10] sm:$0xff]
      %v310 = vld [vmem:[%s3 + $0x18] sm:$0xff]
      %312 = vrot.lane.b32.xlu0 %v305, 96
      %v313 = vpop.permute.xlu0 %312
      %vm314 = vcmask 64512
      %v315 = vsel %vm314, %v305, 0
      %v317 = vsel %vm314, %v313, 0
      %319 = vmatpush.xpose.msra.mxu0 0.0
      %320 = vmatpush.xpose.msra.mxu0 0.0
      %321 = vmatpush.xpose.msra.mxu0 0.0
      %322 = vmatpush.xpose.msra.mxu0 0.0
      %323 = vmatpush.xpose.msra.mxu0 0.0
      %324 = vmatpush.xpose.msra.mxu0 0.0
      %325 = vmatpush.xpose.msra.mxu0 0.0
      %326 = vmatpush.xpose.msra.mxu0 0.0
      %327 = vmatpush.xpose.msra.mxu0 0.0
      %328 = vmatpush.xpose.msra.mxu0 0.0
      %329 = vmatpush.xpose.msra.mxu0 0.0
      %330 = vmatpush.xpose.msra.mxu0 0.0
      %331 = vmatpush.xpose.msra.mxu0 0.0
      %332 = vmatpush.xpose.msra.mxu0 0.0
      %333 = vmatpush.xpose.msra.mxu0 0.0
      %334 = vmatpush.xpose.msra.mxu0 %v317
      %335 = vmatmul.f32.gmra.mxu0 %v315
      %v336 = vpop.f32.mrf.mxu0
      %v337 = vadd.f32 0.0, %v336
      %338 = vdwg.mxu0
      %v339 = vmul.f32 %v337, 0.35355338
      %v340 = vsel %vm314, %v339, -inf
      %341 = vmax.xlane.f32.xlu0 %v340
      %v342 = vpop.xlane.xlu0 %341
      %v343 = vsub.f32 %v339, %v342
      %v344 = vmul.f32 %v343, 1.442695
      %v345 = vpow.pop %v344
      %v346 = vsel %vm314, %v345, 0.0
      %347 = vadd.xlane.f32.xlu0 %v346
      %v348 = vpop.xlane.xlu0 %347
      %v349 = vrcp.pop %v348
      %v350 = vmul.f32 %v345, %v349
      %351 = vrot.lane.b32.xlu0 %v305, 64
      %v352 = vpop.permute.xlu0 %351
      %v355 = vsel %vm314, %v350, 0
      %357 = vmatpush.msra.mxu0 0.0
      %358 = vmatpush.msra.mxu0 0.0
      %359 = vmatpush.msra.mxu0 0.0
      %360 = vmatpush.msra.mxu0 0.0
      %361 = vmatpush.msra.mxu0 0.0
      %362 = vmatpush.msra.mxu0 0.0
      %363 = vmatpush.msra.mxu0 0.0
      %364 = vmatpush.msra.mxu0 0.0
      %365 = vmatpush.msra.mxu0 0.0
      %366 = vmatpush.msra.mxu0 0.0
      %367 = vmatpush.msra.mxu0 0.0
      %368 = vmatpush.msra.mxu0 0.0
      %369 = vmatpush.msra.mxu0 0.0
      %370 = vmatpush.msra.mxu0 0.0
      %371 = vmatpush.msra.mxu0 0.0
      %372 = vmatpush.msra.mxu0 %v352
      %373 = vmatmul.f32.gmra.mxu0 %v355
      %v374 = vpop.f32.mrf.mxu0
      %v375 = vadd.f32 0.0, %v374
      %376 = vdwg.mxu0
      %377 = vrot.lane.b32.xlu0 %v305, 120
      %v378 = vpop.permute.xlu0 %377
      %379 = vrot.lane.b32.xlu0 %v305, 88
      %v380 = vpop.permute.xlu0 %379
      %v381 = vsel %vm314, %v378, 0
      %v383 = vsel %vm314, %v380, 0
      %385 = vmatpush.xpose.msra.mxu0 0.0
      %386 = vmatpush.xpose.msra.mxu0 0.0
      %387 = vmatpush.xpose.msra.mxu0 0.0
      %388 = vmatpush.xpose.msra.mxu0 0.0
      %389 = vmatpush.xpose.msra.mxu0 0.0
      %390 = vmatpush.xpose.msra.mxu0 0.0
      %391 = vmatpush.xpose.msra.mxu0 0.0
      %392 = vmatpush.xpose.msra.mxu0 0.0
      %393 = vmatpush.xpose.msra.mxu0 0.0
      %394 = vmatpush.xpose.msra.mxu0 0.0
      %395 = vmatpush.xpose.msra.mxu0 0.0
      %396 = vmatpush.xpose.msra.mxu0 0.0
      %397 = vmatpush.xpose.msra.mxu0 0.0
      %398 = vmatpush.xpose.msra.mxu0 0.0
      %399 = vmatpush.xpose.msra.mxu0 0.0
      %400 = vmatpush.xpose.msra.mxu0 %v383
      %401 = vmatmul.f32.gmra.mxu0 %v381
      %v402 = vpop.f32.mrf.mxu0
      %v403 = vadd.f32 0.0, %v402
      %404 = vdwg.mxu0
      %v405 = vmul.f32 %v403, 0.35355338
      %v406 = vsel %vm314, %v405, -inf
      %407 = vmax.xlane.f32.xlu0 %v406
      %v408 = vpop.xlane.xlu0 %407
      %v409 = vsub.f32 %v405, %v408
      %v410 = vmul.f32 %v409, 1.442695
      %v411 = vpow.pop %v410
      %v412 = vsel %vm314, %v411, 0.0
      %413 = vadd.xlane.f32.xlu0 %v412
      %v414 = vpop.xlane.xlu0 %413
      %v415 = vrcp.pop %v414
      %v416 = vmul.f32 %v411, %v415
      %417 = vrot.lane.b32.xlu0 %v305, 56
      %v418 = vpop.permute.xlu0 %417
      %v421 = vsel %vm314, %v416, 0
      %423 = vmatpush.msra.mxu0 0.0
      %424 = vmatpush.msra.mxu0 0.0
      %425 = vmatpush.msra.mxu0 0.0
      %426 = vmatpush.msra.mxu0 0.0
      %427 = vmatpush.msra.mxu0 0.0
      %428 = vmatpush.msra.mxu0 0.0
      %429 = vmatpush.msra.mxu0 0.0
      %430 = vmatpush.msra.mxu0 0.0
      %431 = vmatpush.msra.mxu0 0.0
      %432 = vmatpush.msra.mxu0 0.0
      %433 = vmatpush.msra.mxu0 0.0
      %434 = vmatpush.msra.mxu0 0.0
      %435 = vmatpush.msra.mxu0 0.0
      %436 = vmatpush.msra.mxu0 0.0
      %437 = vmatpush.msra.mxu0 0.0
      %438 = vmatpush.msra.mxu0 %v418
      %439 = vmatmul.f32.gmra.mxu0 %v421
      %v440 = vpop.f32.mrf.mxu0
      %v441 = vadd.f32 0.0, %v440
      %442 = vdwg.mxu0
      %v444 = vsel %vm314, %v441, 0
      %446 = vmatpush.msra.mxu0 0.0
      %447 = vmatpush.msra.mxu0 0.0
      %448 = vmatpush.msra.mxu0 0.0
      %449 = vmatpush.msra.mxu0 0.0
      %450 = vmatpush.msra.mxu0 0.0
      %451 = vmatpush.msra.mxu0 0.0
      %452 = vmatpush.msra.mxu0 0.0
      %453 = vmatpush.msra.mxu0 0.0
      %454 = vmatpush.msra.mxu0 0.0
      %455 = vmatpush.msra.mxu0 0.0
      %456 = vmatpush.msra.mxu0 0.0
      %457 = vmatpush.msra.mxu0 0.0
      %458 = vmatpush.msra.mxu0 0.0
      %459 = vmatpush.msra.mxu0 0.0
      %460 = vmatpush.msra.mxu0 0.0
      %461 = vmatpush.msra.mxu0 %v308
      %462 = vmatmul.f32.gmra.mxu0 %v444
      %v463 = vpop.f32.mrf.mxu0
      %v464 = vadd.f32 0.0, %v463
      %465 = vdwg.mxu0
      %v467 = vsel %vm314, %v375, 0
      %469 = vmatpush.msra.mxu0 0.0
      %470 = vmatpush.msra.mxu0 0.0
      %471 = vmatpush.msra.mxu0 0.0
      %472 = vmatpush.msra.mxu0 0.0
      %473 = vmatpush.msra.mxu0 0.0
      %474 = vmatpush.msra.mxu0 0.0
      %475 = vmatpush.msra.mxu0 0.0
      %476 = vmatpush.msra.mxu0 0.0
      %477 = vmatpush.msra.mxu0 0.0
      %478 = vmatpush.msra.mxu0 0.0
      %479 = vmatpush.msra.mxu0 0.0
      %480 = vmatpush.msra.mxu0 0.0
      %481 = vmatpush.msra.mxu0 0.0
      %482 = vmatpush.msra.mxu0 0.0
      %483 = vmatpush.msra.mxu0 0.0
      %484 = vmatpush.msra.mxu0 %v307
      %485 = vmatmul.f32.gmra.mxu0 %v467
      %v486 = vpop.f32.mrf.mxu0
      %v487 = vadd.f32 %v464, %v486
      %488 = vdwg.mxu0
      %489 = vrot.lane.b32.xlu0 %v305, 112
      %v490 = vpop.permute.xlu0 %489
      %491 = vrot.lane.b32.xlu0 %v305, 80
      %v492 = vpop.permute.xlu0 %491
      %v493 = vsel %vm314, %v490, 0
      %v495 = vsel %vm314, %v492, 0
      %497 = vmatpush.xpose.msra.mxu0 0.0
      %498 = vmatpush.xpose.msra.mxu0 0.0
      %499 = vmatpush.xpose.msra.mxu0 0.0
      %500 = vmatpush.xpose.msra.mxu0 0.0
      %501 = vmatpush.xpose.msra.mxu0 0.0
      %502 = vmatpush.xpose.msra.mxu0 0.0
      %503 = vmatpush.xpose.msra.mxu0 0.0
      %504 = vmatpush.xpose.msra.mxu0 0.0
      %505 = vmatpush.xpose.msra.mxu0 0.0
      %506 = vmatpush.xpose.msra.mxu0 0.0
      %507 = vmatpush.xpose.msra.mxu0 0.0
      %508 = vmatpush.xpose.msra.mxu0 0.0
      %509 = vmatpush.xpose.msra.mxu0 0.0
      %510 = vmatpush.xpose.msra.mxu0 0.0
      %511 = vmatpush.xpose.msra.mxu0 0.0
      %512 = vmatpush.xpose.msra.mxu0 %v495
      %513 = vmatmul.f32.gmra.mxu0 %v493
      %v514 = vpop.f32.mrf.mxu0
      %v515 = vadd.f32 0.0, %v514
      %516 = vdwg.mxu0
      %v517 = vmul.f32 %v515, 0.35355338
      %v518 = vsel %vm314, %v517, -inf
      %519 = vmax.xlane.f32.xlu0 %v518
      %v520 = vpop.xlane.xlu0 %519
      %v521 = vsub.f32 %v517, %v520
      %v522 = vmul.f32 %v521, 1.442695
      %v523 = vpow.pop %v522
      %v524 = vsel %vm314, %v523, 0.0
      %525 = vadd.xlane.f32.xlu0 %v524
      %v526 = vpop.xlane.xlu0 %525
      %v527 = vrcp.pop %v526
      %v528 = vmul.f32 %v523, %v527
      %529 = vrot.lane.b32.xlu0 %v305, 48
      %v530 = vpop.permute.xlu0 %529
      %v533 = vsel %vm314, %v528, 0
      %535 = vmatpush.msra.mxu0 0.0
      %536 = vmatpush.msra.mxu0 0.0
      %537 = vmatpush.msra.mxu0 0.0
      %538 = vmatpush.msra.mxu0 0.0
      %539 = vmatpush.msra.mxu0 0.0
      %540 = vmatpush.msra.mxu0 0.0
      %541 = vmatpush.msra.mxu0 0.0
      %542 = vmatpush.msra.mxu0 0.0
      %543 = vmatpush.msra.mxu0 0.0
      %544 = vmatpush.msra.mxu0 0.0
      %545 = vmatpush.msra.mxu0 0.0
      %546 = vmatpush.msra.mxu0 0.0
      %547 = vmatpush.msra.mxu0 0.0
      %548 = vmatpush.msra.mxu0 0.0
      %549 = vmatpush.msra.mxu0 0.0
      %550 = vmatpush.msra.mxu0 %v530
      %551 = vmatmul.f32.gmra.mxu0 %v533
      %v552 = vpop.f32.mrf.mxu0
      %v553 = vadd.f32 0.0, %v552
      %554 = vdwg.mxu0
      %v556 = vsel %vm314, %v553, 0
      %558 = vmatpush.msra.mxu0 0.0
      %559 = vmatpush.msra.mxu0 0.0
      %560 = vmatpush.msra.mxu0 0.0
      %561 = vmatpush.msra.mxu0 0.0
      %562 = vmatpush.msra.mxu0 0.0
      %563 = vmatpush.msra.mxu0 0.0
      %564 = vmatpush.msra.mxu0 0.0
      %565 = vmatpush.msra.mxu0 0.0
      %566 = vmatpush.msra.mxu0 0.0
      %567 = vmatpush.msra.mxu0 0.0
      %568 = vmatpush.msra.mxu0 0.0
      %569 = vmatpush.msra.mxu0 0.0
      %570 = vmatpush.msra.mxu0 0.0
      %571 = vmatpush.msra.mxu0 0.0
      %572 = vmatpush.msra.mxu0 0.0
      %573 = vmatpush.msra.mxu0 %v309
      %574 = vmatmul.f32.gmra.mxu0 %v556
      %v575 = vpop.f32.mrf.mxu0
      %v576 = vadd.f32 0.0, %v575
      %577 = vdwg.mxu0
      %v578 = vadd.f32 %v487, %v576
      %579 = vrot.lane.b32.xlu0 %v305, 104
      %v580 = vpop.permute.xlu0 %579
      %581 = vrot.lane.b32.xlu0 %v305, 72
      %v582 = vpop.permute.xlu0 %581
      %v583 = vsel %vm314, %v580, 0
      %v585 = vsel %vm314, %v582, 0
      %587 = vmatpush.xpose.msra.mxu0 0.0
      %588 = vmatpush.xpose.msra.mxu0 0.0
      %589 = vmatpush.xpose.msra.mxu0 0.0
      %590 = vmatpush.xpose.msra.mxu0 0.0
      %591 = vmatpush.xpose.msra.mxu0 0.0
      %592 = vmatpush.xpose.msra.mxu0 0.0
      %593 = vmatpush.xpose.msra.mxu0 0.0
      %594 = vmatpush.xpose.msra.mxu0 0.0
      %595 = vmatpush.xpose.msra.mxu0 0.0
      %596 = vmatpush.xpose.msra.mxu0 0.0
      %597 = vmatpush.xpose.msra.mxu0 0.0
      %598 = vmatpush.xpose.msra.mxu0 0.0
      %599 = vmatpush.xpose.msra.mxu0 0.0
      %600 = vmatpush.xpose.msra.mxu0 0.0
      %601 = vmatpush.xpose.msra.mxu0 0.0
      %602 = vmatpush.xpose.msra.mxu0 %v585
      %603 = vmatmul.f32.gmra.mxu0 %v583
      %v604 = vpop.f32.mrf.mxu0
      %v605 = vadd.f32 0.0, %v604
      %606 = vdwg.mxu0
      %v607 = vmul.f32 %v605, 0.35355338
      %v608 = vsel %vm314, %v607, -inf
      %609 = vmax.xlane.f32.xlu0 %v608
      %v610 = vpop.xlane.xlu0 %609
      %v611 = vsub.f32 %v607, %v610
      %v612 = vmul.f32 %v611, 1.442695
      %v613 = vpow.pop %v612
      %v614 = vsel %vm314, %v613, 0.0
      %615 = vadd.xlane.f32.xlu0 %v614
      %v616 = vpop.xlane.xlu0 %615
      %v617 = vrcp.pop %v616
      %v618 = vmul.f32 %v613, %v617
      %619 = vrot.lane.b32.xlu0 %v305, 40
      %v620 = vpop.permute.xlu0 %619
      %v623 = vsel %vm314, %v618, 0
      %625 = vmatpush.msra.mxu0 0.0
      %626 = vmatpush.msra.mxu0 0.0
      %627 = vmatpush.msra.mxu0 0.0
      %628 = vmatpush.msra.mxu0 0.0
      %629 = vmatpush.msra.mxu0 0.0
      %630 = vmatpush.msra.mxu0 0.0
      %631 = vmatpush.msra.mxu0 0.0
      %632 = vmatpush.msra.mxu0 0.0
      %633 = vmatpush.msra.mxu0 0.0
      %634 = vmatpush.msra.mxu0 0.0
      %635 = vmatpush.msra.mxu0 0.0
      %636 = vmatpush.msra.mxu0 0.0
      %637 = vmatpush.msra.mxu0 0.0
      %638 = vmatpush.msra.mxu0 0.0
      %639 = vmatpush.msra.mxu0 0.0
      %640 = vmatpush.msra.mxu0 %v620
      %641 = vmatmul.f32.gmra.mxu0 %v623
      %v642 = vpop.f32.mrf.mxu0
      %v643 = vadd.f32 0.0, %v642
      %644 = vdwg.mxu0
      %v646 = vsel %vm314, %v643, 0
      %648 = vmatpush.msra.mxu0 0.0
      %649 = vmatpush.msra.mxu0 0.0
      %650 = vmatpush.msra.mxu0 0.0
      %651 = vmatpush.msra.mxu0 0.0
      %652 = vmatpush.msra.mxu0 0.0
      %653 = vmatpush.msra.mxu0 0.0
      %654 = vmatpush.msra.mxu0 0.0
      %655 = vmatpush.msra.mxu0 0.0
      %656 = vmatpush.msra.mxu0 0.0
      %657 = vmatpush.msra.mxu0 0.0
      %658 = vmatpush.msra.mxu0 0.0
      %659 = vmatpush.msra.mxu0 0.0
      %660 = vmatpush.msra.mxu0 0.0
      %661 = vmatpush.msra.mxu0 0.0
      %662 = vmatpush.msra.mxu0 0.0
      %663 = vmatpush.msra.mxu0 %v310
      %664 = vmatmul.f32.gmra.mxu0 %v646
      %v665 = vpop.f32.mrf.mxu0
      %v666 = vadd.f32 0.0, %v665
      %667 = vdwg.mxu0
      %v668 = vadd.f32 %v578, %v666
      %v669 = vld [vmem:[%s4] sm:$0x1]
      %v671 = vperm.slane %v669, 0
      %v673 = vadd.f32 %v668, %v671
      %v674 = vadd.f32 %v673, %v274
      %v675 = vsel %vm283, %v674, 0.0
      %676 = vadd.xlane.f32.xlu0 %v675
      %v677 = vpop.xlane.xlu0 %676
      %v678 = vrcp.pop 32.0
      %v679 = vmul.f32 32.0, %v678
      %v680 = vsub.f32 1.0, %v679
      %v681 = vmul.f32 %v678, %v680
      %v682 = vadd.f32 %v678, %v681
      %vm683 = vweird.f32 %v678
      %v684 = vsel %vm683, %v678, %v682
      %v685 = vmul.f32 %v677, %v684
      %v686 = vsub.f32 %v674, %v685
      %v687 = vmul.f32 %v686, %v686
      %v688 = vsel %vm283, %v687, 0.0
      %689 = vadd.xlane.f32.xlu0 %v688
      %v690 = vpop.xlane.xlu0 %689
      %v691 = vmul.f32 %v690, %v684
      %v692 = vadd.f32 %v691, 1e-05
      %v693 = vrsqrt.pop %v692
      %v694 = vmul.f32 %v693, %v692
      %v695 = vmul.f32 %v694, %v693
      %v696 = vmul.f32 0.5, %v695
      %v697 = vsub.f32 1.5, %v696
      %v698 = vmul.f32 %v693, %v697
      %vm699 = vweird.f32 %v692
      %vm700 = vweird.f32 %v693
      %vm701 = vmor %vm699, %vm700
      %v702 = vsel %vm701, %v693, %v698
      %v703 = vmul.f32 %v686, %v702
      %v704 = vld [vmem:[%s5] sm:$0x1]
      %v706 = vperm.slane %v704, 0
      %v708 = vmul.f32 %v703, %v706
      %v709 = vld [vmem:[%s6] sm:$0x1]
      %v711 = vperm.slane %v709, 0
      %v713 = vadd.f32 %v708, %v711
      %714 = vst.msk [vmem:[%s273] sm:$0xff] %vm283, %v713
      %p715 = scmp.lt.s32.totalorder %s18, 5
      %s716 = scalar_select %p715, %s18, 5
      %s717 = smul.addr %s716, 8
      %s718 = scalar_lea.vmem %s7, %s717
      // Predicated region
      $region49: #{stmha_block.11} parent=47 // pred_check
        %p719 = pneg %p188
      $region50: #{stmha_block.11} parent=47 // pred_check_branch
        %721 = sbr.rel (%p719) target = $region52
      $region51: #{stmha_block.11} parent=47 // pred_region
        _
      $region52: #{stmha_block.11} parent=47 // pred_fallthru
        _
    $region48: #{stmha_block.11} parent=5 // pred_fallthru
      _
    %p722 = scmp.le.s32.totalorder 2, %s13
    // Predicated region
    $region53: #{stmha_block.11} parent=5 // pred_check
      %p723 = pneg %p722
    $region54: #{stmha_block.11} parent=5 // pred_check_branch
      %725 = sbr.rel (%p723) target = $region56
    $region55: #{stmha_block.11} parent=5 // pred_region
      %s726 = ssub.s32 %s13, 2
      // Predicated region
      $region57: #{stmha_block.11} parent=55 // pred_check
        %p727 = pneg %p194
      $region58: #{stmha_block.11} parent=55 // pred_check_branch
        %729 = sbr.rel (%p727) target = $region60
      $region59: #{stmha_block.11} parent=55 // pred_region
        %p730 = scmp.lt.s32.totalorder %s19, 5
        %s731 = scalar_select %p730, %s19, 5
        %s732 = smul.addr %s731, 8
        %s733 = scalar_lea.vmem %s7, %s732
      $region60: #{stmha_block.11} parent=55 // pred_fallthru
        _
    $region56: #{stmha_block.11} parent=5 // pred_fallthru
      _
  $region6: #{stmha_block.11} parent=0 // loop_footer
    %s17 = sadd.s32 1, %s13
  $region7: #{stmha_block.11} parent=0 // loop_footer_branch
    %12 = sbr.rel target = $region3
  $region8: #{stmha_block.11} parent=0 // loop_exit
    _

</llo_original>
